<compile_context>
chip_gen: v7x
topology: tpu7x:2x2x1
jax: 0.10.0
libtpu: 0.0.40
codegen_flags: <defaults>
</compile_context>

<pallas_src>
import numpy as np
import jax
import jax.numpy as jnp
from jax.experimental import pallas as pl
from jax.experimental.pallas import tpu as pltpu


LN_EPS = 1e-5

# Row order of the (n_rows, 128) bias / LayerNorm slab (shared by packer & kernel).
BIAS_ROWS = ("sa_bqkv", "ca_bq", "ca_bk", "ca_bv", "sa_bo", "ca_bo",
             "b1", "b2", "ln1w", "ln1b", "ln2w", "ln2b", "ln3w", "ln3b")


# ----------------------------------------------------------------------------
# Host-side parameter packing
# ----------------------------------------------------------------------------
def pack_params(params, nhead):
    """Scale-fold Q projections and build separate f32 weight operands + a
    lane-padded bias/LN slab."""
    E = params["sa_wq"].shape[0]
    FF = params["w1"].shape[1]
    dh = E // nhead
    scale = 1.0 / float(np.sqrt(dh))
    f32 = lambda a: jnp.asarray(a, jnp.float32)

    sa_wqkv = jnp.concatenate(
        [f32(params["sa_wq"]) * scale, f32(params["sa_wk"]), f32(params["sa_wv"])],
        axis=1)                                             # (E, 3E)
    ca_wq = f32(params["ca_wq"]) * scale
    ca_wk = f32(params["ca_wk"])
    ca_wv = f32(params["ca_wv"])
    sa_wo = f32(params["sa_wo"])
    ca_wo = f32(params["ca_wo"])
    w1 = f32(params["w1"])
    w2 = f32(params["w2"])

    row_w = ((max(3 * E, FF, E) + 127) // 128) * 128        # lane-pad to 128 mult

    def brow(x):
        x = f32(x).reshape(1, -1)
        return jnp.pad(x, ((0, 0), (0, row_w - x.shape[1])))

    pieces = {
        "sa_bqkv": jnp.concatenate(
            [f32(params["sa_bq"]) * scale, f32(params["sa_bk"]), f32(params["sa_bv"])],
            axis=1),
        "ca_bq": f32(params["ca_bq"]) * scale,
        "ca_bk": params["ca_bk"], "ca_bv": params["ca_bv"],
        "sa_bo": params["sa_bo"], "ca_bo": params["ca_bo"],
        "b1": params["b1"], "b2": params["b2"],
        "ln1w": params["ln1w"], "ln1b": params["ln1b"],
        "ln2w": params["ln2w"], "ln2b": params["ln2b"],
        "ln3w": params["ln3w"], "ln3b": params["ln3b"],
    }
    b_slab = jnp.concatenate([brow(pieces[n]) for n in BIAS_ROWS], axis=0)
    return sa_wqkv, ca_wq, ca_wk, ca_wv, sa_wo, ca_wo, w1, w2, b_slab


# ----------------------------------------------------------------------------
# Kernel (one batch element per grid step)
# ----------------------------------------------------------------------------
def make_kernel(t_len, s_len, d_model, nhead, dim_ff):
    E, FF, H = d_model, dim_ff, nhead
    dh = E // nhead

    def layer_norm(x, w, b):
        mu = jnp.mean(x, axis=-1, keepdims=True)
        xc = x - mu
        var = jnp.mean(xc * xc, axis=-1, keepdims=True)
        return xc * jax.lax.rsqrt(var + LN_EPS) * w + b

    def to_heads(x2d, l):
        # (l, n_blocks*dh) -> (n_blocks, l, dh); head dim becomes the leading dim
        n = x2d.shape[-1] // dh
        return jnp.transpose(x2d.reshape(l, n, dh), (1, 0, 2))

    def from_heads(ctx, l):
        # (H, l, dh) -> (l, E)
        return jnp.transpose(ctx, (1, 0, 2)).reshape(l, E)

    def attention(qh, kh, vh):
        # qh: (H, lq, dh) pre-scaled; kh, vh: (H, lk, dh).  One batched matmul
        # pair + one softmax for all heads (no per-head loop, no lane slices).
        s = jnp.einsum('hqd,hkd->hqk', qh, kh,
                       preferred_element_type=jnp.float32)      # (H, lq, lk)
        s = s - jnp.max(s, axis=-1, keepdims=True)
        e = jnp.exp(s)
        p = e * pl.reciprocal(jnp.sum(e, axis=-1, keepdims=True), approx=True)
        return jnp.einsum('hqk,hkd->hqd', p, vh,
                          preferred_element_type=jnp.float32)    # (H, lq, dh)

    def kernel(x_ref, qpos_ref, mem_ref, kmem_ref,
               sa_wqkv_ref, ca_wq_ref, ca_wk_ref, ca_wv_ref,
               sa_wo_ref, ca_wo_ref, w1_ref, w2_ref, b_ref, out_ref):
        x = x_ref[...]            # (T, E)   tgt for this batch
        qpos = qpos_ref[...]      # (T, E)   querypos_embed
        mem = mem_ref[...]        # (S, E)   memory (cross-attn values)
        kmem = kmem_ref[...]      # (S, E)   patchpos_embed(memory) (cross keys)
        bias = b_ref[...]         # (14, 128) lane-padded bias/LN slab

        def brow(name, w):
            i = BIAS_ROWS.index(name)
            return bias[i:i + 1, 0:w]

        # --- self attention: q = k = v = tgt + querypos_embed, fused QKV ---
        x1 = x + qpos
        qkv = jnp.dot(x1, sa_wqkv_ref[...],
                      preferred_element_type=jnp.float32) + brow("sa_bqkv", 3 * E)
        qkvh = to_heads(qkv, t_len)                         # (3H, T, dh)
        ctx = attention(qkvh[0:H], qkvh[H:2 * H], qkvh[2 * H:3 * H])
        sa = jnp.dot(from_heads(ctx, t_len), sa_wo_ref[...],
                     preferred_element_type=jnp.float32) + brow("sa_bo", E)
        x = layer_norm(x + sa, brow("ln1w", E), brow("ln1b", E))

        # --- cross attention: query = x + qpos, key = patchpos(mem), value = mem ---
        q = jnp.dot(x + qpos, ca_wq_ref[...],
                    preferred_element_type=jnp.float32) + brow("ca_bq", E)
        k = jnp.dot(kmem, ca_wk_ref[...],
                    preferred_element_type=jnp.float32) + brow("ca_bk", E)
        v = jnp.dot(mem, ca_wv_ref[...],
                    preferred_element_type=jnp.float32) + brow("ca_bv", E)
        ctx = attention(to_heads(q, t_len), to_heads(k, s_len), to_heads(v, s_len))
        ca = jnp.dot(from_heads(ctx, t_len), ca_wo_ref[...],
                     preferred_element_type=jnp.float32) + brow("ca_bo", E)
        x = layer_norm(x + ca, brow("ln2w", E), brow("ln2b", E))

        # --- feed-forward: linear2(relu(linear1(x))) ---
        h = jnp.maximum(jnp.dot(x, w1_ref[...],
                                preferred_element_type=jnp.float32) + brow("b1", FF),
                        0.0)
        f = jnp.dot(h, w2_ref[...],
                    preferred_element_type=jnp.float32) + brow("b2", E)
        x = layer_norm(x + f, brow("ln3w", E), brow("ln3b", E))

        out_ref[...] = x

    return kernel


# ----------------------------------------------------------------------------
# Wrapper
# ----------------------------------------------------------------------------
def transformer_decoder_layer(tgt, memory, querypos_embed, patchpos_embed,
                              params, nhead):
    """forward_post (normalize_before=False). tgt: (T,N,E), memory: (S,N,E)."""
    kmem = patchpos_embed(memory)              # external module — plain-JAX glue
    T, N, E = tgt.shape
    S = memory.shape[0]
    FF = params["w1"].shape[1]
    assert E % nhead == 0

    def bmajor(a):                             # (L, N, E) -> (N, L, E)
        return jnp.transpose(a, (1, 0, 2)).astype(jnp.float32)

    (sa_wqkv, ca_wq, ca_wk, ca_wv,
     sa_wo, ca_wo, w1, w2, b_slab) = pack_params(params, nhead)

    act_spec = lambda L: pl.BlockSpec((None, L, E), lambda n: (n, 0, 0))
    full = lambda shape: pl.BlockSpec(shape, lambda n: (0,) * len(shape))

    out = pl.pallas_call(
        make_kernel(T, S, E, nhead, FF),
        out_shape=jax.ShapeDtypeStruct((N, T, E), jnp.float32),
        grid=(N,),
        in_specs=[act_spec(T), act_spec(T), act_spec(S), act_spec(S),
                  full(sa_wqkv.shape), full(ca_wq.shape), full(ca_wk.shape),
                  full(ca_wv.shape), full(sa_wo.shape), full(ca_wo.shape),
                  full(w1.shape), full(w2.shape), full(b_slab.shape)],
        out_specs=act_spec(T),
        compiler_params=pltpu.CompilerParams(
            dimension_semantics=("parallel",)),
    )(bmajor(tgt), bmajor(querypos_embed), bmajor(memory), bmajor(kmem),
      sa_wqkv, ca_wq, ca_wk, ca_wv, sa_wo, ca_wo, w1, w2, b_slab)

    return jnp.transpose(out, (1, 0, 2))       # back to (T, N, E)


# ----------------------------------------------------------------------------
# Pure-JAX reference (eval mode, no masks)
# ----------------------------------------------------------------------------
def reference_forward(tgt, memory, qpos, kmem, p, nhead):
    def ln(x, w, b):
        mu = x.mean(-1, keepdims=True)
        var = jnp.mean((x - mu) ** 2, axis=-1, keepdims=True)
        return (x - mu) / jnp.sqrt(var + LN_EPS) * w[0] + b[0]

    def mha(q_in, k_in, v_in, wq, bq, wk, bk, wv, bv, wo, bo):
        L, N, E = q_in.shape
        S = k_in.shape[0]
        dh = E // nhead
        q = (q_in @ wq + bq[0]).reshape(L, N, nhead, dh)
        k = (k_in @ wk + bk[0]).reshape(S, N, nhead, dh)
        v = (v_in @ wv + bv[0]).reshape(S, N, nhead, dh)
        s = jnp.einsum('lnhd,snhd->nhls', q, k) / np.sqrt(dh)
        w = jax.nn.softmax(s, axis=-1)
        ctx = jnp.einsum('nhls,snhd->lnhd', w, v).reshape(L, N, E)
        return ctx @ wo + bo[0]

    x = tgt
    sa = mha(x + qpos, x + qpos, x + qpos,
             p["sa_wq"], p["sa_bq"], p["sa_wk"], p["sa_bk"],
             p["sa_wv"], p["sa_bv"], p["sa_wo"], p["sa_bo"])
    x = ln(x + sa, p["ln1w"], p["ln1b"])
    ca = mha(x + qpos, kmem, memory,
             p["ca_wq"], p["ca_bq"], p["ca_wk"], p["ca_bk"],
             p["ca_wv"], p["ca_bv"], p["ca_wo"], p["ca_bo"])
    x = ln(x + ca, p["ln2w"], p["ln2b"])
    f = jnp.maximum(x @ p["w1"] + p["b1"][0], 0.0) @ p["w2"] + p["b2"][0]
    x = ln(x + f, p["ln3w"], p["ln3b"])
    return x


if __name__ == "__main__":
    D_MODEL, NHEAD, DIM_FF = 32, 4, 64
    T, S, N = 8, 16, 2

    key = jax.random.PRNGKey(0)
    ks = iter(jax.random.split(key, 64))

    def rnd(shape, scale=0.02):
        return (scale * jax.random.normal(next(ks), shape)).astype(jnp.float32)

    params = {}
    # attention projection weights, stored pre-transposed (in, out): y = x @ W
    for pfx in ("sa", "ca"):
        for nm in ("wq", "wk", "wv", "wo"):
            params[f"{pfx}_{nm}"] = rnd((D_MODEL, D_MODEL))
        for nm in ("bq", "bk", "bv", "bo"):
            params[f"{pfx}_{nm}"] = rnd((1, D_MODEL))
    params["w1"] = rnd((D_MODEL, DIM_FF))
    params["b1"] = rnd((1, DIM_FF))
    params["w2"] = rnd((DIM_FF, D_MODEL))
    params["b2"] = rnd((1, D_MODEL))
    for i in (1, 2, 3):
        params[f"ln{i}w"] = (1.0 + rnd((1, D_MODEL), scale=0.1)).astype(jnp.float32)
        params[f"ln{i}b"] = rnd((1, D_MODEL), scale=0.1)

    tgt = rnd((T, N, D_MODEL), scale=1.0)
    memory = rnd((S, N, D_MODEL), scale=1.0)
    querypos = rnd((T, N, D_MODEL), scale=1.0)
    patch_pos = rnd((S, N, D_MODEL), scale=1.0)
    patchpos_embed = lambda m: m + patch_pos   # additive positional-embedding module

    ref = reference_forward(tgt, memory, querypos, patchpos_embed(memory),
                            params, NHEAD)
    ref = jax.block_until_ready(ref)

    out = transformer_decoder_layer(tgt, memory, querypos, patchpos_embed,
                                    params, NHEAD)
    out = jax.block_until_ready(out)
    assert out.shape == (T, N, D_MODEL)
    np.testing.assert_allclose(np.asarray(out), np.asarray(ref),
                               rtol=5e-3, atol=5e-3)

    print("KERNEL_OK")
</pallas_src>

<mosaic_0001>
module attributes {stable_mosaic.version = 11 : i64} {
  func.func @kernel(%arg0: i32, %arg1: memref<1x8x32xf32, #tpu.memory_space<vmem>>, %arg2: memref<1x8x32xf32, #tpu.memory_space<vmem>>, %arg3: memref<1x16x32xf32, #tpu.memory_space<vmem>>, %arg4: memref<1x16x32xf32, #tpu.memory_space<vmem>>, %arg5: memref<32x96xf32, #tpu.memory_space<vmem>>, %arg6: memref<32x32xf32, #tpu.memory_space<vmem>>, %arg7: memref<32x32xf32, #tpu.memory_space<vmem>>, %arg8: memref<32x32xf32, #tpu.memory_space<vmem>>, %arg9: memref<32x32xf32, #tpu.memory_space<vmem>>, %arg10: memref<32x32xf32, #tpu.memory_space<vmem>>, %arg11: memref<32x64xf32, #tpu.memory_space<vmem>>, %arg12: memref<64x32xf32, #tpu.memory_space<vmem>>, %arg13: memref<14x128xf32, #tpu.memory_space<vmem>>, %arg14: memref<1x8x32xf32, #tpu.memory_space<vmem>>) attributes {dimension_semantics = [#tpu.dimension_semantics<parallel>], iteration_bounds = array<i64: 2>, scalar_prefetch = 0 : i64, scratch_operands = 0 : i64, tpu.core_type = #tpu.core_type<tc>, window_params = [{transform_indices = @transform_0, window_bounds = array<i64: 1, 8, 32>}, {transform_indices = @transform_1, window_bounds = array<i64: 1, 8, 32>}, {transform_indices = @transform_2, window_bounds = array<i64: 1, 16, 32>}, {transform_indices = @transform_3, window_bounds = array<i64: 1, 16, 32>}, {pipeline_mode = #tpu.pipeline_mode<synchronous>, transform_indices = @transform_4, window_bounds = array<i64: 32, 96>}, {pipeline_mode = #tpu.pipeline_mode<synchronous>, transform_indices = @transform_5, window_bounds = array<i64: 32, 32>}, {pipeline_mode = #tpu.pipeline_mode<synchronous>, transform_indices = @transform_6, window_bounds = array<i64: 32, 32>}, {pipeline_mode = #tpu.pipeline_mode<synchronous>, transform_indices = @transform_7, window_bounds = array<i64: 32, 32>}, {pipeline_mode = #tpu.pipeline_mode<synchronous>, transform_indices = @transform_8, window_bounds = array<i64: 32, 32>}, {pipeline_mode = #tpu.pipeline_mode<synchronous>, transform_indices = @transform_9, window_bounds = array<i64: 32, 32>}, {pipeline_mode = #tpu.pipeline_mode<synchronous>, transform_indices = @transform_10, window_bounds = array<i64: 32, 64>}, {pipeline_mode = #tpu.pipeline_mode<synchronous>, transform_indices = @transform_11, window_bounds = array<i64: 64, 32>}, {pipeline_mode = #tpu.pipeline_mode<synchronous>, transform_indices = @transform_12, window_bounds = array<i64: 14, 128>}, {transform_indices = @transform_13, window_bounds = array<i64: 1, 8, 32>}]} {
    %c0 = arith.constant 0 : index
    %c0_0 = arith.constant 0 : index
    %c0_1 = arith.constant 0 : index
    %0 = vector.load %arg1[%c0, %c0_0, %c0_1] : memref<1x8x32xf32, #tpu.memory_space<vmem>>, vector<1x8x32xf32>
    %1 = vector.shape_cast %0 : vector<1x8x32xf32> to vector<8x32xf32>
    %c0_2 = arith.constant 0 : index
    %c0_3 = arith.constant 0 : index
    %c0_4 = arith.constant 0 : index
    %2 = vector.load %arg2[%c0_2, %c0_3, %c0_4] : memref<1x8x32xf32, #tpu.memory_space<vmem>>, vector<1x8x32xf32>
    %3 = vector.shape_cast %2 : vector<1x8x32xf32> to vector<8x32xf32>
    %c0_5 = arith.constant 0 : index
    %c0_6 = arith.constant 0 : index
    %c0_7 = arith.constant 0 : index
    %4 = vector.load %arg3[%c0_5, %c0_6, %c0_7] : memref<1x16x32xf32, #tpu.memory_space<vmem>>, vector<1x16x32xf32>
    %5 = vector.shape_cast %4 : vector<1x16x32xf32> to vector<16x32xf32>
    %c0_8 = arith.constant 0 : index
    %c0_9 = arith.constant 0 : index
    %c0_10 = arith.constant 0 : index
    %6 = vector.load %arg4[%c0_8, %c0_9, %c0_10] : memref<1x16x32xf32, #tpu.memory_space<vmem>>, vector<1x16x32xf32>
    %7 = vector.shape_cast %6 : vector<1x16x32xf32> to vector<16x32xf32>
    %c0_11 = arith.constant 0 : index
    %c0_12 = arith.constant 0 : index
    %8 = vector.load %arg13[%c0_11, %c0_12] : memref<14x128xf32, #tpu.memory_space<vmem>>, vector<14x128xf32>
    %9 = arith.addf %1, %3 : vector<8x32xf32>
    %c0_13 = arith.constant 0 : index
    %c0_14 = arith.constant 0 : index
    %10 = vector.load %arg5[%c0_13, %c0_14] : memref<32x96xf32, #tpu.memory_space<vmem>>, vector<32x96xf32>
    %cst = arith.constant dense<0.000000e+00> : vector<8x96xf32>
    %11 = tpu.matmul %9, %10, %cst {dimension_numbers = #tpu.dot_dimension_numbers<[1], [0], [0], [1], [0, 0, 1, 1], [], []>} : vector<8x32xf32>, vector<32x96xf32>, vector<8x96xf32> -> vector<8x96xf32>
    %12 = vector.extract_strided_slice %8 {offsets = [0, 0], sizes = [1, 96], strides = [1, 1]} : vector<14x128xf32> to vector<1x96xf32>
    %13 = vector.broadcast %12 : vector<1x96xf32> to vector<8x96xf32>
    %14 = arith.addf %11, %13 : vector<8x96xf32>
    %15 = vector.shape_cast %14 : vector<8x96xf32> to vector<8x12x8xf32>
    %16 = tpu.transpose %15, [1, 0, 2] : vector<8x12x8xf32> -> vector<12x8x8xf32>
    %17 = vector.extract_strided_slice %16 {offsets = [0, 0, 0], sizes = [4, 8, 8], strides = [1, 1, 1]} : vector<12x8x8xf32> to vector<4x8x8xf32>
    %18 = vector.extract_strided_slice %16 {offsets = [4, 0, 0], sizes = [4, 8, 8], strides = [1, 1, 1]} : vector<12x8x8xf32> to vector<4x8x8xf32>
    %19 = vector.extract_strided_slice %16 {offsets = [8, 0, 0], sizes = [4, 8, 8], strides = [1, 1, 1]} : vector<12x8x8xf32> to vector<4x8x8xf32>
    "tpu.trace_start"() <{level = 10 : i32, message = "hqd,hkd->hqk"}> : () -> ()
    %cst_15 = arith.constant dense<0.000000e+00> : vector<4x8x8xf32>
    %20 = tpu.matmul %17, %18, %cst_15 {dimension_numbers = #tpu.dot_dimension_numbers<[2], [2], [1], [1], [0, 0, 0, 1, 1, 1], [0], [0]>} : vector<4x8x8xf32>, vector<4x8x8xf32>, vector<4x8x8xf32> -> vector<4x8x8xf32>
    "tpu.trace_stop"() : () -> ()
    %cst_16 = arith.constant dense<0xFF800000> : vector<4x8xf32>
    %21 = vector.multi_reduction <maximumf>, %20, %cst_16 [2] : vector<4x8x8xf32> to vector<4x8xf32>
    %22 = vector.shape_cast %21 : vector<4x8xf32> to vector<4x8x1xf32>
    %23 = vector.broadcast %22 : vector<4x8x1xf32> to vector<4x8x8xf32>
    %24 = arith.subf %20, %23 : vector<4x8x8xf32>
    %25 = math.exp %24 : vector<4x8x8xf32>
    %cst_17 = arith.constant dense<0.000000e+00> : vector<4x8xf32>
    %26 = vector.multi_reduction <add>, %25, %cst_17 [2] : vector<4x8x8xf32> to vector<4x8xf32>
    %27 = vector.shape_cast %26 : vector<4x8xf32> to vector<4x8x1xf32>
    %28 = tpu.reciprocal %27 {approx = true} : vector<4x8x1xf32> -> vector<4x8x1xf32>
    %29 = vector.broadcast %28 : vector<4x8x1xf32> to vector<4x8x8xf32>
    %30 = arith.mulf %25, %29 : vector<4x8x8xf32>
    "tpu.trace_start"() <{level = 10 : i32, message = "hqk,hkd->hqd"}> : () -> ()
    %cst_18 = arith.constant dense<0.000000e+00> : vector<4x8x8xf32>
    %31 = tpu.matmul %30, %19, %cst_18 {dimension_numbers = #tpu.dot_dimension_numbers<[2], [1], [1], [2], [0, 0, 0, 1, 1, 2], [0], [0]>} : vector<4x8x8xf32>, vector<4x8x8xf32>, vector<4x8x8xf32> -> vector<4x8x8xf32>
    "tpu.trace_stop"() : () -> ()
    %32 = tpu.transpose %31, [1, 0, 2] : vector<4x8x8xf32> -> vector<8x4x8xf32>
    %33 = vector.shape_cast %32 : vector<8x4x8xf32> to vector<8x32xf32>
    %c0_19 = arith.constant 0 : index
    %c0_20 = arith.constant 0 : index
    %34 = vector.load %arg9[%c0_19, %c0_20] : memref<32x32xf32, #tpu.memory_space<vmem>>, vector<32x32xf32>
    %cst_21 = arith.constant dense<0.000000e+00> : vector<8x32xf32>
    %35 = tpu.matmul %33, %34, %cst_21 {dimension_numbers = #tpu.dot_dimension_numbers<[1], [0], [0], [1], [0, 0, 1, 1], [], []>} : vector<8x32xf32>, vector<32x32xf32>, vector<8x32xf32> -> vector<8x32xf32>
    %36 = vector.extract_strided_slice %8 {offsets = [4, 0], sizes = [1, 32], strides = [1, 1]} : vector<14x128xf32> to vector<1x32xf32>
    %37 = vector.broadcast %36 : vector<1x32xf32> to vector<8x32xf32>
    %38 = arith.addf %35, %37 : vector<8x32xf32>
    %39 = arith.addf %1, %38 : vector<8x32xf32>
    %40 = vector.extract_strided_slice %8 {offsets = [8, 0], sizes = [1, 32], strides = [1, 1]} : vector<14x128xf32> to vector<1x32xf32>
    %41 = vector.extract_strided_slice %8 {offsets = [9, 0], sizes = [1, 32], strides = [1, 1]} : vector<14x128xf32> to vector<1x32xf32>
    %cst_22 = arith.constant dense<0.000000e+00> : vector<8xf32>
    %42 = vector.multi_reduction <add>, %39, %cst_22 [1] : vector<8x32xf32> to vector<8xf32>
    %43 = vector.shape_cast %42 : vector<8xf32> to vector<8x1xf32>
    %cst_23 = arith.constant 3.200000e+01 : f32
    %44 = vector.broadcast %cst_23 : f32 to vector<8x1xf32>
    %45 = arith.divf %43, %44 : vector<8x1xf32>
    %46 = vector.broadcast %45 : vector<8x1xf32> to vector<8x32xf32>
    %47 = arith.subf %39, %46 : vector<8x32xf32>
    %48 = arith.mulf %47, %47 : vector<8x32xf32>
    %cst_24 = arith.constant dense<0.000000e+00> : vector<8xf32>
    %49 = vector.multi_reduction <add>, %48, %cst_24 [1] : vector<8x32xf32> to vector<8xf32>
    %50 = vector.shape_cast %49 : vector<8xf32> to vector<8x1xf32>
    %cst_25 = arith.constant 3.200000e+01 : f32
    %51 = vector.broadcast %cst_25 : f32 to vector<8x1xf32>
    %52 = arith.divf %50, %51 : vector<8x1xf32>
    %cst_26 = arith.constant 9.99999974E-6 : f32
    %53 = vector.broadcast %cst_26 : f32 to vector<8x1xf32>
    %54 = arith.addf %52, %53 : vector<8x1xf32>
    %55 = math.rsqrt %54 : vector<8x1xf32>
    %56 = vector.broadcast %55 : vector<8x1xf32> to vector<8x32xf32>
    %57 = arith.mulf %47, %56 : vector<8x32xf32>
    %58 = vector.broadcast %40 : vector<1x32xf32> to vector<8x32xf32>
    %59 = arith.mulf %57, %58 : vector<8x32xf32>
    %60 = vector.broadcast %41 : vector<1x32xf32> to vector<8x32xf32>
    %61 = arith.addf %59, %60 : vector<8x32xf32>
    %62 = arith.addf %61, %3 : vector<8x32xf32>
    %c0_27 = arith.constant 0 : index
    %c0_28 = arith.constant 0 : index
    %63 = vector.load %arg6[%c0_27, %c0_28] : memref<32x32xf32, #tpu.memory_space<vmem>>, vector<32x32xf32>
    %cst_29 = arith.constant dense<0.000000e+00> : vector<8x32xf32>
    %64 = tpu.matmul %62, %63, %cst_29 {dimension_numbers = #tpu.dot_dimension_numbers<[1], [0], [0], [1], [0, 0, 1, 1], [], []>} : vector<8x32xf32>, vector<32x32xf32>, vector<8x32xf32> -> vector<8x32xf32>
    %65 = vector.extract_strided_slice %8 {offsets = [1, 0], sizes = [1, 32], strides = [1, 1]} : vector<14x128xf32> to vector<1x32xf32>
    %66 = vector.broadcast %65 : vector<1x32xf32> to vector<8x32xf32>
    %67 = arith.addf %64, %66 : vector<8x32xf32>
    %c0_30 = arith.constant 0 : index
    %c0_31 = arith.constant 0 : index
    %68 = vector.load %arg7[%c0_30, %c0_31] : memref<32x32xf32, #tpu.memory_space<vmem>>, vector<32x32xf32>
    %cst_32 = arith.constant dense<0.000000e+00> : vector<16x32xf32>
    %69 = tpu.matmul %7, %68, %cst_32 {dimension_numbers = #tpu.dot_dimension_numbers<[1], [0], [0], [1], [0, 0, 1, 1], [], []>} : vector<16x32xf32>, vector<32x32xf32>, vector<16x32xf32> -> vector<16x32xf32>
    %70 = vector.extract_strided_slice %8 {offsets = [2, 0], sizes = [1, 32], strides = [1, 1]} : vector<14x128xf32> to vector<1x32xf32>
    %71 = vector.broadcast %70 : vector<1x32xf32> to vector<16x32xf32>
    %72 = arith.addf %69, %71 : vector<16x32xf32>
    %c0_33 = arith.constant 0 : index
    %c0_34 = arith.constant 0 : index
    %73 = vector.load %arg8[%c0_33, %c0_34] : memref<32x32xf32, #tpu.memory_space<vmem>>, vector<32x32xf32>
    %cst_35 = arith.constant dense<0.000000e+00> : vector<16x32xf32>
    %74 = tpu.matmul %5, %73, %cst_35 {dimension_numbers = #tpu.dot_dimension_numbers<[1], [0], [0], [1], [0, 0, 1, 1], [], []>} : vector<16x32xf32>, vector<32x32xf32>, vector<16x32xf32> -> vector<16x32xf32>
    %75 = vector.extract_strided_slice %8 {offsets = [3, 0], sizes = [1, 32], strides = [1, 1]} : vector<14x128xf32> to vector<1x32xf32>
    %76 = vector.broadcast %75 : vector<1x32xf32> to vector<16x32xf32>
    %77 = arith.addf %74, %76 : vector<16x32xf32>
    %78 = vector.shape_cast %67 : vector<8x32xf32> to vector<8x4x8xf32>
    %79 = tpu.transpose %78, [1, 0, 2] : vector<8x4x8xf32> -> vector<4x8x8xf32>
    %80 = vector.shape_cast %72 : vector<16x32xf32> to vector<16x4x8xf32>
    %81 = tpu.transpose %80, [1, 0, 2] : vector<16x4x8xf32> -> vector<4x16x8xf32>
    %82 = vector.shape_cast %77 : vector<16x32xf32> to vector<16x4x8xf32>
    %83 = tpu.transpose %82, [1, 0, 2] : vector<16x4x8xf32> -> vector<4x16x8xf32>
    "tpu.trace_start"() <{level = 10 : i32, message = "hqd,hkd->hqk"}> : () -> ()
    %cst_36 = arith.constant dense<0.000000e+00> : vector<4x8x16xf32>
    %84 = tpu.matmul %79, %81, %cst_36 {dimension_numbers = #tpu.dot_dimension_numbers<[2], [2], [1], [1], [0, 0, 0, 1, 1, 1], [0], [0]>} : vector<4x8x8xf32>, vector<4x16x8xf32>, vector<4x8x16xf32> -> vector<4x8x16xf32>
    "tpu.trace_stop"() : () -> ()
    %cst_37 = arith.constant dense<0xFF800000> : vector<4x8xf32>
    %85 = vector.multi_reduction <maximumf>, %84, %cst_37 [2] : vector<4x8x16xf32> to vector<4x8xf32>
    %86 = vector.shape_cast %85 : vector<4x8xf32> to vector<4x8x1xf32>
    %87 = vector.broadcast %86 : vector<4x8x1xf32> to vector<4x8x16xf32>
    %88 = arith.subf %84, %87 : vector<4x8x16xf32>
    %89 = math.exp %88 : vector<4x8x16xf32>
    %cst_38 = arith.constant dense<0.000000e+00> : vector<4x8xf32>
    %90 = vector.multi_reduction <add>, %89, %cst_38 [2] : vector<4x8x16xf32> to vector<4x8xf32>
    %91 = vector.shape_cast %90 : vector<4x8xf32> to vector<4x8x1xf32>
    %92 = tpu.reciprocal %91 {approx = true} : vector<4x8x1xf32> -> vector<4x8x1xf32>
    %93 = vector.broadcast %92 : vector<4x8x1xf32> to vector<4x8x16xf32>
    %94 = arith.mulf %89, %93 : vector<4x8x16xf32>
    "tpu.trace_start"() <{level = 10 : i32, message = "hqk,hkd->hqd"}> : () -> ()
    %cst_39 = arith.constant dense<0.000000e+00> : vector<4x8x8xf32>
    %95 = tpu.matmul %94, %83, %cst_39 {dimension_numbers = #tpu.dot_dimension_numbers<[2], [1], [1], [2], [0, 0, 0, 1, 1, 2], [0], [0]>} : vector<4x8x16xf32>, vector<4x16x8xf32>, vector<4x8x8xf32> -> vector<4x8x8xf32>
    "tpu.trace_stop"() : () -> ()
    %96 = tpu.transpose %95, [1, 0, 2] : vector<4x8x8xf32> -> vector<8x4x8xf32>
    %97 = vector.shape_cast %96 : vector<8x4x8xf32> to vector<8x32xf32>
    %c0_40 = arith.constant 0 : index
    %c0_41 = arith.constant 0 : index
    %98 = vector.load %arg10[%c0_40, %c0_41] : memref<32x32xf32, #tpu.memory_space<vmem>>, vector<32x32xf32>
    %cst_42 = arith.constant dense<0.000000e+00> : vector<8x32xf32>
    %99 = tpu.matmul %97, %98, %cst_42 {dimension_numbers = #tpu.dot_dimension_numbers<[1], [0], [0], [1], [0, 0, 1, 1], [], []>} : vector<8x32xf32>, vector<32x32xf32>, vector<8x32xf32> -> vector<8x32xf32>
    %100 = vector.extract_strided_slice %8 {offsets = [5, 0], sizes = [1, 32], strides = [1, 1]} : vector<14x128xf32> to vector<1x32xf32>
    %101 = vector.broadcast %100 : vector<1x32xf32> to vector<8x32xf32>
    %102 = arith.addf %99, %101 : vector<8x32xf32>
    %103 = arith.addf %61, %102 : vector<8x32xf32>
    %104 = vector.extract_strided_slice %8 {offsets = [10, 0], sizes = [1, 32], strides = [1, 1]} : vector<14x128xf32> to vector<1x32xf32>
    %105 = vector.extract_strided_slice %8 {offsets = [11, 0], sizes = [1, 32], strides = [1, 1]} : vector<14x128xf32> to vector<1x32xf32>
    %cst_43 = arith.constant dense<0.000000e+00> : vector<8xf32>
    %106 = vector.multi_reduction <add>, %103, %cst_43 [1] : vector<8x32xf32> to vector<8xf32>
    %107 = vector.shape_cast %106 : vector<8xf32> to vector<8x1xf32>
    %cst_44 = arith.constant 3.200000e+01 : f32
    %108 = vector.broadcast %cst_44 : f32 to vector<8x1xf32>
    %109 = arith.divf %107, %108 : vector<8x1xf32>
    %110 = vector.broadcast %109 : vector<8x1xf32> to vector<8x32xf32>
    %111 = arith.subf %103, %110 : vector<8x32xf32>
    %112 = arith.mulf %111, %111 : vector<8x32xf32>
    %cst_45 = arith.constant dense<0.000000e+00> : vector<8xf32>
    %113 = vector.multi_reduction <add>, %112, %cst_45 [1] : vector<8x32xf32> to vector<8xf32>
    %114 = vector.shape_cast %113 : vector<8xf32> to vector<8x1xf32>
    %cst_46 = arith.constant 3.200000e+01 : f32
    %115 = vector.broadcast %cst_46 : f32 to vector<8x1xf32>
    %116 = arith.divf %114, %115 : vector<8x1xf32>
    %cst_47 = arith.constant 9.99999974E-6 : f32
    %117 = vector.broadcast %cst_47 : f32 to vector<8x1xf32>
    %118 = arith.addf %116, %117 : vector<8x1xf32>
    %119 = math.rsqrt %118 : vector<8x1xf32>
    %120 = vector.broadcast %119 : vector<8x1xf32> to vector<8x32xf32>
    %121 = arith.mulf %111, %120 : vector<8x32xf32>
    %122 = vector.broadcast %104 : vector<1x32xf32> to vector<8x32xf32>
    %123 = arith.mulf %121, %122 : vector<8x32xf32>
    %124 = vector.broadcast %105 : vector<1x32xf32> to vector<8x32xf32>
    %125 = arith.addf %123, %124 : vector<8x32xf32>
    %c0_48 = arith.constant 0 : index
    %c0_49 = arith.constant 0 : index
    %126 = vector.load %arg11[%c0_48, %c0_49] : memref<32x64xf32, #tpu.memory_space<vmem>>, vector<32x64xf32>
    %cst_50 = arith.constant dense<0.000000e+00> : vector<8x64xf32>
    %127 = tpu.matmul %125, %126, %cst_50 {dimension_numbers = #tpu.dot_dimension_numbers<[1], [0], [0], [1], [0, 0, 1, 1], [], []>} : vector<8x32xf32>, vector<32x64xf32>, vector<8x64xf32> -> vector<8x64xf32>
    %128 = vector.extract_strided_slice %8 {offsets = [6, 0], sizes = [1, 64], strides = [1, 1]} : vector<14x128xf32> to vector<1x64xf32>
    %129 = vector.broadcast %128 : vector<1x64xf32> to vector<8x64xf32>
    %130 = arith.addf %127, %129 : vector<8x64xf32>
    %cst_51 = arith.constant 0.000000e+00 : f32
    %131 = vector.broadcast %cst_51 : f32 to vector<8x64xf32>
    %132 = arith.maximumf %130, %131 : vector<8x64xf32>
    %c0_52 = arith.constant 0 : index
    %c0_53 = arith.constant 0 : index
    %133 = vector.load %arg12[%c0_52, %c0_53] : memref<64x32xf32, #tpu.memory_space<vmem>>, vector<64x32xf32>
    %cst_54 = arith.constant dense<0.000000e+00> : vector<8x32xf32>
    %134 = tpu.matmul %132, %133, %cst_54 {dimension_numbers = #tpu.dot_dimension_numbers<[1], [0], [0], [1], [0, 0, 1, 1], [], []>} : vector<8x64xf32>, vector<64x32xf32>, vector<8x32xf32> -> vector<8x32xf32>
    %135 = vector.extract_strided_slice %8 {offsets = [7, 0], sizes = [1, 32], strides = [1, 1]} : vector<14x128xf32> to vector<1x32xf32>
    %136 = vector.broadcast %135 : vector<1x32xf32> to vector<8x32xf32>
    %137 = arith.addf %134, %136 : vector<8x32xf32>
    %138 = arith.addf %125, %137 : vector<8x32xf32>
    %139 = vector.extract_strided_slice %8 {offsets = [12, 0], sizes = [1, 32], strides = [1, 1]} : vector<14x128xf32> to vector<1x32xf32>
    %140 = vector.extract_strided_slice %8 {offsets = [13, 0], sizes = [1, 32], strides = [1, 1]} : vector<14x128xf32> to vector<1x32xf32>
    %cst_55 = arith.constant dense<0.000000e+00> : vector<8xf32>
    %141 = vector.multi_reduction <add>, %138, %cst_55 [1] : vector<8x32xf32> to vector<8xf32>
    %142 = vector.shape_cast %141 : vector<8xf32> to vector<8x1xf32>
    %cst_56 = arith.constant 3.200000e+01 : f32
    %143 = vector.broadcast %cst_56 : f32 to vector<8x1xf32>
    %144 = arith.divf %142, %143 : vector<8x1xf32>
    %145 = vector.broadcast %144 : vector<8x1xf32> to vector<8x32xf32>
    %146 = arith.subf %138, %145 : vector<8x32xf32>
    %147 = arith.mulf %146, %146 : vector<8x32xf32>
    %cst_57 = arith.constant dense<0.000000e+00> : vector<8xf32>
    %148 = vector.multi_reduction <add>, %147, %cst_57 [1] : vector<8x32xf32> to vector<8xf32>
    %149 = vector.shape_cast %148 : vector<8xf32> to vector<8x1xf32>
    %cst_58 = arith.constant 3.200000e+01 : f32
    %150 = vector.broadcast %cst_58 : f32 to vector<8x1xf32>
    %151 = arith.divf %149, %150 : vector<8x1xf32>
    %cst_59 = arith.constant 9.99999974E-6 : f32
    %152 = vector.broadcast %cst_59 : f32 to vector<8x1xf32>
    %153 = arith.addf %151, %152 : vector<8x1xf32>
    %154 = math.rsqrt %153 : vector<8x1xf32>
    %155 = vector.broadcast %154 : vector<8x1xf32> to vector<8x32xf32>
    %156 = arith.mulf %146, %155 : vector<8x32xf32>
    %157 = vector.broadcast %139 : vector<1x32xf32> to vector<8x32xf32>
    %158 = arith.mulf %156, %157 : vector<8x32xf32>
    %159 = vector.broadcast %140 : vector<1x32xf32> to vector<8x32xf32>
    %160 = arith.addf %158, %159 : vector<8x32xf32>
    %c0_60 = arith.constant 0 : index
    %c0_61 = arith.constant 0 : index
    %c0_62 = arith.constant 0 : index
    %161 = vector.load %arg14[%c0_60, %c0_61, %c0_62] : memref<1x8x32xf32, #tpu.memory_space<vmem>>, vector<1x8x32xf32>
    %162 = vector.shape_cast %161 : vector<1x8x32xf32> to vector<8x32xf32>
    %163 = vector.shape_cast %160 : vector<8x32xf32> to vector<1x8x32xf32>
    tpu.vector_store %arg14[%c0_60, %c0_61, %c0_62], %163 {strides = array<i32>} : memref<1x8x32xf32, #tpu.memory_space<vmem>>, vector<1x8x32xf32>,
    return
  }
  func.func @transform_0(%arg0: i32) -> (i32, i32, i32) {
    %c0_i32 = arith.constant 0 : i32
    %c0_i32_0 = arith.constant 0 : i32
    %c0_i32_1 = arith.constant 0 : i32
    return %arg0, %c0_i32, %c0_i32_0 : i32, i32, i32
  }
  func.func @transform_1(%arg0: i32) -> (i32, i32, i32) {
    %c0_i32 = arith.constant 0 : i32
    %c0_i32_0 = arith.constant 0 : i32
    %c0_i32_1 = arith.constant 0 : i32
    return %arg0, %c0_i32, %c0_i32_0 : i32, i32, i32
  }
  func.func @transform_2(%arg0: i32) -> (i32, i32, i32) {
    %c0_i32 = arith.constant 0 : i32
    %c0_i32_0 = arith.constant 0 : i32
    %c0_i32_1 = arith.constant 0 : i32
    return %arg0, %c0_i32, %c0_i32_0 : i32, i32, i32
  }
  func.func @transform_3(%arg0: i32) -> (i32, i32, i32) {
    %c0_i32 = arith.constant 0 : i32
    %c0_i32_0 = arith.constant 0 : i32
    %c0_i32_1 = arith.constant 0 : i32
    return %arg0, %c0_i32, %c0_i32_0 : i32, i32, i32
  }
  func.func @transform_4(%arg0: i32) -> (i32, i32) {
    %c0_i32 = arith.constant 0 : i32
    %c0_i32_0 = arith.constant 0 : i32
    %c0_i32_1 = arith.constant 0 : i32
    return %c0_i32, %c0_i32_0 : i32, i32
  }
  func.func @transform_5(%arg0: i32) -> (i32, i32) {
    %c0_i32 = arith.constant 0 : i32
    %c0_i32_0 = arith.constant 0 : i32
    %c0_i32_1 = arith.constant 0 : i32
    return %c0_i32, %c0_i32_0 : i32, i32
  }
  func.func @transform_6(%arg0: i32) -> (i32, i32) {
    %c0_i32 = arith.constant 0 : i32
    %c0_i32_0 = arith.constant 0 : i32
    %c0_i32_1 = arith.constant 0 : i32
    return %c0_i32, %c0_i32_0 : i32, i32
  }
  func.func @transform_7(%arg0: i32) -> (i32, i32) {
    %c0_i32 = arith.constant 0 : i32
    %c0_i32_0 = arith.constant 0 : i32
    %c0_i32_1 = arith.constant 0 : i32
    return %c0_i32, %c0_i32_0 : i32, i32
  }
  func.func @transform_8(%arg0: i32) -> (i32, i32) {
    %c0_i32 = arith.constant 0 : i32
    %c0_i32_0 = arith.constant 0 : i32
    %c0_i32_1 = arith.constant 0 : i32
    return %c0_i32, %c0_i32_0 : i32, i32
  }
  func.func @transform_9(%arg0: i32) -> (i32, i32) {
    %c0_i32 = arith.constant 0 : i32
    %c0_i32_0 = arith.constant 0 : i32
    %c0_i32_1 = arith.constant 0 : i32
    return %c0_i32, %c0_i32_0 : i32, i32
  }
  func.func @transform_10(%arg0: i32) -> (i32, i32) {
    %c0_i32 = arith.constant 0 : i32
    %c0_i32_0 = arith.constant 0 : i32
    %c0_i32_1 = arith.constant 0 : i32
    return %c0_i32, %c0_i32_0 : i32, i32
  }
  func.func @transform_11(%arg0: i32) -> (i32, i32) {
    %c0_i32 = arith.constant 0 : i32
    %c0_i32_0 = arith.constant 0 : i32
    %c0_i32_1 = arith.constant 0 : i32
    return %c0_i32, %c0_i32_0 : i32, i32
  }
  func.func @transform_12(%arg0: i32) -> (i32, i32) {
    %c0_i32 = arith.constant 0 : i32
    %c0_i32_0 = arith.constant 0 : i32
    %c0_i32_1 = arith.constant 0 : i32
    return %c0_i32, %c0_i32_0 : i32, i32
  }
  func.func @transform_13(%arg0: i32) -> (i32, i32, i32) {
    %c0_i32 = arith.constant 0 : i32
    %c0_i32_0 = arith.constant 0 : i32
    %c0_i32_1 = arith.constant 0 : i32
    return %arg0, %c0_i32, %c0_i32_0 : i32, i32, i32
  }
}

</mosaic_0001>

<llo_original>
// kernel: tpu_custom_call.1
$region0: #{tpu_custom_call.1}
  #allocation0 [shape = 'u32[]', space=smem, size = 0x4, offset = 0x4, fixed_abs, tag = 'smem constant byte address 0x4 - core index']
  #allocation1 [shape = 'u32[144,128]{1,0:T(1,128)}', space=vmem, size = 0x12000, scoped, tag = 'internal scratch']
  %s0 = inlined_call_operand.hbm [shape: f32[2,8,32], index: 0, kind: input, shape index: {}]
  %s1 = inlined_call_operand.hbm [shape: f32[2,8,32], index: 1, kind: input, shape index: {}]
  %s2 = inlined_call_operand.vmem [shape: f32[2,16,32], index: 2, kind: input, shape index: {}]
  %s3 = inlined_call_operand.vmem [shape: f32[2,16,32], index: 3, kind: input, shape index: {}]
  %s4 = inlined_call_operand.vmem [shape: f32[32,96], index: 4, kind: input, shape index: {}]
  %s5 = inlined_call_operand.hbm [shape: f32[32,32], index: 5, kind: input, shape index: {}]
  %s6 = inlined_call_operand.hbm [shape: f32[32,32], index: 6, kind: input, shape index: {}]
  %s7 = inlined_call_operand.hbm [shape: f32[32,32], index: 7, kind: input, shape index: {}]
  %s8 = inlined_call_operand.hbm [shape: f32[32,32], index: 8, kind: input, shape index: {}]
  %s9 = inlined_call_operand.hbm [shape: f32[32,32], index: 9, kind: input, shape index: {}]
  %s10 = inlined_call_operand.hbm [shape: f32[32,64], index: 10, kind: input, shape index: {}]
  %s11 = inlined_call_operand.vmem [shape: f32[64,32], index: 11, kind: input, shape index: {}]
  %s12 = inlined_call_operand.hbm [shape: f32[14,128], index: 12, kind: input, shape index: {}]
  %s13 = inlined_call_operand.hbm [shape: f32[2,8,32], index: 13, kind: output, shape index: {}]
  %s14 = sld [smem:[#allocation0]]
  $region121: #{tpu_custom_call.1} parent=0
    _
  %s16 = ssub.s32 1, %s14
  %s17 = scalar_select 0, %s16, %s14
  $region1: #{tpu_custom_call.1} parent=0
    #allocation2 [shape = 'u8[8192]{0}', space=vmem, size = 0x2000, scoped, tag = 'input window, operand 0']
    #allocation3 [shape = 's32[2]{0}', space=sflag, size = 0x8, scoped, tag = 'scoped memory for tpu_custom_call.1']
    #allocation4 [shape = 's32[2]{0}', space=sflag, size = 0x8, scoped, tag = 'scoped memory for tpu_custom_call.1']
    #allocation5 [shape = 'u8[8192]{0}', space=vmem, size = 0x2000, scoped, tag = 'input window, operand 1']
    #allocation6 [shape = 's32[2]{0}', space=sflag, size = 0x8, scoped, tag = 'scoped memory for tpu_custom_call.1']
    #allocation7 [shape = 'u8[16384]{0}', space=vmem, size = 0x4000, scoped, tag = 'input window, operand 5, single buffered']
    #allocation8 [shape = 'u8[16384]{0}', space=vmem, size = 0x4000, scoped, tag = 'input window, operand 6, single buffered']
    #allocation9 [shape = 's32[1]{0}', space=sflag, size = 0x4, scoped, tag = 'scoped memory for tpu_custom_call.1']
    #allocation10 [shape = 'u8[16384]{0}', space=vmem, size = 0x4000, scoped, tag = 'input window, operand 7, single buffered']
    #allocation11 [shape = 'u8[16384]{0}', space=vmem, size = 0x4000, scoped, tag = 'input window, operand 8, single buffered']
    #allocation12 [shape = 's32[1]{0}', space=sflag, size = 0x4, scoped, tag = 'scoped memory for tpu_custom_call.1']
    #allocation13 [shape = 'u8[16384]{0}', space=vmem, size = 0x4000, scoped, tag = 'input window, operand 9, single buffered']
    #allocation14 [shape = 'u8[16384]{0}', space=vmem, size = 0x4000, scoped, tag = 'input window, operand 10, single buffered']
    #allocation15 [shape = 's32[1]{0}', space=sflag, size = 0x4, scoped, tag = 'scoped memory for tpu_custom_call.1']
    #allocation16 [shape = 'u8[8192]{0}', space=vmem, size = 0x2000, scoped, tag = 'input window, operand 12, single buffered']
    #allocation17 [shape = 'u8[8192]{0}', space=vmem, size = 0x2000, scoped, tag = 'output window, operand 0']
    %18 = vsyncpa [#allocation3], 0
    %s19 = scalar_lea.sflag [#allocation3], 1
    %20 = vsyncpa %s19, 0
    %21 = vsyncpa [#allocation6], 0
    %s22 = scalar_lea.sflag [#allocation6], 1
    %23 = vsyncpa %s22, 0
    %24 = vsyncpa [#allocation9], 0
    %25 = vsyncpa [#allocation12], 0
    %26 = vsyncpa [#allocation15], 0
    %27 = vsyncpa [#allocation4], 0
    %s28 = scalar_lea.sflag [#allocation4], 1
    %29 = vsyncpa %s28, 0
    loop: start=0, step=1, limit=4
    $region2: #{tpu_custom_call.1} parent=1 // loop_pre_header
      _
    $region3: #{tpu_custom_call.1} parent=1 // loop_header
      %s31 = sphi 0, %s35
      %p32 = scmp.ge.s32.totalorder %s31, 4
      %s41 = sphi 0, %s43
      %s44 = sphi 0, %s41
      %s45 = sphi 0, %s44
      %s61 = sphi 0, %s45
      %s67 = sphi 0, %s69
      %s70 = sphi 0, %s67
      %s71 = sphi 0, %s70
      %s87 = sphi 0, %s71
      %s93 = sphi 0, %s95
      %s96 = sphi 0, %s93
      %s97 = sphi 0, %s96
      %s113 = sphi 0, %s97
      %s119 = sphi 0, %s121
      %s122 = sphi 0, %s119
      %s123 = sphi 0, %s122
      %s139 = sphi 0, %s123
      %s143 = sphi 0, %s143
      %s145 = sphi 0, %s143
      %s146 = sphi 0, %s145
      %s160 = sphi 0, %s146
      %s164 = sphi 0, %s164
      %s166 = sphi 0, %s164
      %s167 = sphi 0, %s166
      %s181 = sphi 0, %s167
      %s185 = sphi 0, %s185
      %s187 = sphi 0, %s185
      %s188 = sphi 0, %s187
      %s202 = sphi 0, %s188
      %s206 = sphi 0, %s206
      %s208 = sphi 0, %s206
      %s209 = sphi 0, %s208
      %s223 = sphi 0, %s209
      %s227 = sphi 0, %s227
      %s229 = sphi 0, %s227
      %s230 = sphi 0, %s229
      %s244 = sphi 0, %s230
      %s248 = sphi 0, %s248
      %s250 = sphi 0, %s248
      %s251 = sphi 0, %s250
      %s265 = sphi 0, %s251
      %s269 = sphi 0, %s269
      %s271 = sphi 0, %s269
      %s272 = sphi 0, %s271
      %s286 = sphi 0, %s272
      %s290 = sphi 0, %s290
      %s292 = sphi 0, %s290
      %s293 = sphi 0, %s292
      %s307 = sphi 0, %s293
      %s311 = sphi 0, %s311
      %s313 = sphi 0, %s311
      %s314 = sphi 0, %s313
      %s328 = sphi 0, %s314
      %s334 = sphi 0, %s336
      %s337 = sphi 0, %s334
      %s338 = sphi 0, %s337
      %s354 = sphi 0, %s338
    $region4: #{tpu_custom_call.1} parent=1 // loop_header_branch
      %34 = sbr.rel (%p32) target = $region8
    $region5: #{tpu_custom_call.1} parent=1 // loop_body
      %s36 = ssub.s32 %s31, 1
      %s37 = ssub.s32 %s31, 2
      %s38 = sadd.s32 %s31, 1
      %s39 = ssub.s32 %s31, %s38
      %p40 = scmp.eq.s32.totalorder %s39, 0
      %s42 = sadd.s32 %s41, 1
      %s43 = scalar_select %p40, %s41, %s42
      %p46 = pneg %p40
      %p47 = scmp.eq.s32.totalorder %s31, 1
      %p48 = por %p46, %p47
      %p49 = scmp.ne.s32.totalorder %s41, %s44
      %p50 = scmp.eq.s32.totalorder %s31, 0
      %p51 = por %p49, %p50
      %p52 = scmp.ne.s32.totalorder %s41, %s44
      %p53 = scmp.eq.s32.totalorder %s36, 1
      %p54 = por %p52, %p53
      %p55 = scmp.ne.s32.totalorder %s44, %s45
      %p56 = scmp.eq.s32.totalorder %s36, 0
      %p57 = por %p55, %p56
      %p58 = scmp.ne.s32.totalorder %s44, %s45
      %p59 = scmp.eq.s32.totalorder %s37, 1
      %p60 = por %p58, %p59
      %p62 = scmp.ne.s32.totalorder %s45, %s61
      %p63 = scmp.eq.s32.totalorder %s37, 0
      %p64 = por %p62, %p63
      %s65 = ssub.s32 %s31, %s38
      %p66 = scmp.eq.s32.totalorder %s65, 0
      %s68 = sadd.s32 %s67, 1
      %s69 = scalar_select %p66, %s67, %s68
      %p72 = pneg %p66
      %p73 = scmp.eq.s32.totalorder %s31, 1
      %p74 = por %p72, %p73
      %p75 = scmp.ne.s32.totalorder %s67, %s70
      %p76 = scmp.eq.s32.totalorder %s31, 0
      %p77 = por %p75, %p76
      %p78 = scmp.ne.s32.totalorder %s67, %s70
      %p79 = scmp.eq.s32.totalorder %s36, 1
      %p80 = por %p78, %p79
      %p81 = scmp.ne.s32.totalorder %s70, %s71
      %p82 = scmp.eq.s32.totalorder %s36, 0
      %p83 = por %p81, %p82
      %p84 = scmp.ne.s32.totalorder %s70, %s71
      %p85 = scmp.eq.s32.totalorder %s37, 1
      %p86 = por %p84, %p85
      %p88 = scmp.ne.s32.totalorder %s71, %s87
      %p89 = scmp.eq.s32.totalorder %s37, 0
      %p90 = por %p88, %p89
      %s91 = ssub.s32 %s31, %s38
      %p92 = scmp.eq.s32.totalorder %s91, 0
      %s94 = sadd.s32 %s93, 1
      %s95 = scalar_select %p92, %s93, %s94
      %p98 = pneg %p92
      %p99 = scmp.eq.s32.totalorder %s31, 1
      %p100 = por %p98, %p99
      %p101 = scmp.ne.s32.totalorder %s93, %s96
      %p102 = scmp.eq.s32.totalorder %s31, 0
      %p103 = por %p101, %p102
      %p104 = scmp.ne.s32.totalorder %s93, %s96
      %p105 = scmp.eq.s32.totalorder %s36, 1
      %p106 = por %p104, %p105
      %p107 = scmp.ne.s32.totalorder %s96, %s97
      %p108 = scmp.eq.s32.totalorder %s36, 0
      %p109 = por %p107, %p108
      %p110 = scmp.ne.s32.totalorder %s96, %s97
      %p111 = scmp.eq.s32.totalorder %s37, 1
      %p112 = por %p110, %p111
      %p114 = scmp.ne.s32.totalorder %s97, %s113
      %p115 = scmp.eq.s32.totalorder %s37, 0
      %p116 = por %p114, %p115
      %s117 = ssub.s32 %s31, %s38
      %p118 = scmp.eq.s32.totalorder %s117, 0
      %s120 = sadd.s32 %s119, 1
      %s121 = scalar_select %p118, %s119, %s120
      %p124 = pneg %p118
      %p125 = scmp.eq.s32.totalorder %s31, 1
      %p126 = por %p124, %p125
      %p127 = scmp.ne.s32.totalorder %s119, %s122
      %p128 = scmp.eq.s32.totalorder %s31, 0
      %p129 = por %p127, %p128
      %p130 = scmp.ne.s32.totalorder %s119, %s122
      %p131 = scmp.eq.s32.totalorder %s36, 1
      %p132 = por %p130, %p131
      %p133 = scmp.ne.s32.totalorder %s122, %s123
      %p134 = scmp.eq.s32.totalorder %s36, 0
      %p135 = por %p133, %p134
      %p136 = scmp.ne.s32.totalorder %s122, %s123
      %p137 = scmp.eq.s32.totalorder %s37, 1
      %p138 = por %p136, %p137
      %p140 = scmp.ne.s32.totalorder %s123, %s139
      %p141 = scmp.eq.s32.totalorder %s37, 0
      %p142 = por %p140, %p141
      %s144 = sadd.s32 %s143, 1
      %p147 = scmp.eq.s32.totalorder %s31, 1
      %p148 = scmp.ne.s32.totalorder %s143, %s145
      %p149 = scmp.eq.s32.totalorder %s31, 0
      %p150 = por %p148, %p149
      %p151 = scmp.ne.s32.totalorder %s143, %s145
      %p152 = scmp.eq.s32.totalorder %s36, 1
      %p153 = por %p151, %p152
      %p154 = scmp.ne.s32.totalorder %s145, %s146
      %p155 = scmp.eq.s32.totalorder %s36, 0
      %p156 = por %p154, %p155
      %p157 = scmp.ne.s32.totalorder %s145, %s146
      %p158 = scmp.eq.s32.totalorder %s37, 1
      %p159 = por %p157, %p158
      %p161 = scmp.ne.s32.totalorder %s146, %s160
      %p162 = scmp.eq.s32.totalorder %s37, 0
      %p163 = por %p161, %p162
      %s165 = sadd.s32 %s164, 1
      %p168 = scmp.eq.s32.totalorder %s31, 1
      %p169 = scmp.ne.s32.totalorder %s164, %s166
      %p170 = scmp.eq.s32.totalorder %s31, 0
      %p171 = por %p169, %p170
      %p172 = scmp.ne.s32.totalorder %s164, %s166
      %p173 = scmp.eq.s32.totalorder %s36, 1
      %p174 = por %p172, %p173
      %p175 = scmp.ne.s32.totalorder %s166, %s167
      %p176 = scmp.eq.s32.totalorder %s36, 0
      %p177 = por %p175, %p176
      %p178 = scmp.ne.s32.totalorder %s166, %s167
      %p179 = scmp.eq.s32.totalorder %s37, 1
      %p180 = por %p178, %p179
      %p182 = scmp.ne.s32.totalorder %s167, %s181
      %p183 = scmp.eq.s32.totalorder %s37, 0
      %p184 = por %p182, %p183
      %s186 = sadd.s32 %s185, 1
      %p189 = scmp.eq.s32.totalorder %s31, 1
      %p190 = scmp.ne.s32.totalorder %s185, %s187
      %p191 = scmp.eq.s32.totalorder %s31, 0
      %p192 = por %p190, %p191
      %p193 = scmp.ne.s32.totalorder %s185, %s187
      %p194 = scmp.eq.s32.totalorder %s36, 1
      %p195 = por %p193, %p194
      %p196 = scmp.ne.s32.totalorder %s187, %s188
      %p197 = scmp.eq.s32.totalorder %s36, 0
      %p198 = por %p196, %p197
      %p199 = scmp.ne.s32.totalorder %s187, %s188
      %p200 = scmp.eq.s32.totalorder %s37, 1
      %p201 = por %p199, %p200
      %p203 = scmp.ne.s32.totalorder %s188, %s202
      %p204 = scmp.eq.s32.totalorder %s37, 0
      %p205 = por %p203, %p204
      %s207 = sadd.s32 %s206, 1
      %p210 = scmp.eq.s32.totalorder %s31, 1
      %p211 = scmp.ne.s32.totalorder %s206, %s208
      %p212 = scmp.eq.s32.totalorder %s31, 0
      %p213 = por %p211, %p212
      %p214 = scmp.ne.s32.totalorder %s206, %s208
      %p215 = scmp.eq.s32.totalorder %s36, 1
      %p216 = por %p214, %p215
      %p217 = scmp.ne.s32.totalorder %s208, %s209
      %p218 = scmp.eq.s32.totalorder %s36, 0
      %p219 = por %p217, %p218
      %p220 = scmp.ne.s32.totalorder %s208, %s209
      %p221 = scmp.eq.s32.totalorder %s37, 1
      %p222 = por %p220, %p221
      %p224 = scmp.ne.s32.totalorder %s209, %s223
      %p225 = scmp.eq.s32.totalorder %s37, 0
      %p226 = por %p224, %p225
      %s228 = sadd.s32 %s227, 1
      %p231 = scmp.eq.s32.totalorder %s31, 1
      %p232 = scmp.ne.s32.totalorder %s227, %s229
      %p233 = scmp.eq.s32.totalorder %s31, 0
      %p234 = por %p232, %p233
      %p235 = scmp.ne.s32.totalorder %s227, %s229
      %p236 = scmp.eq.s32.totalorder %s36, 1
      %p237 = por %p235, %p236
      %p238 = scmp.ne.s32.totalorder %s229, %s230
      %p239 = scmp.eq.s32.totalorder %s36, 0
      %p240 = por %p238, %p239
      %p241 = scmp.ne.s32.totalorder %s229, %s230
      %p242 = scmp.eq.s32.totalorder %s37, 1
      %p243 = por %p241, %p242
      %p245 = scmp.ne.s32.totalorder %s230, %s244
      %p246 = scmp.eq.s32.totalorder %s37, 0
      %p247 = por %p245, %p246
      %s249 = sadd.s32 %s248, 1
      %p252 = scmp.eq.s32.totalorder %s31, 1
      %p253 = scmp.ne.s32.totalorder %s248, %s250
      %p254 = scmp.eq.s32.totalorder %s31, 0
      %p255 = por %p253, %p254
      %p256 = scmp.ne.s32.totalorder %s248, %s250
      %p257 = scmp.eq.s32.totalorder %s36, 1
      %p258 = por %p256, %p257
      %p259 = scmp.ne.s32.totalorder %s250, %s251
      %p260 = scmp.eq.s32.totalorder %s36, 0
      %p261 = por %p259, %p260
      %p262 = scmp.ne.s32.totalorder %s250, %s251
      %p263 = scmp.eq.s32.totalorder %s37, 1
      %p264 = por %p262, %p263
      %p266 = scmp.ne.s32.totalorder %s251, %s265
      %p267 = scmp.eq.s32.totalorder %s37, 0
      %p268 = por %p266, %p267
      %s270 = sadd.s32 %s269, 1
      %p273 = scmp.eq.s32.totalorder %s31, 1
      %p274 = scmp.ne.s32.totalorder %s269, %s271
      %p275 = scmp.eq.s32.totalorder %s31, 0
      %p276 = por %p274, %p275
      %p277 = scmp.ne.s32.totalorder %s269, %s271
      %p278 = scmp.eq.s32.totalorder %s36, 1
      %p279 = por %p277, %p278
      %p280 = scmp.ne.s32.totalorder %s271, %s272
      %p281 = scmp.eq.s32.totalorder %s36, 0
      %p282 = por %p280, %p281
      %p283 = scmp.ne.s32.totalorder %s271, %s272
      %p284 = scmp.eq.s32.totalorder %s37, 1
      %p285 = por %p283, %p284
      %p287 = scmp.ne.s32.totalorder %s272, %s286
      %p288 = scmp.eq.s32.totalorder %s37, 0
      %p289 = por %p287, %p288
      %s291 = sadd.s32 %s290, 1
      %p294 = scmp.eq.s32.totalorder %s31, 1
      %p295 = scmp.ne.s32.totalorder %s290, %s292
      %p296 = scmp.eq.s32.totalorder %s31, 0
      %p297 = por %p295, %p296
      %p298 = scmp.ne.s32.totalorder %s290, %s292
      %p299 = scmp.eq.s32.totalorder %s36, 1
      %p300 = por %p298, %p299
      %p301 = scmp.ne.s32.totalorder %s292, %s293
      %p302 = scmp.eq.s32.totalorder %s36, 0
      %p303 = por %p301, %p302
      %p304 = scmp.ne.s32.totalorder %s292, %s293
      %p305 = scmp.eq.s32.totalorder %s37, 1
      %p306 = por %p304, %p305
      %p308 = scmp.ne.s32.totalorder %s293, %s307
      %p309 = scmp.eq.s32.totalorder %s37, 0
      %p310 = por %p308, %p309
      %s312 = sadd.s32 %s311, 1
      %p315 = scmp.eq.s32.totalorder %s31, 1
      %p316 = scmp.ne.s32.totalorder %s311, %s313
      %p317 = scmp.eq.s32.totalorder %s31, 0
      %p318 = por %p316, %p317
      %p319 = scmp.ne.s32.totalorder %s311, %s313
      %p320 = scmp.eq.s32.totalorder %s36, 1
      %p321 = por %p319, %p320
      %p322 = scmp.ne.s32.totalorder %s313, %s314
      %p323 = scmp.eq.s32.totalorder %s36, 0
      %p324 = por %p322, %p323
      %p325 = scmp.ne.s32.totalorder %s313, %s314
      %p326 = scmp.eq.s32.totalorder %s37, 1
      %p327 = por %p325, %p326
      %p329 = scmp.ne.s32.totalorder %s314, %s328
      %p330 = scmp.eq.s32.totalorder %s37, 0
      %p331 = por %p329, %p330
      %s332 = ssub.s32 %s31, %s38
      %p333 = scmp.eq.s32.totalorder %s332, 0
      %s335 = sadd.s32 %s334, 1
      %s336 = scalar_select %p333, %s334, %s335
      %p339 = pneg %p333
      %p340 = scmp.eq.s32.totalorder %s31, 1
      %p341 = por %p339, %p340
      %p342 = scmp.ne.s32.totalorder %s334, %s337
      %p343 = scmp.eq.s32.totalorder %s31, 0
      %p344 = por %p342, %p343
      %p345 = scmp.ne.s32.totalorder %s334, %s337
      %p346 = scmp.eq.s32.totalorder %s36, 1
      %p347 = por %p345, %p346
      %p348 = scmp.ne.s32.totalorder %s337, %s338
      %p349 = scmp.eq.s32.totalorder %s36, 0
      %p350 = por %p348, %p349
      %p351 = scmp.ne.s32.totalorder %s337, %s338
      %p352 = scmp.eq.s32.totalorder %s37, 1
      %p353 = por %p351, %p352
      %p355 = scmp.ne.s32.totalorder %s338, %s354
      %p356 = scmp.eq.s32.totalorder %s37, 0
      %p357 = por %p355, %p356
      %p358 = scmp.le.s32.totalorder 1, %s31
      %p359 = scmp.lt.s32.totalorder %s31, 3
      %p360 = pnand %p358, %p359
      %p361 = pneg %p360
      // Predicated region
      $region9: #{tpu_custom_call.1} parent=5 // pred_check
        _
      $region10: #{tpu_custom_call.1} parent=5 // pred_check_branch
        %363 = sbr.rel (%p360) target = $region12
      $region11: #{tpu_custom_call.1} parent=5 // pred_region
        %s364 = ssub.s32 %s31, 1
        // Predicated region
        $region13: #{tpu_custom_call.1} parent=11 // pred_check
          %p365 = pneg %p156
        $region14: #{tpu_custom_call.1} parent=11 // pred_check_branch
          %367 = sbr.rel (%p365) target = $region16
        $region15: #{tpu_custom_call.1} parent=11 // pred_region
          _
        $region16: #{tpu_custom_call.1} parent=11 // pred_fallthru
          _
        // Predicated region
        $region17: #{tpu_custom_call.1} parent=11 // pred_check
          %p368 = pneg %p177
        $region18: #{tpu_custom_call.1} parent=11 // pred_check_branch
          %370 = sbr.rel (%p368) target = $region20
        $region19: #{tpu_custom_call.1} parent=11 // pred_region
          %s372 = ssub.s32 512, 512
          %373 = vsyncadd [#allocation6], %s372
          %s374 = sshll.u32 [#allocation7], 4
          %s375 = int_to_ptr.vmem [resolvable:$true] %s374
          %380 = dma.hbm_to_vmem [thread:$0]  %s5, 512, %s375, [#allocation6], 128, 128, 8
        $region20: #{tpu_custom_call.1} parent=11 // pred_fallthru
          _
        // Predicated region
        $region21: #{tpu_custom_call.1} parent=11 // pred_check
          %p381 = pneg %p198
        $region22: #{tpu_custom_call.1} parent=11 // pred_check_branch
          %383 = sbr.rel (%p381) target = $region24
        $region23: #{tpu_custom_call.1} parent=11 // pred_region
          %s385 = ssub.s32 512, 512
          %386 = vsyncadd [#allocation9], %s385
          %s387 = sshll.u32 [#allocation8], 4
          %s388 = int_to_ptr.vmem [resolvable:$true] %s387
          %393 = dma.hbm_to_vmem [thread:$0]  %s6, 512, %s388, [#allocation9], 128, 128, 8
        $region24: #{tpu_custom_call.1} parent=11 // pred_fallthru
          _
        // Predicated region
        $region25: #{tpu_custom_call.1} parent=11 // pred_check
          %p394 = pneg %p219
        $region26: #{tpu_custom_call.1} parent=11 // pred_check_branch
          %396 = sbr.rel (%p394) target = $region28
        $region27: #{tpu_custom_call.1} parent=11 // pred_region
          %s398 = ssub.s32 512, 512
          %399 = vsyncadd [#allocation9], %s398
          %s400 = sshll.u32 [#allocation10], 4
          %s401 = int_to_ptr.vmem [resolvable:$true] %s400
          %406 = dma.hbm_to_vmem [thread:$0]  %s7, 512, %s401, [#allocation9], 128, 128, 8
        $region28: #{tpu_custom_call.1} parent=11 // pred_fallthru
          _
        // Predicated region
        $region29: #{tpu_custom_call.1} parent=11 // pred_check
          %p407 = pneg %p240
        $region30: #{tpu_custom_call.1} parent=11 // pred_check_branch
          %409 = sbr.rel (%p407) target = $region32
        $region31: #{tpu_custom_call.1} parent=11 // pred_region
          %s411 = ssub.s32 512, 512
          %412 = vsyncadd [#allocation12], %s411
          %s413 = sshll.u32 [#allocation11], 4
          %s414 = int_to_ptr.vmem [resolvable:$true] %s413
          %419 = dma.hbm_to_vmem [thread:$0]  %s8, 512, %s414, [#allocation12], 128, 128, 8
        $region32: #{tpu_custom_call.1} parent=11 // pred_fallthru
          _
        // Predicated region
        $region33: #{tpu_custom_call.1} parent=11 // pred_check
          %p420 = pneg %p261
        $region34: #{tpu_custom_call.1} parent=11 // pred_check_branch
          %422 = sbr.rel (%p420) target = $region36
        $region35: #{tpu_custom_call.1} parent=11 // pred_region
          %s424 = ssub.s32 512, 512
          %425 = vsyncadd [#allocation12], %s424
          %s426 = sshll.u32 [#allocation13], 4
          %s427 = int_to_ptr.vmem [resolvable:$true] %s426
          %432 = dma.hbm_to_vmem [thread:$0]  %s9, 512, %s427, [#allocation12], 128, 128, 8
        $region36: #{tpu_custom_call.1} parent=11 // pred_fallthru
          _
        // Predicated region
        $region37: #{tpu_custom_call.1} parent=11 // pred_check
          %p433 = pneg %p282
        $region38: #{tpu_custom_call.1} parent=11 // pred_check_branch
          %435 = sbr.rel (%p433) target = $region40
        $region39: #{tpu_custom_call.1} parent=11 // pred_region
          %s437 = ssub.s32 512, 512
          %438 = vsyncadd [#allocation15], %s437
          %s439 = sshll.u32 [#allocation14], 4
          %s440 = int_to_ptr.vmem [resolvable:$true] %s439
          %445 = dma.hbm_to_vmem [thread:$0]  %s10, 512, %s440, [#allocation15], 128, 128, 8
        $region40: #{tpu_custom_call.1} parent=11 // pred_fallthru
          _
        // Predicated region
        $region41: #{tpu_custom_call.1} parent=11 // pred_check
          %p446 = pneg %p303
        $region42: #{tpu_custom_call.1} parent=11 // pred_check_branch
          %448 = sbr.rel (%p446) target = $region44
        $region43: #{tpu_custom_call.1} parent=11 // pred_region
          _
        $region44: #{tpu_custom_call.1} parent=11 // pred_fallthru
          _
        // Predicated region
        $region45: #{tpu_custom_call.1} parent=11 // pred_check
          %p449 = pneg %p324
        $region46: #{tpu_custom_call.1} parent=11 // pred_check_branch
          %451 = sbr.rel (%p449) target = $region48
        $region47: #{tpu_custom_call.1} parent=11 // pred_region
          %s453 = ssub.s32 256, 256
          %454 = vsyncadd [#allocation15], %s453
          %s455 = sshll.u32 [#allocation16], 4
          %s456 = int_to_ptr.vmem [resolvable:$true] %s455
          %461 = dma.hbm_to_vmem [thread:$0]  %s12, 256, %s456, [#allocation15], 128, 128, 8
        $region48: #{tpu_custom_call.1} parent=11 // pred_fallthru
          _
      $region12: #{tpu_custom_call.1} parent=5 // pred_fallthru
        _
      %p462 = scmp.lt.s32.totalorder %s31, 2
      // Predicated region
      $region49: #{tpu_custom_call.1} parent=5 // pred_check
        %p463 = pneg %p462
      $region50: #{tpu_custom_call.1} parent=5 // pred_check_branch
        %465 = sbr.rel (%p463) target = $region52
      $region51: #{tpu_custom_call.1} parent=5 // pred_region
        // Predicated region
        $region53: #{tpu_custom_call.1} parent=51 // pred_check
          %p466 = pneg %p51
        $region54: #{tpu_custom_call.1} parent=51 // pred_check_branch
          %468 = sbr.rel (%p466) target = $region56
        $region55: #{tpu_custom_call.1} parent=51 // pred_region
          %s469 = sand.u32 %s41, 1
          %s470 = scalar_lea.sflag [#allocation3], %s469
          %s471 = sand.u32 %s41, 1
          %s472 = smul.addr %s471, 8
          %s473 = scalar_lea.vmem [#allocation2], %s472
          %s475 = ssub.s32 128, 128
          %476 = vsyncadd %s470, %s475
          %s477 = smul.addr %s31, 128
          %s478 = scalar_lea.hbm %s0, %s477
          %s480 = sshll.u32 %s473, 4
          %s481 = int_to_ptr.vmem [resolvable:$true] %s480
          %483 = dma.hbm_to_vmem [thread:$0]  %s478, 128, %s481, %s470
        $region56: #{tpu_custom_call.1} parent=51 // pred_fallthru
          _
        // Predicated region
        $region57: #{tpu_custom_call.1} parent=51 // pred_check
          %p484 = pneg %p77
        $region58: #{tpu_custom_call.1} parent=51 // pred_check_branch
          %486 = sbr.rel (%p484) target = $region60
        $region59: #{tpu_custom_call.1} parent=51 // pred_region
          %s487 = sand.u32 %s31, 1
          %s488 = scalar_lea.sflag [#allocation6], %s487
          %s489 = sand.u32 %s67, 1
          %s490 = smul.addr %s489, 8
          %s491 = scalar_lea.vmem [#allocation5], %s490
          %s493 = ssub.s32 128, 128
          %494 = vsyncadd %s488, %s493
          %s495 = smul.addr %s31, 128
          %s496 = scalar_lea.hbm %s1, %s495
          %s498 = sshll.u32 %s491, 4
          %s499 = int_to_ptr.vmem [resolvable:$true] %s498
          %501 = dma.hbm_to_vmem [thread:$0]  %s496, 128, %s499, %s488
        $region60: #{tpu_custom_call.1} parent=51 // pred_fallthru
          _
        // Predicated region
        $region61: #{tpu_custom_call.1} parent=51 // pred_check
          %p502 = pneg %p103
        $region62: #{tpu_custom_call.1} parent=51 // pred_check_branch
          %504 = sbr.rel (%p502) target = $region64
        $region63: #{tpu_custom_call.1} parent=51 // pred_region
          %p505 = scmp.lt.s32.totalorder %s31, 1
          %s506 = scalar_select %p505, %s31, 1
          %s507 = smul.addr %s506, 2
          %s508 = smul.addr %s507, 8
          %s509 = scalar_lea.vmem %s2, %s508
        $region64: #{tpu_custom_call.1} parent=51 // pred_fallthru
          _
        // Predicated region
        $region65: #{tpu_custom_call.1} parent=51 // pred_check
          %p510 = pneg %p129
        $region66: #{tpu_custom_call.1} parent=51 // pred_check_branch
          %512 = sbr.rel (%p510) target = $region68
        $region67: #{tpu_custom_call.1} parent=51 // pred_region
          %p513 = scmp.lt.s32.totalorder %s31, 1
          %s514 = scalar_select %p513, %s31, 1
          %s515 = smul.addr %s514, 2
          %s516 = smul.addr %s515, 8
          %s517 = scalar_lea.vmem %s3, %s516
        $region68: #{tpu_custom_call.1} parent=51 // pred_fallthru
          _
      $region52: #{tpu_custom_call.1} parent=5 // pred_fallthru
        _
      %p518 = scmp.le.s32.totalorder 1, %s31
      %p519 = scmp.lt.s32.totalorder %s31, 3
      %p520 = pnand %p518, %p519
      %p521 = pneg %p520
      // Predicated region
      $region69: #{tpu_custom_call.1} parent=5 // pred_check
        _
      $region70: #{tpu_custom_call.1} parent=5 // pred_check_branch
        %523 = sbr.rel (%p520) target = $region72
      $region71: #{tpu_custom_call.1} parent=5 // pred_region
        %s524 = ssub.s32 %s31, 1
        %s525 = sand.u32 %s44, 1
        %s526 = scalar_lea.sflag [#allocation3], %s525
        %s527 = sand.u32 %s44, 1
        %s528 = smul.addr %s527, 8
        %s529 = scalar_lea.vmem [#allocation2], %s528
        // Predicated region
        $region73: #{tpu_custom_call.1} parent=71 // pred_check
          %p530 = pneg %p57
        $region74: #{tpu_custom_call.1} parent=71 // pred_check_branch
          %532 = sbr.rel (%p530) target = $region76
        $region75: #{tpu_custom_call.1} parent=71 // pred_region
          %533 = dma.done %s526, 128
        $region76: #{tpu_custom_call.1} parent=71 // pred_fallthru
          _
        %s534 = sand.u32 %s36, 1
        %s535 = scalar_lea.sflag [#allocation6], %s534
        %s536 = sand.u32 %s70, 1
        %s537 = smul.addr %s536, 8
        %s538 = scalar_lea.vmem [#allocation5], %s537
        // Predicated region
        $region77: #{tpu_custom_call.1} parent=71 // pred_check
          %p539 = pneg %p83
        $region78: #{tpu_custom_call.1} parent=71 // pred_check_branch
          %541 = sbr.rel (%p539) target = $region80
        $region79: #{tpu_custom_call.1} parent=71 // pred_region
          %542 = dma.done %s535, 128
        $region80: #{tpu_custom_call.1} parent=71 // pred_fallthru
          _
        // Predicated region
        $region81: #{tpu_custom_call.1} parent=71 // pred_check
          %p543 = pneg %p177
        $region82: #{tpu_custom_call.1} parent=71 // pred_check_branch
          %545 = sbr.rel (%p543) target = $region84
        $region83: #{tpu_custom_call.1} parent=71 // pred_region
          %546 = dma.done [#allocation6], 512
        $region84: #{tpu_custom_call.1} parent=71 // pred_fallthru
          _
        // Predicated region
        $region85: #{tpu_custom_call.1} parent=71 // pred_check
          %p547 = pneg %p198
        $region86: #{tpu_custom_call.1} parent=71 // pred_check_branch
          %549 = sbr.rel (%p547) target = $region88
        $region87: #{tpu_custom_call.1} parent=71 // pred_region
          %550 = dma.done [#allocation9], 512
        $region88: #{tpu_custom_call.1} parent=71 // pred_fallthru
          _
        // Predicated region
        $region89: #{tpu_custom_call.1} parent=71 // pred_check
          %p551 = pneg %p219
        $region90: #{tpu_custom_call.1} parent=71 // pred_check_branch
          %553 = sbr.rel (%p551) target = $region92
        $region91: #{tpu_custom_call.1} parent=71 // pred_region
          %554 = dma.done [#allocation9], 512
        $region92: #{tpu_custom_call.1} parent=71 // pred_fallthru
          _
        // Predicated region
        $region93: #{tpu_custom_call.1} parent=71 // pred_check
          %p555 = pneg %p240
        $region94: #{tpu_custom_call.1} parent=71 // pred_check_branch
          %557 = sbr.rel (%p555) target = $region96
        $region95: #{tpu_custom_call.1} parent=71 // pred_region
          %558 = dma.done [#allocation12], 512
        $region96: #{tpu_custom_call.1} parent=71 // pred_fallthru
          _
        // Predicated region
        $region97: #{tpu_custom_call.1} parent=71 // pred_check
          %p559 = pneg %p261
        $region98: #{tpu_custom_call.1} parent=71 // pred_check_branch
          %561 = sbr.rel (%p559) target = $region100
        $region99: #{tpu_custom_call.1} parent=71 // pred_region
          %562 = dma.done [#allocation12], 512
        $region100: #{tpu_custom_call.1} parent=71 // pred_fallthru
          _
        // Predicated region
        $region101: #{tpu_custom_call.1} parent=71 // pred_check
          %p563 = pneg %p282
        $region102: #{tpu_custom_call.1} parent=71 // pred_check_branch
          %565 = sbr.rel (%p563) target = $region104
        $region103: #{tpu_custom_call.1} parent=71 // pred_region
          %566 = dma.done [#allocation15], 512
        $region104: #{tpu_custom_call.1} parent=71 // pred_fallthru
          _
        // Predicated region
        $region105: #{tpu_custom_call.1} parent=71 // pred_check
          %p567 = pneg %p324
        $region106: #{tpu_custom_call.1} parent=71 // pred_check_branch
          %569 = sbr.rel (%p567) target = $region108
        $region107: #{tpu_custom_call.1} parent=71 // pred_region
          %570 = dma.done [#allocation15], 256
        $region108: #{tpu_custom_call.1} parent=71 // pred_fallthru
          _
        %s571 = sand.u32 %s44, 1
        %s572 = scalar_lea.sflag [#allocation3], %s571
        %s573 = sand.u32 %s44, 1
        %s574 = smul.addr %s573, 8
        %s575 = scalar_lea.vmem [#allocation2], %s574
        %p576 = pneg %p57
        %p577 = pneg %p54
        %s578 = sand.u32 %s36, 1
        %s579 = scalar_lea.sflag [#allocation6], %s578
        %s580 = sand.u32 %s70, 1
        %s581 = smul.addr %s580, 8
        %s582 = scalar_lea.vmem [#allocation5], %s581
        %p583 = pneg %p83
        %p584 = pneg %p80
        %p585 = scmp.lt.s32.totalorder %s36, 1
        %s586 = scalar_select %p585, %s36, 1
        %s587 = smul.addr %s586, 2
        %s588 = smul.addr %s587, 8
        %s589 = scalar_lea.vmem %s2, %s588
        %p590 = pneg %p109
        %p591 = pneg %p106
        %p592 = scmp.lt.s32.totalorder %s36, 1
        %s593 = scalar_select %p592, %s36, 1
        %s594 = smul.addr %s593, 2
        %s595 = smul.addr %s594, 8
        %s596 = scalar_lea.vmem %s3, %s595
        %p597 = pneg %p135
        %p598 = pneg %p132
        %p599 = pneg %p156
        %p600 = pneg %p153
        %p601 = pneg %p177
        %p602 = pneg %p174
        %p603 = pneg %p198
        %p604 = pneg %p195
        %p605 = pneg %p219
        %p606 = pneg %p216
        %p607 = pneg %p240
        %p608 = pneg %p237
        %p609 = pneg %p261
        %p610 = pneg %p258
        %p611 = pneg %p282
        %p612 = pneg %p279
        %p613 = pneg %p303
        %p614 = pneg %p300
        %p615 = pneg %p324
        %p616 = pneg %p321
        %p617 = pneg %p350
        %p618 = pneg %p347
        %s619 = sand.u32 %s337, 1
        %s620 = scalar_lea.sflag [#allocation4], %s619
        %s621 = sand.u32 %s337, 1
        %s622 = smul.addr %s621, 8
        %s623 = scalar_lea.vmem [#allocation17], %s622
        %p624 = scmp.lt.s32.totalorder %s36, 1
        %s625 = scalar_select %p624, %s36, 1
        %s626 = smul.addr %s625, 2
        %s627 = smul.addr %s626, 8
        %s628 = scalar_lea.vmem %s2, %s627
        %p629 = scmp.lt.s32.totalorder %s36, 1
        %s630 = scalar_select %p629, %s36, 1
        %s631 = smul.addr %s630, 2
        %s632 = smul.addr %s631, 8
        %s633 = scalar_lea.vmem %s3, %s632
        %v634 = vld [vmem:[%s529] sm:$0xff]
        %v635 = vld [vmem:[%s538] sm:$0xff]
        %v636 = vld [vmem:[%s628] sm:$0xff]
        %v637 = vld [vmem:[%s628 + $0x8] sm:$0xff]
        %v638 = vld [vmem:[%s633] sm:$0xff]
        %v639 = vld [vmem:[%s633 + $0x8] sm:$0xff]
        %v640 = vld [vmem:[#allocation16] sm:$0xff]
        %v641 = vld [vmem:[#allocation16 + $0x8] sm:$0x3f]
        %v642 = vadd.f32 %v634, %v635
        %v643 = vld [vmem:[%s4] sm:$0xff]
        %v644 = vld [vmem:[%s4 + $0x8] sm:$0xff]
        %v645 = vld [vmem:[%s4 + $0x10] sm:$0xff]
        %v646 = vld [vmem:[%s4 + $0x18] sm:$0xff]
        %v647 = vlaneseq
        %v648 = vshrl.u32 %v647, 7
        %v649 = vsub.s32 0, %v648
        %v650 = vrot.slane %v640, %v649
        %vm651 = vcmask 261120
        %v653 = vsel %vm651, %v642, 0
        %655 = vmatprep.subr.mxu0 0.0
        %656 = vmatpush1.msra.mxu0 %v643
        %657 = vmatprep.subr.mxu0 0.0
        %658 = vmatpush1.msra.mxu0 %v644
        %659 = vmatprep.subr.mxu0 0.0
        %660 = vmatpush1.msra.mxu0 %v645
        %661 = vmatprep.subr.mxu0 0.0
        %662 = vmatpush1.msra.mxu0 %v646
        %663 = vmatprep.subr.mxu0 0.0
        %664 = vmatpush1.msra.mxu0 0.0
        %665 = vmatprep.subr.mxu0 0.0
        %666 = vmatpush1.msra.mxu0 0.0
        %667 = vmatprep.subr.mxu0 0.0
        %668 = vmatpush1.msra.mxu0 0.0
        %669 = vmatprep.subr.mxu0 0.0
        %670 = vmatpush1.msra.mxu0 0.0
        %671 = vmatprep.subr.mxu0 0.0
        %672 = vmatpush1.msra.mxu0 0.0
        %673 = vmatprep.subr.mxu0 0.0
        %674 = vmatpush1.msra.mxu0 0.0
        %675 = vmatprep.subr.mxu0 0.0
        %676 = vmatpush1.msra.mxu0 0.0
        %677 = vmatprep.subr.mxu0 0.0
        %678 = vmatpush1.msra.mxu0 0.0
        %679 = vmatprep.subr.mxu0 0.0
        %680 = vmatpush1.msra.mxu0 0.0
        %681 = vmatprep.subr.mxu0 0.0
        %682 = vmatpush1.msra.mxu0 0.0
        %683 = vmatprep.subr.mxu0 0.0
        %684 = vmatpush1.msra.mxu0 0.0
        %685 = vmatprep.subr.mxu0 0.0
        %686 = vmatpush1.msra.mxu0 0.0
        %687 = vmatprep.subr.mxu0 0.0
        %688 = vmatpush1.msra.mxu0 0.0
        %689 = vmatprep.subr.mxu0 0.0
        %690 = vmatpush1.msra.mxu0 0.0
        %691 = vmatprep.subr.mxu0 0.0
        %692 = vmatpush1.msra.mxu0 0.0
        %693 = vmatprep.subr.mxu0 0.0
        %694 = vmatpush1.msra.mxu0 0.0
        %695 = vmatprep.subr.mxu0 0.0
        %696 = vmatpush1.msra.mxu0 0.0
        %697 = vmatprep.subr.mxu0 0.0
        %698 = vmatpush1.msra.mxu0 0.0
        %699 = vmatprep.subr.mxu0 0.0
        %700 = vmatpush1.msra.mxu0 0.0
        %701 = vmatprep.subr.mxu0 0.0
        %702 = vmatpush1.msra.mxu0 0.0
        %703 = vmatprep.subr.mxu0 0.0
        %704 = vmatpush1.msra.mxu0 0.0
        %705 = vmatprep.subr.mxu0 0.0
        %706 = vmatpush1.msra.mxu0 0.0
        %707 = vmatprep.subr.mxu0 0.0
        %708 = vmatpush1.msra.mxu0 0.0
        %709 = vmatprep.subr.mxu0 0.0
        %710 = vmatpush1.msra.mxu0 0.0
        %711 = vmatprep.subr.mxu0 0.0
        %712 = vmatpush1.msra.mxu0 0.0
        %713 = vmatprep.subr.mxu0 0.0
        %714 = vmatpush1.msra.mxu0 0.0
        %715 = vmatprep.subr.mxu0 0.0
        %716 = vmatpush1.msra.mxu0 0.0
        %717 = vmatprep.subr.mxu0 0.0
        %718 = vmatpush1.msra.mxu0 0.0
        %719 = vmatprep.mubr.f32.mxu0 0.0
        %720 = vmatmul.mubr.f32.gmra.mrb[0].mxu0 %v653
        %v721 = vpop.f32.mrb[0].mxu0
        %v722 = vadd.f32 %v650, %v721
        %v723 = vpop.f32.mrb[0].mxu0
        %724 = vdwg.mxu0
        %726 = vrot.lane.b32.xlu0 %v722, 120
        %v727 = vpop.permute.xlu0 %726
        %729 = vrot.lane.b32.xlu0 %v722, 112
        %v730 = vpop.permute.xlu0 %729
        %732 = vrot.lane.b32.xlu0 %v722, 104
        %v733 = vpop.permute.xlu0 %732
        %735 = vrot.lane.b32.xlu0 %v722, 96
        %v736 = vpop.permute.xlu0 %735
        %738 = vrot.lane.b32.xlu0 %v722, 88
        %v739 = vpop.permute.xlu0 %738
        %741 = vrot.lane.b32.xlu0 %v722, 80
        %v742 = vpop.permute.xlu0 %741
        %744 = vrot.lane.b32.xlu0 %v722, 72
        %v745 = vpop.permute.xlu0 %744
        %747 = vrot.lane.b32.xlu0 %v722, 64
        %v748 = vpop.permute.xlu0 %747
        %750 = vrot.lane.b32.xlu0 %v722, 56
        %v751 = vpop.permute.xlu0 %750
        %753 = vrot.lane.b32.xlu0 %v722, 48
        %v754 = vpop.permute.xlu0 %753
        %756 = vrot.lane.b32.xlu0 %v722, 40
        %v757 = vpop.permute.xlu0 %756
        %v759 = vcombine.low %v722, %v730
        %v760 = vcombine.high %v722, %v730
        %v762 = vunpack.c.l.s4 1983009808
        %v763 = vunpack.c.0.s8 %v762
        %v764 = vlaneseq
        %v765 = vshrl.u32 %v764, 7
        %v766 = vsub.s32 %v763, %v765
        %v767 = vrot.slane %v759, %v766
        %v769 = vunpack.c.l.s4 1983009808
        %v770 = vunpack.c.0.s8 %v769
        %v771 = vlaneseq
        %v772 = vshrl.u32 %v771, 7
        %v773 = vsub.s32 %v770, %v772
        %v774 = vrot.slane %v760, %v773
        %v775 = vcombine.low %v727, %v733
        %v776 = vcombine.high %v727, %v733
        %v778 = vunpack.c.l.s4 1983009808
        %v779 = vunpack.c.0.s8 %v778
        %v780 = vlaneseq
        %v781 = vshrl.u32 %v780, 7
        %v782 = vsub.s32 %v779, %v781
        %v783 = vrot.slane %v775, %v782
        %v785 = vunpack.c.l.s4 1983009808
        %v786 = vunpack.c.0.s8 %v785
        %v787 = vlaneseq
        %v788 = vshrl.u32 %v787, 7
        %v789 = vsub.s32 %v786, %v788
        %v790 = vrot.slane %v776, %v789
        %v791 = vcombine.low %v736, %v742
        %v792 = vcombine.high %v736, %v742
        %v794 = vunpack.c.l.s4 1983009808
        %v795 = vunpack.c.0.s8 %v794
        %v796 = vlaneseq
        %v797 = vshrl.u32 %v796, 7
        %v798 = vsub.s32 %v795, %v797
        %v799 = vrot.slane %v791, %v798
        %v801 = vunpack.c.l.s4 1983009808
        %v802 = vunpack.c.0.s8 %v801
        %v803 = vlaneseq
        %v804 = vshrl.u32 %v803, 7
        %v805 = vsub.s32 %v802, %v804
        %v806 = vrot.slane %v792, %v805
        %v807 = vcombine.low %v739, %v745
        %v808 = vcombine.high %v739, %v745
        %v810 = vunpack.c.l.s4 1983009808
        %v811 = vunpack.c.0.s8 %v810
        %v812 = vlaneseq
        %v813 = vshrl.u32 %v812, 7
        %v814 = vsub.s32 %v811, %v813
        %v815 = vrot.slane %v807, %v814
        %v817 = vunpack.c.l.s4 1983009808
        %v818 = vunpack.c.0.s8 %v817
        %v819 = vlaneseq
        %v820 = vshrl.u32 %v819, 7
        %v821 = vsub.s32 %v818, %v820
        %v822 = vrot.slane %v808, %v821
        %v823 = vcombine.low %v767, %v783
        %v824 = vcombine.high %v767, %v783
        %v826 = vunpack.c.l.s4 1934713408
        %v827 = vunpack.c.0.s8 %v826
        %v828 = vlaneseq
        %v829 = vshrl.u32 %v828, 7
        %v830 = vsub.s32 %v827, %v829
        %v831 = vrot.slane %v823, %v830
        %v833 = vunpack.c.l.s4 1934713408
        %v834 = vunpack.c.0.s8 %v833
        %v835 = vlaneseq
        %v836 = vshrl.u32 %v835, 7
        %v837 = vsub.s32 %v834, %v836
        %v838 = vrot.slane %v824, %v837
        %v839 = vcombine.low %v774, %v790
        %v840 = vcombine.high %v774, %v790
        %v842 = vunpack.c.l.s4 1934713408
        %v843 = vunpack.c.0.s8 %v842
        %v844 = vlaneseq
        %v845 = vshrl.u32 %v844, 7
        %v846 = vsub.s32 %v843, %v845
        %v847 = vrot.slane %v839, %v846
        %v849 = vunpack.c.l.s4 1934713408
        %v850 = vunpack.c.0.s8 %v849
        %v851 = vlaneseq
        %v852 = vshrl.u32 %v851, 7
        %v853 = vsub.s32 %v850, %v852
        %v854 = vrot.slane %v840, %v853
        %v855 = vcombine.low %v799, %v815
        %v856 = vcombine.high %v799, %v815
        %v858 = vunpack.c.l.s4 1934713408
        %v859 = vunpack.c.0.s8 %v858
        %v860 = vlaneseq
        %v861 = vshrl.u32 %v860, 7
        %v862 = vsub.s32 %v859, %v861
        %v863 = vrot.slane %v855, %v862
        %v865 = vunpack.c.l.s4 1934713408
        %v866 = vunpack.c.0.s8 %v865
        %v867 = vlaneseq
        %v868 = vshrl.u32 %v867, 7
        %v869 = vsub.s32 %v866, %v868
        %v870 = vrot.slane %v856, %v869
        %v871 = vcombine.low %v806, %v822
        %v872 = vcombine.high %v806, %v822
        %v874 = vunpack.c.l.s4 1934713408
        %v875 = vunpack.c.0.s8 %v874
        %v876 = vlaneseq
        %v877 = vshrl.u32 %v876, 7
        %v878 = vsub.s32 %v875, %v877
        %v879 = vrot.slane %v871, %v878
        %v881 = vunpack.c.l.s4 1934713408
        %v882 = vunpack.c.0.s8 %v881
        %v883 = vlaneseq
        %v884 = vshrl.u32 %v883, 7
        %v885 = vsub.s32 %v882, %v884
        %v886 = vrot.slane %v872, %v885
        %v887 = vcombine.low %v831, %v863
        %v888 = vcombine.high %v831, %v863
        %v889 = vcombine.low %v838, %v870
        %v890 = vcombine.high %v838, %v870
        %v891 = vcombine.low %v847, %v879
        %v892 = vcombine.high %v847, %v879
        %v893 = vcombine.low %v854, %v886
        %v894 = vcombine.high %v854, %v886
        %v895 = vcombine.low %v748, %v754
        %v896 = vcombine.high %v748, %v754
        %v898 = vunpack.c.l.s4 1983009808
        %v899 = vunpack.c.0.s8 %v898
        %v900 = vlaneseq
        %v901 = vshrl.u32 %v900, 7
        %v902 = vsub.s32 %v899, %v901
        %v903 = vrot.slane %v895, %v902
        %v905 = vunpack.c.l.s4 1983009808
        %v906 = vunpack.c.0.s8 %v905
        %v907 = vlaneseq
        %v908 = vshrl.u32 %v907, 7
        %v909 = vsub.s32 %v906, %v908
        %v910 = vrot.slane %v896, %v909
        %v911 = vcombine.low %v751, %v757
        %v912 = vcombine.high %v751, %v757
        %v914 = vunpack.c.l.s4 1983009808
        %v915 = vunpack.c.0.s8 %v914
        %v916 = vlaneseq
        %v917 = vshrl.u32 %v916, 7
        %v918 = vsub.s32 %v915, %v917
        %v919 = vrot.slane %v911, %v918
        %v921 = vunpack.c.l.s4 1983009808
        %v922 = vunpack.c.0.s8 %v921
        %v923 = vlaneseq
        %v924 = vshrl.u32 %v923, 7
        %v925 = vsub.s32 %v922, %v924
        %v926 = vrot.slane %v912, %v925
        %v927 = vcombine.low %v903, %v919
        %v928 = vcombine.high %v903, %v919
        %v930 = vunpack.c.l.s4 1934713408
        %v931 = vunpack.c.0.s8 %v930
        %v932 = vlaneseq
        %v933 = vshrl.u32 %v932, 7
        %v934 = vsub.s32 %v931, %v933
        %v935 = vrot.slane %v927, %v934
        %v937 = vunpack.c.l.s4 1934713408
        %v938 = vunpack.c.0.s8 %v937
        %v939 = vlaneseq
        %v940 = vshrl.u32 %v939, 7
        %v941 = vsub.s32 %v938, %v940
        %v942 = vrot.slane %v928, %v941
        %v943 = vcombine.low %v910, %v926
        %v944 = vcombine.high %v910, %v926
        %v946 = vunpack.c.l.s4 1934713408
        %v947 = vunpack.c.0.s8 %v946
        %v948 = vlaneseq
        %v949 = vshrl.u32 %v948, 7
        %v950 = vsub.s32 %v947, %v949
        %v951 = vrot.slane %v943, %v950
        %v953 = vunpack.c.l.s4 1934713408
        %v954 = vunpack.c.0.s8 %v953
        %v955 = vlaneseq
        %v956 = vshrl.u32 %v955, 7
        %v957 = vsub.s32 %v954, %v956
        %v958 = vrot.slane %v944, %v957
        %v959 = vcombine.high %v935, 0.0
        %v960 = vcombine.high %v942, 0.0
        %v961 = vcombine.high %v951, 0.0
        %v962 = vcombine.high %v958, 0.0
        %v963 = vcombine.low %v887, %v889
        %v964 = vcombine.high %v887, %v889
        %v966 = vunpack.c.l.s4 1983009808
        %v967 = vunpack.c.0.s8 %v966
        %v968 = vlaneseq
        %v969 = vshrl.u32 %v968, 7
        %v970 = vsub.s32 %v967, %v969
        %v971 = vrot.slane %v963, %v970
        %v973 = vunpack.c.l.s4 1983009808
        %v974 = vunpack.c.0.s8 %v973
        %v975 = vlaneseq
        %v976 = vshrl.u32 %v975, 7
        %v977 = vsub.s32 %v974, %v976
        %v978 = vrot.slane %v964, %v977
        %v979 = vcombine.low %v888, %v890
        %v980 = vcombine.high %v888, %v890
        %v982 = vunpack.c.l.s4 1983009808
        %v983 = vunpack.c.0.s8 %v982
        %v984 = vlaneseq
        %v985 = vshrl.u32 %v984, 7
        %v986 = vsub.s32 %v983, %v985
        %v987 = vrot.slane %v979, %v986
        %v989 = vunpack.c.l.s4 1983009808
        %v990 = vunpack.c.0.s8 %v989
        %v991 = vlaneseq
        %v992 = vshrl.u32 %v991, 7
        %v993 = vsub.s32 %v990, %v992
        %v994 = vrot.slane %v980, %v993
        %v995 = vcombine.low %v891, %v893
        %v996 = vcombine.high %v891, %v893
        %v998 = vunpack.c.l.s4 1983009808
        %v999 = vunpack.c.0.s8 %v998
        %v1000 = vlaneseq
        %v1001 = vshrl.u32 %v1000, 7
        %v1002 = vsub.s32 %v999, %v1001
        %v1003 = vrot.slane %v995, %v1002
        %v1005 = vunpack.c.l.s4 1983009808
        %v1006 = vunpack.c.0.s8 %v1005
        %v1007 = vlaneseq
        %v1008 = vshrl.u32 %v1007, 7
        %v1009 = vsub.s32 %v1006, %v1008
        %v1010 = vrot.slane %v996, %v1009
        %v1011 = vcombine.low %v892, %v894
        %v1012 = vcombine.high %v892, %v894
        %v1014 = vunpack.c.l.s4 1983009808
        %v1015 = vunpack.c.0.s8 %v1014
        %v1016 = vlaneseq
        %v1017 = vshrl.u32 %v1016, 7
        %v1018 = vsub.s32 %v1015, %v1017
        %v1019 = vrot.slane %v1011, %v1018
        %v1021 = vunpack.c.l.s4 1983009808
        %v1022 = vunpack.c.0.s8 %v1021
        %v1023 = vlaneseq
        %v1024 = vshrl.u32 %v1023, 7
        %v1025 = vsub.s32 %v1022, %v1024
        %v1026 = vrot.slane %v1012, %v1025
        %v1027 = vcombine.low %v971, %v987
        %v1028 = vcombine.high %v971, %v987
        %v1030 = vunpack.c.l.s4 1934713408
        %v1031 = vunpack.c.0.s8 %v1030
        %v1032 = vlaneseq
        %v1033 = vshrl.u32 %v1032, 7
        %v1034 = vsub.s32 %v1031, %v1033
        %v1035 = vrot.slane %v1027, %v1034
        %v1037 = vunpack.c.l.s4 1934713408
        %v1038 = vunpack.c.0.s8 %v1037
        %v1039 = vlaneseq
        %v1040 = vshrl.u32 %v1039, 7
        %v1041 = vsub.s32 %v1038, %v1040
        %v1042 = vrot.slane %v1028, %v1041
        %v1043 = vcombine.low %v978, %v994
        %v1044 = vcombine.high %v978, %v994
        %v1046 = vunpack.c.l.s4 1934713408
        %v1047 = vunpack.c.0.s8 %v1046
        %v1048 = vlaneseq
        %v1049 = vshrl.u32 %v1048, 7
        %v1050 = vsub.s32 %v1047, %v1049
        %v1051 = vrot.slane %v1043, %v1050
        %v1053 = vunpack.c.l.s4 1934713408
        %v1054 = vunpack.c.0.s8 %v1053
        %v1055 = vlaneseq
        %v1056 = vshrl.u32 %v1055, 7
        %v1057 = vsub.s32 %v1054, %v1056
        %v1058 = vrot.slane %v1044, %v1057
        %v1059 = vcombine.low %v1003, %v1019
        %v1060 = vcombine.high %v1003, %v1019
        %v1062 = vunpack.c.l.s4 1934713408
        %v1063 = vunpack.c.0.s8 %v1062
        %v1064 = vlaneseq
        %v1065 = vshrl.u32 %v1064, 7
        %v1066 = vsub.s32 %v1063, %v1065
        %v1067 = vrot.slane %v1059, %v1066
        %v1069 = vunpack.c.l.s4 1934713408
        %v1070 = vunpack.c.0.s8 %v1069
        %v1071 = vlaneseq
        %v1072 = vshrl.u32 %v1071, 7
        %v1073 = vsub.s32 %v1070, %v1072
        %v1074 = vrot.slane %v1060, %v1073
        %v1075 = vcombine.low %v1010, %v1026
        %v1076 = vcombine.high %v1010, %v1026
        %v1078 = vunpack.c.l.s4 1934713408
        %v1079 = vunpack.c.0.s8 %v1078
        %v1080 = vlaneseq
        %v1081 = vshrl.u32 %v1080, 7
        %v1082 = vsub.s32 %v1079, %v1081
        %v1083 = vrot.slane %v1075, %v1082
        %v1085 = vunpack.c.l.s4 1934713408
        %v1086 = vunpack.c.0.s8 %v1085
        %v1087 = vlaneseq
        %v1088 = vshrl.u32 %v1087, 7
        %v1089 = vsub.s32 %v1086, %v1088
        %v1090 = vrot.slane %v1076, %v1089
        %v1091 = vcombine.low %v1035, %v1067
        %v1092 = vcombine.high %v1035, %v1067
        %v1093 = vcombine.low %v1042, %v1074
        %v1094 = vcombine.high %v1042, %v1074
        %v1095 = vcombine.low %v1051, %v1083
        %v1096 = vcombine.high %v1051, %v1083
        %v1097 = vcombine.low %v1058, %v1090
        %v1098 = vcombine.high %v1058, %v1090
        %v1099 = vcombine.low %v935, %v942
        %v1101 = vunpack.c.l.s4 1983009808
        %v1102 = vunpack.c.0.s8 %v1101
        %v1103 = vlaneseq
        %v1104 = vshrl.u32 %v1103, 7
        %v1105 = vsub.s32 %v1102, %v1104
        %v1106 = vrot.slane %v1099, %v1105
        %v1107 = vcombine.low %v959, %v960
        %v1109 = vunpack.c.l.s4 1983009808
        %v1110 = vunpack.c.0.s8 %v1109
        %v1111 = vlaneseq
        %v1112 = vshrl.u32 %v1111, 7
        %v1113 = vsub.s32 %v1110, %v1112
        %v1114 = vrot.slane %v1107, %v1113
        %v1115 = vcombine.low %v951, %v958
        %v1117 = vunpack.c.l.s4 1983009808
        %v1118 = vunpack.c.0.s8 %v1117
        %v1119 = vlaneseq
        %v1120 = vshrl.u32 %v1119, 7
        %v1121 = vsub.s32 %v1118, %v1120
        %v1122 = vrot.slane %v1115, %v1121
        %v1123 = vcombine.low %v961, %v962
        %v1125 = vunpack.c.l.s4 1983009808
        %v1126 = vunpack.c.0.s8 %v1125
        %v1127 = vlaneseq
        %v1128 = vshrl.u32 %v1127, 7
        %v1129 = vsub.s32 %v1126, %v1128
        %v1130 = vrot.slane %v1123, %v1129
        %v1131 = vcombine.low %v1106, %v1114
        %v1132 = vcombine.high %v1106, %v1114
        %v1134 = vunpack.c.l.s4 1934713408
        %v1135 = vunpack.c.0.s8 %v1134
        %v1136 = vlaneseq
        %v1137 = vshrl.u32 %v1136, 7
        %v1138 = vsub.s32 %v1135, %v1137
        %v1139 = vrot.slane %v1131, %v1138
        %v1141 = vunpack.c.l.s4 1934713408
        %v1142 = vunpack.c.0.s8 %v1141
        %v1143 = vlaneseq
        %v1144 = vshrl.u32 %v1143, 7
        %v1145 = vsub.s32 %v1142, %v1144
        %v1146 = vrot.slane %v1132, %v1145
        %v1147 = vcombine.low %v1122, %v1130
        %v1148 = vcombine.high %v1122, %v1130
        %v1150 = vunpack.c.l.s4 1934713408
        %v1151 = vunpack.c.0.s8 %v1150
        %v1152 = vlaneseq
        %v1153 = vshrl.u32 %v1152, 7
        %v1154 = vsub.s32 %v1151, %v1153
        %v1155 = vrot.slane %v1147, %v1154
        %v1157 = vunpack.c.l.s4 1934713408
        %v1158 = vunpack.c.0.s8 %v1157
        %v1159 = vlaneseq
        %v1160 = vshrl.u32 %v1159, 7
        %v1161 = vsub.s32 %v1158, %v1160
        %v1162 = vrot.slane %v1148, %v1161
        %v1163 = vcombine.low %v1139, %v1155
        %v1164 = vcombine.high %v1139, %v1155
        %v1165 = vcombine.low %v1146, %v1162
        %v1166 = vcombine.high %v1146, %v1162
        %vm1167 = vcmask 64512
        %v1169 = vsel %vm1167, %v1091, 0
        %v1172 = vsel %vm1167, %v1095, 0
        %1174 = vmatprep.subr.mxu0 0.0
        %1175 = vmatpush1.xpose.msra.mxu0 %v1172
        %1176 = vmatprep.subr.mxu0 0.0
        %1177 = vmatpush1.xpose.msra.mxu0 0.0
        %1178 = vmatprep.subr.mxu0 0.0
        %1179 = vmatpush1.xpose.msra.mxu0 0.0
        %1180 = vmatprep.subr.mxu0 0.0
        %1181 = vmatpush1.xpose.msra.mxu0 0.0
        %1182 = vmatprep.subr.mxu0 0.0
        %1183 = vmatpush1.xpose.msra.mxu0 0.0
        %1184 = vmatprep.subr.mxu0 0.0
        %1185 = vmatpush1.xpose.msra.mxu0 0.0
        %1186 = vmatprep.subr.mxu0 0.0
        %1187 = vmatpush1.xpose.msra.mxu0 0.0
        %1188 = vmatprep.subr.mxu0 0.0
        %1189 = vmatpush1.xpose.msra.mxu0 0.0
        %1190 = vmatprep.subr.mxu0 0.0
        %1191 = vmatpush1.xpose.msra.mxu0 0.0
        %1192 = vmatprep.subr.mxu0 0.0
        %1193 = vmatpush1.xpose.msra.mxu0 0.0
        %1194 = vmatprep.subr.mxu0 0.0
        %1195 = vmatpush1.xpose.msra.mxu0 0.0
        %1196 = vmatprep.subr.mxu0 0.0
        %1197 = vmatpush1.xpose.msra.mxu0 0.0
        %1198 = vmatprep.subr.mxu0 0.0
        %1199 = vmatpush1.xpose.msra.mxu0 0.0
        %1200 = vmatprep.subr.mxu0 0.0
        %1201 = vmatpush1.xpose.msra.mxu0 0.0
        %1202 = vmatprep.subr.mxu0 0.0
        %1203 = vmatpush1.xpose.msra.mxu0 0.0
        %1204 = vmatprep.subr.mxu0 0.0
        %1205 = vmatpush1.xpose.msra.mxu0 0.0
        %1206 = vmatprep.subr.mxu0 0.0
        %1207 = vmatpush1.xpose.msra.mxu0 0.0
        %1208 = vmatprep.subr.mxu0 0.0
        %1209 = vmatpush1.xpose.msra.mxu0 0.0
        %1210 = vmatprep.subr.mxu0 0.0
        %1211 = vmatpush1.xpose.msra.mxu0 0.0
        %1212 = vmatprep.subr.mxu0 0.0
        %1213 = vmatpush1.xpose.msra.mxu0 0.0
        %1214 = vmatprep.subr.mxu0 0.0
        %1215 = vmatpush1.xpose.msra.mxu0 0.0
        %1216 = vmatprep.subr.mxu0 0.0
        %1217 = vmatpush1.xpose.msra.mxu0 0.0
        %1218 = vmatprep.subr.mxu0 0.0
        %1219 = vmatpush1.xpose.msra.mxu0 0.0
        %1220 = vmatprep.subr.mxu0 0.0
        %1221 = vmatpush1.xpose.msra.mxu0 0.0
        %1222 = vmatprep.subr.mxu0 0.0
        %1223 = vmatpush1.xpose.msra.mxu0 0.0
        %1224 = vmatprep.subr.mxu0 0.0
        %1225 = vmatpush1.xpose.msra.mxu0 0.0
        %1226 = vmatprep.subr.mxu0 0.0
        %1227 = vmatpush1.xpose.msra.mxu0 0.0
        %1228 = vmatprep.subr.mxu0 0.0
        %1229 = vmatpush1.xpose.msra.mxu0 0.0
        %1230 = vmatprep.subr.mxu0 0.0
        %1231 = vmatpush1.xpose.msra.mxu0 0.0
        %1232 = vmatprep.subr.mxu0 0.0
        %1233 = vmatpush1.xpose.msra.mxu0 0.0
        %1234 = vmatprep.subr.mxu0 0.0
        %1235 = vmatpush1.xpose.msra.mxu0 0.0
        %1236 = vmatprep.subr.mxu0 0.0
        %1237 = vmatpush1.xpose.msra.mxu0 0.0
        %1238 = vmatprep.mubr.f32.mxu0 0.0
        %1239 = vmatmul.mubr.f32.gmra.mrb[0].mxu0 %v1169
        %v1240 = vpop.f32.mrb[0].mxu0
        %v1241 = vadd.f32 0.0, %v1240
        %v1242 = vpop.f32.mrb[0].mxu0
        %1243 = vdwg.mxu0
        %v1245 = vsel %vm1167, %v1092, 0
        %v1248 = vsel %vm1167, %v1096, 0
        %1250 = vmatprep.subr.mxu0 0.0
        %1251 = vmatpush1.xpose.msra.mxu0 %v1248
        %1252 = vmatprep.subr.mxu0 0.0
        %1253 = vmatpush1.xpose.msra.mxu0 0.0
        %1254 = vmatprep.subr.mxu0 0.0
        %1255 = vmatpush1.xpose.msra.mxu0 0.0
        %1256 = vmatprep.subr.mxu0 0.0
        %1257 = vmatpush1.xpose.msra.mxu0 0.0
        %1258 = vmatprep.subr.mxu0 0.0
        %1259 = vmatpush1.xpose.msra.mxu0 0.0
        %1260 = vmatprep.subr.mxu0 0.0
        %1261 = vmatpush1.xpose.msra.mxu0 0.0
        %1262 = vmatprep.subr.mxu0 0.0
        %1263 = vmatpush1.xpose.msra.mxu0 0.0
        %1264 = vmatprep.subr.mxu0 0.0
        %1265 = vmatpush1.xpose.msra.mxu0 0.0
        %1266 = vmatprep.subr.mxu0 0.0
        %1267 = vmatpush1.xpose.msra.mxu0 0.0
        %1268 = vmatprep.subr.mxu0 0.0
        %1269 = vmatpush1.xpose.msra.mxu0 0.0
        %1270 = vmatprep.subr.mxu0 0.0
        %1271 = vmatpush1.xpose.msra.mxu0 0.0
        %1272 = vmatprep.subr.mxu0 0.0
        %1273 = vmatpush1.xpose.msra.mxu0 0.0
        %1274 = vmatprep.subr.mxu0 0.0
        %1275 = vmatpush1.xpose.msra.mxu0 0.0
        %1276 = vmatprep.subr.mxu0 0.0
        %1277 = vmatpush1.xpose.msra.mxu0 0.0
        %1278 = vmatprep.subr.mxu0 0.0
        %1279 = vmatpush1.xpose.msra.mxu0 0.0
        %1280 = vmatprep.subr.mxu0 0.0
        %1281 = vmatpush1.xpose.msra.mxu0 0.0
        %1282 = vmatprep.subr.mxu0 0.0
        %1283 = vmatpush1.xpose.msra.mxu0 0.0
        %1284 = vmatprep.subr.mxu0 0.0
        %1285 = vmatpush1.xpose.msra.mxu0 0.0
        %1286 = vmatprep.subr.mxu0 0.0
        %1287 = vmatpush1.xpose.msra.mxu0 0.0
        %1288 = vmatprep.subr.mxu0 0.0
        %1289 = vmatpush1.xpose.msra.mxu0 0.0
        %1290 = vmatprep.subr.mxu0 0.0
        %1291 = vmatpush1.xpose.msra.mxu0 0.0
        %1292 = vmatprep.subr.mxu0 0.0
        %1293 = vmatpush1.xpose.msra.mxu0 0.0
        %1294 = vmatprep.subr.mxu0 0.0
        %1295 = vmatpush1.xpose.msra.mxu0 0.0
        %1296 = vmatprep.subr.mxu0 0.0
        %1297 = vmatpush1.xpose.msra.mxu0 0.0
        %1298 = vmatprep.subr.mxu0 0.0
        %1299 = vmatpush1.xpose.msra.mxu0 0.0
        %1300 = vmatprep.subr.mxu0 0.0
        %1301 = vmatpush1.xpose.msra.mxu0 0.0
        %1302 = vmatprep.subr.mxu0 0.0
        %1303 = vmatpush1.xpose.msra.mxu0 0.0
        %1304 = vmatprep.subr.mxu0 0.0
        %1305 = vmatpush1.xpose.msra.mxu0 0.0
        %1306 = vmatprep.subr.mxu0 0.0
        %1307 = vmatpush1.xpose.msra.mxu0 0.0
        %1308 = vmatprep.subr.mxu0 0.0
        %1309 = vmatpush1.xpose.msra.mxu0 0.0
        %1310 = vmatprep.subr.mxu0 0.0
        %1311 = vmatpush1.xpose.msra.mxu0 0.0
        %1312 = vmatprep.subr.mxu0 0.0
        %1313 = vmatpush1.xpose.msra.mxu0 0.0
        %1314 = vmatprep.mubr.f32.mxu0 0.0
        %1315 = vmatmul.mubr.f32.gmra.mrb[0].mxu0 %v1245
        %v1316 = vpop.f32.mrb[0].mxu0
        %v1317 = vadd.f32 0.0, %v1316
        %v1318 = vpop.f32.mrb[0].mxu0
        %1319 = vdwg.mxu0
        %v1321 = vsel %vm1167, %v1093, 0
        %v1324 = vsel %vm1167, %v1097, 0
        %1326 = vmatprep.subr.mxu0 0.0
        %1327 = vmatpush1.xpose.msra.mxu0 %v1324
        %1328 = vmatprep.subr.mxu0 0.0
        %1329 = vmatpush1.xpose.msra.mxu0 0.0
        %1330 = vmatprep.subr.mxu0 0.0
        %1331 = vmatpush1.xpose.msra.mxu0 0.0
        %1332 = vmatprep.subr.mxu0 0.0
        %1333 = vmatpush1.xpose.msra.mxu0 0.0
        %1334 = vmatprep.subr.mxu0 0.0
        %1335 = vmatpush1.xpose.msra.mxu0 0.0
        %1336 = vmatprep.subr.mxu0 0.0
        %1337 = vmatpush1.xpose.msra.mxu0 0.0
        %1338 = vmatprep.subr.mxu0 0.0
        %1339 = vmatpush1.xpose.msra.mxu0 0.0
        %1340 = vmatprep.subr.mxu0 0.0
        %1341 = vmatpush1.xpose.msra.mxu0 0.0
        %1342 = vmatprep.subr.mxu0 0.0
        %1343 = vmatpush1.xpose.msra.mxu0 0.0
        %1344 = vmatprep.subr.mxu0 0.0
        %1345 = vmatpush1.xpose.msra.mxu0 0.0
        %1346 = vmatprep.subr.mxu0 0.0
        %1347 = vmatpush1.xpose.msra.mxu0 0.0
        %1348 = vmatprep.subr.mxu0 0.0
        %1349 = vmatpush1.xpose.msra.mxu0 0.0
        %1350 = vmatprep.subr.mxu0 0.0
        %1351 = vmatpush1.xpose.msra.mxu0 0.0
        %1352 = vmatprep.subr.mxu0 0.0
        %1353 = vmatpush1.xpose.msra.mxu0 0.0
        %1354 = vmatprep.subr.mxu0 0.0
        %1355 = vmatpush1.xpose.msra.mxu0 0.0
        %1356 = vmatprep.subr.mxu0 0.0
        %1357 = vmatpush1.xpose.msra.mxu0 0.0
        %1358 = vmatprep.subr.mxu0 0.0
        %1359 = vmatpush1.xpose.msra.mxu0 0.0
        %1360 = vmatprep.subr.mxu0 0.0
        %1361 = vmatpush1.xpose.msra.mxu0 0.0
        %1362 = vmatprep.subr.mxu0 0.0
        %1363 = vmatpush1.xpose.msra.mxu0 0.0
        %1364 = vmatprep.subr.mxu0 0.0
        %1365 = vmatpush1.xpose.msra.mxu0 0.0
        %1366 = vmatprep.subr.mxu0 0.0
        %1367 = vmatpush1.xpose.msra.mxu0 0.0
        %1368 = vmatprep.subr.mxu0 0.0
        %1369 = vmatpush1.xpose.msra.mxu0 0.0
        %1370 = vmatprep.subr.mxu0 0.0
        %1371 = vmatpush1.xpose.msra.mxu0 0.0
        %1372 = vmatprep.subr.mxu0 0.0
        %1373 = vmatpush1.xpose.msra.mxu0 0.0
        %1374 = vmatprep.subr.mxu0 0.0
        %1375 = vmatpush1.xpose.msra.mxu0 0.0
        %1376 = vmatprep.subr.mxu0 0.0
        %1377 = vmatpush1.xpose.msra.mxu0 0.0
        %1378 = vmatprep.subr.mxu0 0.0
        %1379 = vmatpush1.xpose.msra.mxu0 0.0
        %1380 = vmatprep.subr.mxu0 0.0
        %1381 = vmatpush1.xpose.msra.mxu0 0.0
        %1382 = vmatprep.subr.mxu0 0.0
        %1383 = vmatpush1.xpose.msra.mxu0 0.0
        %1384 = vmatprep.subr.mxu0 0.0
        %1385 = vmatpush1.xpose.msra.mxu0 0.0
        %1386 = vmatprep.subr.mxu0 0.0
        %1387 = vmatpush1.xpose.msra.mxu0 0.0
        %1388 = vmatprep.subr.mxu0 0.0
        %1389 = vmatpush1.xpose.msra.mxu0 0.0
        %1390 = vmatprep.mubr.f32.mxu0 0.0
        %1391 = vmatmul.mubr.f32.gmra.mrb[0].mxu0 %v1321
        %v1392 = vpop.f32.mrb[0].mxu0
        %v1393 = vadd.f32 0.0, %v1392
        %v1394 = vpop.f32.mrb[0].mxu0
        %1395 = vdwg.mxu0
        %v1397 = vsel %vm1167, %v1094, 0
        %v1400 = vsel %vm1167, %v1098, 0
        %1402 = vmatprep.subr.mxu0 0.0
        %1403 = vmatpush1.xpose.msra.mxu0 %v1400
        %1404 = vmatprep.subr.mxu0 0.0
        %1405 = vmatpush1.xpose.msra.mxu0 0.0
        %1406 = vmatprep.subr.mxu0 0.0
        %1407 = vmatpush1.xpose.msra.mxu0 0.0
        %1408 = vmatprep.subr.mxu0 0.0
        %1409 = vmatpush1.xpose.msra.mxu0 0.0
        %1410 = vmatprep.subr.mxu0 0.0
        %1411 = vmatpush1.xpose.msra.mxu0 0.0
        %1412 = vmatprep.subr.mxu0 0.0
        %1413 = vmatpush1.xpose.msra.mxu0 0.0
        %1414 = vmatprep.subr.mxu0 0.0
        %1415 = vmatpush1.xpose.msra.mxu0 0.0
        %1416 = vmatprep.subr.mxu0 0.0
        %1417 = vmatpush1.xpose.msra.mxu0 0.0
        %1418 = vmatprep.subr.mxu0 0.0
        %1419 = vmatpush1.xpose.msra.mxu0 0.0
        %1420 = vmatprep.subr.mxu0 0.0
        %1421 = vmatpush1.xpose.msra.mxu0 0.0
        %1422 = vmatprep.subr.mxu0 0.0
        %1423 = vmatpush1.xpose.msra.mxu0 0.0
        %1424 = vmatprep.subr.mxu0 0.0
        %1425 = vmatpush1.xpose.msra.mxu0 0.0
        %1426 = vmatprep.subr.mxu0 0.0
        %1427 = vmatpush1.xpose.msra.mxu0 0.0
        %1428 = vmatprep.subr.mxu0 0.0
        %1429 = vmatpush1.xpose.msra.mxu0 0.0
        %1430 = vmatprep.subr.mxu0 0.0
        %1431 = vmatpush1.xpose.msra.mxu0 0.0
        %1432 = vmatprep.subr.mxu0 0.0
        %1433 = vmatpush1.xpose.msra.mxu0 0.0
        %1434 = vmatprep.subr.mxu0 0.0
        %1435 = vmatpush1.xpose.msra.mxu0 0.0
        %1436 = vmatprep.subr.mxu0 0.0
        %1437 = vmatpush1.xpose.msra.mxu0 0.0
        %1438 = vmatprep.subr.mxu0 0.0
        %1439 = vmatpush1.xpose.msra.mxu0 0.0
        %1440 = vmatprep.subr.mxu0 0.0
        %1441 = vmatpush1.xpose.msra.mxu0 0.0
        %1442 = vmatprep.subr.mxu0 0.0
        %1443 = vmatpush1.xpose.msra.mxu0 0.0
        %1444 = vmatprep.subr.mxu0 0.0
        %1445 = vmatpush1.xpose.msra.mxu0 0.0
        %1446 = vmatprep.subr.mxu0 0.0
        %1447 = vmatpush1.xpose.msra.mxu0 0.0
        %1448 = vmatprep.subr.mxu0 0.0
        %1449 = vmatpush1.xpose.msra.mxu0 0.0
        %1450 = vmatprep.subr.mxu0 0.0
        %1451 = vmatpush1.xpose.msra.mxu0 0.0
        %1452 = vmatprep.subr.mxu0 0.0
        %1453 = vmatpush1.xpose.msra.mxu0 0.0
        %1454 = vmatprep.subr.mxu0 0.0
        %1455 = vmatpush1.xpose.msra.mxu0 0.0
        %1456 = vmatprep.subr.mxu0 0.0
        %1457 = vmatpush1.xpose.msra.mxu0 0.0
        %1458 = vmatprep.subr.mxu0 0.0
        %1459 = vmatpush1.xpose.msra.mxu0 0.0
        %1460 = vmatprep.subr.mxu0 0.0
        %1461 = vmatpush1.xpose.msra.mxu0 0.0
        %1462 = vmatprep.subr.mxu0 0.0
        %1463 = vmatpush1.xpose.msra.mxu0 0.0
        %1464 = vmatprep.subr.mxu0 0.0
        %1465 = vmatpush1.xpose.msra.mxu0 0.0
        %1466 = vmatprep.mubr.f32.mxu0 0.0
        %1467 = vmatmul.mubr.f32.gmra.mrb[0].mxu0 %v1397
        %v1468 = vpop.f32.mrb[0].mxu0
        %v1469 = vadd.f32 0.0, %v1468
        %v1470 = vpop.f32.mrb[0].mxu0
        %1471 = vdwg.mxu0
        %v1472 = vsel %vm1167, %v1241, -inf
        %1473 = vmax.xlane.f32.xlu0 %v1472
        %v1474 = vpop.xlane.xlu0 %1473
        %v1475 = vsel %vm1167, %v1317, -inf
        %1476 = vmax.xlane.f32.xlu0 %v1475
        %v1477 = vpop.xlane.xlu0 %1476
        %v1478 = vsel %vm1167, %v1393, -inf
        %1479 = vmax.xlane.f32.xlu0 %v1478
        %v1480 = vpop.xlane.xlu0 %1479
        %v1481 = vsel %vm1167, %v1469, -inf
        %1482 = vmax.xlane.f32.xlu0 %v1481
        %v1483 = vpop.xlane.xlu0 %1482
        %v1484 = vsub.f32 %v1241, %v1474
        %v1485 = vsub.f32 %v1317, %v1477
        %v1486 = vsub.f32 %v1393, %v1480
        %v1487 = vsub.f32 %v1469, %v1483
        %v1488 = vmul.f32 %v1484, 1.442695
        %v1489 = vpow.pop %v1488
        %v1490 = vmul.f32 %v1485, 1.442695
        %v1491 = vpow.pop %v1490
        %v1492 = vmul.f32 %v1486, 1.442695
        %v1493 = vpow.pop %v1492
        %v1494 = vmul.f32 %v1487, 1.442695
        %v1495 = vpow.pop %v1494
        %v1496 = vsel %vm1167, %v1489, 0.0
        %1497 = vadd.xlane.f32.xlu0 %v1496
        %v1498 = vpop.xlane.xlu0 %1497
        %v1499 = vsel %vm1167, %v1491, 0.0
        %1500 = vadd.xlane.f32.xlu0 %v1499
        %v1501 = vpop.xlane.xlu0 %1500
        %v1502 = vsel %vm1167, %v1493, 0.0
        %1503 = vadd.xlane.f32.xlu0 %v1502
        %v1504 = vpop.xlane.xlu0 %1503
        %v1505 = vsel %vm1167, %v1495, 0.0
        %1506 = vadd.xlane.f32.xlu0 %v1505
        %v1507 = vpop.xlane.xlu0 %1506
        %v1508 = vrcp.pop %v1498
        %v1509 = vrcp.pop %v1501
        %v1510 = vrcp.pop %v1504
        %v1511 = vrcp.pop %v1507
        %v1512 = vmul.f32 %v1489, %v1508
        %v1513 = vmul.f32 %v1491, %v1509
        %v1514 = vmul.f32 %v1493, %v1510
        %v1515 = vmul.f32 %v1495, %v1511
        %v1517 = vsel %vm1167, %v1512, 0
        %1519 = vmatprep.subr.mxu0 0.0
        %1520 = vmatpush1.msra.mxu0 %v1163
        %1521 = vmatprep.subr.mxu0 0.0
        %1522 = vmatpush1.msra.mxu0 0.0
        %1523 = vmatprep.subr.mxu0 0.0
        %1524 = vmatpush1.msra.mxu0 0.0
        %1525 = vmatprep.subr.mxu0 0.0
        %1526 = vmatpush1.msra.mxu0 0.0
        %1527 = vmatprep.subr.mxu0 0.0
        %1528 = vmatpush1.msra.mxu0 0.0
        %1529 = vmatprep.subr.mxu0 0.0
        %1530 = vmatpush1.msra.mxu0 0.0
        %1531 = vmatprep.subr.mxu0 0.0
        %1532 = vmatpush1.msra.mxu0 0.0
        %1533 = vmatprep.subr.mxu0 0.0
        %1534 = vmatpush1.msra.mxu0 0.0
        %1535 = vmatprep.subr.mxu0 0.0
        %1536 = vmatpush1.msra.mxu0 0.0
        %1537 = vmatprep.subr.mxu0 0.0
        %1538 = vmatpush1.msra.mxu0 0.0
        %1539 = vmatprep.subr.mxu0 0.0
        %1540 = vmatpush1.msra.mxu0 0.0
        %1541 = vmatprep.subr.mxu0 0.0
        %1542 = vmatpush1.msra.mxu0 0.0
        %1543 = vmatprep.subr.mxu0 0.0
        %1544 = vmatpush1.msra.mxu0 0.0
        %1545 = vmatprep.subr.mxu0 0.0
        %1546 = vmatpush1.msra.mxu0 0.0
        %1547 = vmatprep.subr.mxu0 0.0
        %1548 = vmatpush1.msra.mxu0 0.0
        %1549 = vmatprep.subr.mxu0 0.0
        %1550 = vmatpush1.msra.mxu0 0.0
        %1551 = vmatprep.subr.mxu0 0.0
        %1552 = vmatpush1.msra.mxu0 0.0
        %1553 = vmatprep.subr.mxu0 0.0
        %1554 = vmatpush1.msra.mxu0 0.0
        %1555 = vmatprep.subr.mxu0 0.0
        %1556 = vmatpush1.msra.mxu0 0.0
        %1557 = vmatprep.subr.mxu0 0.0
        %1558 = vmatpush1.msra.mxu0 0.0
        %1559 = vmatprep.subr.mxu0 0.0
        %1560 = vmatpush1.msra.mxu0 0.0
        %1561 = vmatprep.subr.mxu0 0.0
        %1562 = vmatpush1.msra.mxu0 0.0
        %1563 = vmatprep.subr.mxu0 0.0
        %1564 = vmatpush1.msra.mxu0 0.0
        %1565 = vmatprep.subr.mxu0 0.0
        %1566 = vmatpush1.msra.mxu0 0.0
        %1567 = vmatprep.subr.mxu0 0.0
        %1568 = vmatpush1.msra.mxu0 0.0
        %1569 = vmatprep.subr.mxu0 0.0
        %1570 = vmatpush1.msra.mxu0 0.0
        %1571 = vmatprep.subr.mxu0 0.0
        %1572 = vmatpush1.msra.mxu0 0.0
        %1573 = vmatprep.subr.mxu0 0.0
        %1574 = vmatpush1.msra.mxu0 0.0
        %1575 = vmatprep.subr.mxu0 0.0
        %1576 = vmatpush1.msra.mxu0 0.0
        %1577 = vmatprep.subr.mxu0 0.0
        %1578 = vmatpush1.msra.mxu0 0.0
        %1579 = vmatprep.subr.mxu0 0.0
        %1580 = vmatpush1.msra.mxu0 0.0
        %1581 = vmatprep.subr.mxu0 0.0
        %1582 = vmatpush1.msra.mxu0 0.0
        %1583 = vmatprep.mubr.f32.mxu0 0.0
        %1584 = vmatmul.mubr.f32.gmra.mrb[0].mxu0 %v1517
        %v1585 = vpop.f32.mrb[0].mxu0
        %v1586 = vadd.f32 0.0, %v1585
        %v1587 = vpop.f32.mrb[0].mxu0
        %1588 = vdwg.mxu0
        %v1590 = vsel %vm1167, %v1513, 0
        %1592 = vmatprep.subr.mxu0 0.0
        %1593 = vmatpush1.msra.mxu0 %v1164
        %1594 = vmatprep.subr.mxu0 0.0
        %1595 = vmatpush1.msra.mxu0 0.0
        %1596 = vmatprep.subr.mxu0 0.0
        %1597 = vmatpush1.msra.mxu0 0.0
        %1598 = vmatprep.subr.mxu0 0.0
        %1599 = vmatpush1.msra.mxu0 0.0
        %1600 = vmatprep.subr.mxu0 0.0
        %1601 = vmatpush1.msra.mxu0 0.0
        %1602 = vmatprep.subr.mxu0 0.0
        %1603 = vmatpush1.msra.mxu0 0.0
        %1604 = vmatprep.subr.mxu0 0.0
        %1605 = vmatpush1.msra.mxu0 0.0
        %1606 = vmatprep.subr.mxu0 0.0
        %1607 = vmatpush1.msra.mxu0 0.0
        %1608 = vmatprep.subr.mxu0 0.0
        %1609 = vmatpush1.msra.mxu0 0.0
        %1610 = vmatprep.subr.mxu0 0.0
        %1611 = vmatpush1.msra.mxu0 0.0
        %1612 = vmatprep.subr.mxu0 0.0
        %1613 = vmatpush1.msra.mxu0 0.0
        %1614 = vmatprep.subr.mxu0 0.0
        %1615 = vmatpush1.msra.mxu0 0.0
        %1616 = vmatprep.subr.mxu0 0.0
        %1617 = vmatpush1.msra.mxu0 0.0
        %1618 = vmatprep.subr.mxu0 0.0
        %1619 = vmatpush1.msra.mxu0 0.0
        %1620 = vmatprep.subr.mxu0 0.0
        %1621 = vmatpush1.msra.mxu0 0.0
        %1622 = vmatprep.subr.mxu0 0.0
        %1623 = vmatpush1.msra.mxu0 0.0
        %1624 = vmatprep.subr.mxu0 0.0
        %1625 = vmatpush1.msra.mxu0 0.0
        %1626 = vmatprep.subr.mxu0 0.0
        %1627 = vmatpush1.msra.mxu0 0.0
        %1628 = vmatprep.subr.mxu0 0.0
        %1629 = vmatpush1.msra.mxu0 0.0
        %1630 = vmatprep.subr.mxu0 0.0
        %1631 = vmatpush1.msra.mxu0 0.0
        %1632 = vmatprep.subr.mxu0 0.0
        %1633 = vmatpush1.msra.mxu0 0.0
        %1634 = vmatprep.subr.mxu0 0.0
        %1635 = vmatpush1.msra.mxu0 0.0
        %1636 = vmatprep.subr.mxu0 0.0
        %1637 = vmatpush1.msra.mxu0 0.0
        %1638 = vmatprep.subr.mxu0 0.0
        %1639 = vmatpush1.msra.mxu0 0.0
        %1640 = vmatprep.subr.mxu0 0.0
        %1641 = vmatpush1.msra.mxu0 0.0
        %1642 = vmatprep.subr.mxu0 0.0
        %1643 = vmatpush1.msra.mxu0 0.0
        %1644 = vmatprep.subr.mxu0 0.0
        %1645 = vmatpush1.msra.mxu0 0.0
        %1646 = vmatprep.subr.mxu0 0.0
        %1647 = vmatpush1.msra.mxu0 0.0
        %1648 = vmatprep.subr.mxu0 0.0
        %1649 = vmatpush1.msra.mxu0 0.0
        %1650 = vmatprep.subr.mxu0 0.0
        %1651 = vmatpush1.msra.mxu0 0.0
        %1652 = vmatprep.subr.mxu0 0.0
        %1653 = vmatpush1.msra.mxu0 0.0
        %1654 = vmatprep.subr.mxu0 0.0
        %1655 = vmatpush1.msra.mxu0 0.0
        %1656 = vmatprep.mubr.f32.mxu0 0.0
        %1657 = vmatmul.mubr.f32.gmra.mrb[0].mxu0 %v1590
        %v1658 = vpop.f32.mrb[0].mxu0
        %v1659 = vadd.f32 0.0, %v1658
        %v1660 = vpop.f32.mrb[0].mxu0
        %1661 = vdwg.mxu0
        %v1663 = vsel %vm1167, %v1514, 0
        %1665 = vmatprep.subr.mxu0 0.0
        %1666 = vmatpush1.msra.mxu0 %v1165
        %1667 = vmatprep.subr.mxu0 0.0
        %1668 = vmatpush1.msra.mxu0 0.0
        %1669 = vmatprep.subr.mxu0 0.0
        %1670 = vmatpush1.msra.mxu0 0.0
        %1671 = vmatprep.subr.mxu0 0.0
        %1672 = vmatpush1.msra.mxu0 0.0
        %1673 = vmatprep.subr.mxu0 0.0
        %1674 = vmatpush1.msra.mxu0 0.0
        %1675 = vmatprep.subr.mxu0 0.0
        %1676 = vmatpush1.msra.mxu0 0.0
        %1677 = vmatprep.subr.mxu0 0.0
        %1678 = vmatpush1.msra.mxu0 0.0
        %1679 = vmatprep.subr.mxu0 0.0
        %1680 = vmatpush1.msra.mxu0 0.0
        %1681 = vmatprep.subr.mxu0 0.0
        %1682 = vmatpush1.msra.mxu0 0.0
        %1683 = vmatprep.subr.mxu0 0.0
        %1684 = vmatpush1.msra.mxu0 0.0
        %1685 = vmatprep.subr.mxu0 0.0
        %1686 = vmatpush1.msra.mxu0 0.0
        %1687 = vmatprep.subr.mxu0 0.0
        %1688 = vmatpush1.msra.mxu0 0.0
        %1689 = vmatprep.subr.mxu0 0.0
        %1690 = vmatpush1.msra.mxu0 0.0
        %1691 = vmatprep.subr.mxu0 0.0
        %1692 = vmatpush1.msra.mxu0 0.0
        %1693 = vmatprep.subr.mxu0 0.0
        %1694 = vmatpush1.msra.mxu0 0.0
        %1695 = vmatprep.subr.mxu0 0.0
        %1696 = vmatpush1.msra.mxu0 0.0
        %1697 = vmatprep.subr.mxu0 0.0
        %1698 = vmatpush1.msra.mxu0 0.0
        %1699 = vmatprep.subr.mxu0 0.0
        %1700 = vmatpush1.msra.mxu0 0.0
        %1701 = vmatprep.subr.mxu0 0.0
        %1702 = vmatpush1.msra.mxu0 0.0
        %1703 = vmatprep.subr.mxu0 0.0
        %1704 = vmatpush1.msra.mxu0 0.0
        %1705 = vmatprep.subr.mxu0 0.0
        %1706 = vmatpush1.msra.mxu0 0.0
        %1707 = vmatprep.subr.mxu0 0.0
        %1708 = vmatpush1.msra.mxu0 0.0
        %1709 = vmatprep.subr.mxu0 0.0
        %1710 = vmatpush1.msra.mxu0 0.0
        %1711 = vmatprep.subr.mxu0 0.0
        %1712 = vmatpush1.msra.mxu0 0.0
        %1713 = vmatprep.subr.mxu0 0.0
        %1714 = vmatpush1.msra.mxu0 0.0
        %1715 = vmatprep.subr.mxu0 0.0
        %1716 = vmatpush1.msra.mxu0 0.0
        %1717 = vmatprep.subr.mxu0 0.0
        %1718 = vmatpush1.msra.mxu0 0.0
        %1719 = vmatprep.subr.mxu0 0.0
        %1720 = vmatpush1.msra.mxu0 0.0
        %1721 = vmatprep.subr.mxu0 0.0
        %1722 = vmatpush1.msra.mxu0 0.0
        %1723 = vmatprep.subr.mxu0 0.0
        %1724 = vmatpush1.msra.mxu0 0.0
        %1725 = vmatprep.subr.mxu0 0.0
        %1726 = vmatpush1.msra.mxu0 0.0
        %1727 = vmatprep.subr.mxu0 0.0
        %1728 = vmatpush1.msra.mxu0 0.0
        %1729 = vmatprep.mubr.f32.mxu0 0.0
        %1730 = vmatmul.mubr.f32.gmra.mrb[0].mxu0 %v1663
        %v1731 = vpop.f32.mrb[0].mxu0
        %v1732 = vadd.f32 0.0, %v1731
        %v1733 = vpop.f32.mrb[0].mxu0
        %1734 = vdwg.mxu0
        %v1736 = vsel %vm1167, %v1515, 0
        %1738 = vmatprep.subr.mxu0 0.0
        %1739 = vmatpush1.msra.mxu0 %v1166
        %1740 = vmatprep.subr.mxu0 0.0
        %1741 = vmatpush1.msra.mxu0 0.0
        %1742 = vmatprep.subr.mxu0 0.0
        %1743 = vmatpush1.msra.mxu0 0.0
        %1744 = vmatprep.subr.mxu0 0.0
        %1745 = vmatpush1.msra.mxu0 0.0
        %1746 = vmatprep.subr.mxu0 0.0
        %1747 = vmatpush1.msra.mxu0 0.0
        %1748 = vmatprep.subr.mxu0 0.0
        %1749 = vmatpush1.msra.mxu0 0.0
        %1750 = vmatprep.subr.mxu0 0.0
        %1751 = vmatpush1.msra.mxu0 0.0
        %1752 = vmatprep.subr.mxu0 0.0
        %1753 = vmatpush1.msra.mxu0 0.0
        %1754 = vmatprep.subr.mxu0 0.0
        %1755 = vmatpush1.msra.mxu0 0.0
        %1756 = vmatprep.subr.mxu0 0.0
        %1757 = vmatpush1.msra.mxu0 0.0
        %1758 = vmatprep.subr.mxu0 0.0
        %1759 = vmatpush1.msra.mxu0 0.0
        %1760 = vmatprep.subr.mxu0 0.0
        %1761 = vmatpush1.msra.mxu0 0.0
        %1762 = vmatprep.subr.mxu0 0.0
        %1763 = vmatpush1.msra.mxu0 0.0
        %1764 = vmatprep.subr.mxu0 0.0
        %1765 = vmatpush1.msra.mxu0 0.0
        %1766 = vmatprep.subr.mxu0 0.0
        %1767 = vmatpush1.msra.mxu0 0.0
        %1768 = vmatprep.subr.mxu0 0.0
        %1769 = vmatpush1.msra.mxu0 0.0
        %1770 = vmatprep.subr.mxu0 0.0
        %1771 = vmatpush1.msra.mxu0 0.0
        %1772 = vmatprep.subr.mxu0 0.0
        %1773 = vmatpush1.msra.mxu0 0.0
        %1774 = vmatprep.subr.mxu0 0.0
        %1775 = vmatpush1.msra.mxu0 0.0
        %1776 = vmatprep.subr.mxu0 0.0
        %1777 = vmatpush1.msra.mxu0 0.0
        %1778 = vmatprep.subr.mxu0 0.0
        %1779 = vmatpush1.msra.mxu0 0.0
        %1780 = vmatprep.subr.mxu0 0.0
        %1781 = vmatpush1.msra.mxu0 0.0
        %1782 = vmatprep.subr.mxu0 0.0
        %1783 = vmatpush1.msra.mxu0 0.0
        %1784 = vmatprep.subr.mxu0 0.0
        %1785 = vmatpush1.msra.mxu0 0.0
        %1786 = vmatprep.subr.mxu0 0.0
        %1787 = vmatpush1.msra.mxu0 0.0
        %1788 = vmatprep.subr.mxu0 0.0
        %1789 = vmatpush1.msra.mxu0 0.0
        %1790 = vmatprep.subr.mxu0 0.0
        %1791 = vmatpush1.msra.mxu0 0.0
        %1792 = vmatprep.subr.mxu0 0.0
        %1793 = vmatpush1.msra.mxu0 0.0
        %1794 = vmatprep.subr.mxu0 0.0
        %1795 = vmatpush1.msra.mxu0 0.0
        %1796 = vmatprep.subr.mxu0 0.0
        %1797 = vmatpush1.msra.mxu0 0.0
        %1798 = vmatprep.subr.mxu0 0.0
        %1799 = vmatpush1.msra.mxu0 0.0
        %1800 = vmatprep.subr.mxu0 0.0
        %1801 = vmatpush1.msra.mxu0 0.0
        %1802 = vmatprep.mubr.f32.mxu0 0.0
        %1803 = vmatmul.mubr.f32.gmra.mrb[0].mxu0 %v1736
        %v1804 = vpop.f32.mrb[0].mxu0
        %v1805 = vadd.f32 0.0, %v1804
        %v1806 = vpop.f32.mrb[0].mxu0
        %1807 = vdwg.mxu0
        %v1808 = vcombine.low %v1586, %v1732
        %v1809 = vcombine.high %v1586, %v1732
        %v1811 = vunpack.c.l.s4 1983009808
        %v1812 = vunpack.c.0.s8 %v1811
        %v1813 = vlaneseq
        %v1814 = vshrl.u32 %v1813, 7
        %v1815 = vsub.s32 %v1812, %v1814
        %v1816 = vrot.slane %v1808, %v1815
        %v1818 = vunpack.c.l.s4 1983009808
        %v1819 = vunpack.c.0.s8 %v1818
        %v1820 = vlaneseq
        %v1821 = vshrl.u32 %v1820, 7
        %v1822 = vsub.s32 %v1819, %v1821
        %v1823 = vrot.slane %v1809, %v1822
        %v1824 = vcombine.low %v1659, %v1805
        %v1825 = vcombine.high %v1659, %v1805
        %v1827 = vunpack.c.l.s4 1983009808
        %v1828 = vunpack.c.0.s8 %v1827
        %v1829 = vlaneseq
        %v1830 = vshrl.u32 %v1829, 7
        %v1831 = vsub.s32 %v1828, %v1830
        %v1832 = vrot.slane %v1824, %v1831
        %v1834 = vunpack.c.l.s4 1983009808
        %v1835 = vunpack.c.0.s8 %v1834
        %v1836 = vlaneseq
        %v1837 = vshrl.u32 %v1836, 7
        %v1838 = vsub.s32 %v1835, %v1837
        %v1839 = vrot.slane %v1825, %v1838
        %v1840 = vcombine.low %v1816, %v1832
        %v1841 = vcombine.high %v1816, %v1832
        %v1843 = vunpack.c.l.s4 1934713408
        %v1844 = vunpack.c.0.s8 %v1843
        %v1845 = vlaneseq
        %v1846 = vshrl.u32 %v1845, 7
        %v1847 = vsub.s32 %v1844, %v1846
        %v1848 = vrot.slane %v1840, %v1847
        %v1850 = vunpack.c.l.s4 1934713408
        %v1851 = vunpack.c.0.s8 %v1850
        %v1852 = vlaneseq
        %v1853 = vshrl.u32 %v1852, 7
        %v1854 = vsub.s32 %v1851, %v1853
        %v1855 = vrot.slane %v1841, %v1854
        %v1856 = vcombine.low %v1823, %v1839
        %v1857 = vcombine.high %v1823, %v1839
        %v1859 = vunpack.c.l.s4 1934713408
        %v1860 = vunpack.c.0.s8 %v1859
        %v1861 = vlaneseq
        %v1862 = vshrl.u32 %v1861, 7
        %v1863 = vsub.s32 %v1860, %v1862
        %v1864 = vrot.slane %v1856, %v1863
        %v1866 = vunpack.c.l.s4 1934713408
        %v1867 = vunpack.c.0.s8 %v1866
        %v1868 = vlaneseq
        %v1869 = vshrl.u32 %v1868, 7
        %v1870 = vsub.s32 %v1867, %v1869
        %v1871 = vrot.slane %v1857, %v1870
        %v1872 = vcombine.high %v1848, 0.0
        %v1873 = vcombine.high %v1855, 0.0
        %v1874 = vcombine.high %v1864, 0.0
        %v1875 = vcombine.high %v1871, 0.0
        %v1876 = vcombine.low %v1848, %v1855
        %v1878 = vunpack.c.l.s4 1983009808
        %v1879 = vunpack.c.0.s8 %v1878
        %v1880 = vlaneseq
        %v1881 = vshrl.u32 %v1880, 7
        %v1882 = vsub.s32 %v1879, %v1881
        %v1883 = vrot.slane %v1876, %v1882
        %v1884 = vcombine.low %v1872, %v1873
        %v1886 = vunpack.c.l.s4 1983009808
        %v1887 = vunpack.c.0.s8 %v1886
        %v1888 = vlaneseq
        %v1889 = vshrl.u32 %v1888, 7
        %v1890 = vsub.s32 %v1887, %v1889
        %v1891 = vrot.slane %v1884, %v1890
        %v1892 = vcombine.low %v1864, %v1871
        %v1894 = vunpack.c.l.s4 1983009808
        %v1895 = vunpack.c.0.s8 %v1894
        %v1896 = vlaneseq
        %v1897 = vshrl.u32 %v1896, 7
        %v1898 = vsub.s32 %v1895, %v1897
        %v1899 = vrot.slane %v1892, %v1898
        %v1900 = vcombine.low %v1874, %v1875
        %v1902 = vunpack.c.l.s4 1983009808
        %v1903 = vunpack.c.0.s8 %v1902
        %v1904 = vlaneseq
        %v1905 = vshrl.u32 %v1904, 7
        %v1906 = vsub.s32 %v1903, %v1905
        %v1907 = vrot.slane %v1900, %v1906
        %v1908 = vcombine.low %v1883, %v1891
        %v1909 = vcombine.high %v1883, %v1891
        %v1911 = vunpack.c.l.s4 1934713408
        %v1912 = vunpack.c.0.s8 %v1911
        %v1913 = vlaneseq
        %v1914 = vshrl.u32 %v1913, 7
        %v1915 = vsub.s32 %v1912, %v1914
        %v1916 = vrot.slane %v1908, %v1915
        %v1918 = vunpack.c.l.s4 1934713408
        %v1919 = vunpack.c.0.s8 %v1918
        %v1920 = vlaneseq
        %v1921 = vshrl.u32 %v1920, 7
        %v1922 = vsub.s32 %v1919, %v1921
        %v1923 = vrot.slane %v1909, %v1922
        %v1924 = vcombine.low %v1899, %v1907
        %v1925 = vcombine.high %v1899, %v1907
        %v1927 = vunpack.c.l.s4 1934713408
        %v1928 = vunpack.c.0.s8 %v1927
        %v1929 = vlaneseq
        %v1930 = vshrl.u32 %v1929, 7
        %v1931 = vsub.s32 %v1928, %v1930
        %v1932 = vrot.slane %v1924, %v1931
        %v1934 = vunpack.c.l.s4 1934713408
        %v1935 = vunpack.c.0.s8 %v1934
        %v1936 = vlaneseq
        %v1937 = vshrl.u32 %v1936, 7
        %v1938 = vsub.s32 %v1935, %v1937
        %v1939 = vrot.slane %v1925, %v1938
        %v1940 = vcombine.low %v1916, %v1932
        %v1941 = vcombine.high %v1916, %v1932
        %v1942 = vcombine.low %v1923, %v1939
        %v1943 = vcombine.high %v1923, %v1939
        %1945 = vrot.lane.b32.xlu0 %v1941, 8
        %v1946 = vpop.permute.xlu0 %1945
        %1949 = vrot.lane.b32.xlu0 %v1942, 16
        %v1950 = vpop.permute.xlu0 %1949
        %1953 = vrot.lane.b32.xlu0 %v1943, 24
        %v1954 = vpop.permute.xlu0 %1953
        %v1956 = vsel %vm1167, %v1940, %v1946
        %vm1957 = vcmask 130048
        %v1958 = vsel %vm1957, %v1956, %v1950
        %vm1959 = vcmask 195584
        %v1960 = vsel %vm1959, %v1958, %v1954
        %v1961 = vld [vmem:[#allocation11] sm:$0xff]
        %v1962 = vld [vmem:[#allocation11 + $0x8] sm:$0xff]
        %v1963 = vld [vmem:[#allocation11 + $0x10] sm:$0xff]
        %v1964 = vld [vmem:[#allocation11 + $0x18] sm:$0xff]
        %v1965 = vlaneseq
        %v1966 = vshrl.u32 %v1965, 7
        %v1967 = vsub.s32 4, %v1966
        %v1968 = vrot.slane %v640, %v1967
        %v1970 = vsel %vm651, %v1960, 0
        %1972 = vmatprep.subr.mxu0 0.0
        %1973 = vmatpush1.msra.mxu0 %v1961
        %1974 = vmatprep.subr.mxu0 0.0
        %1975 = vmatpush1.msra.mxu0 %v1962
        %1976 = vmatprep.subr.mxu0 0.0
        %1977 = vmatpush1.msra.mxu0 %v1963
        %1978 = vmatprep.subr.mxu0 0.0
        %1979 = vmatpush1.msra.mxu0 %v1964
        %1980 = vmatprep.subr.mxu0 0.0
        %1981 = vmatpush1.msra.mxu0 0.0
        %1982 = vmatprep.subr.mxu0 0.0
        %1983 = vmatpush1.msra.mxu0 0.0
        %1984 = vmatprep.subr.mxu0 0.0
        %1985 = vmatpush1.msra.mxu0 0.0
        %1986 = vmatprep.subr.mxu0 0.0
        %1987 = vmatpush1.msra.mxu0 0.0
        %1988 = vmatprep.subr.mxu0 0.0
        %1989 = vmatpush1.msra.mxu0 0.0
        %1990 = vmatprep.subr.mxu0 0.0
        %1991 = vmatpush1.msra.mxu0 0.0
        %1992 = vmatprep.subr.mxu0 0.0
        %1993 = vmatpush1.msra.mxu0 0.0
        %1994 = vmatprep.subr.mxu0 0.0
        %1995 = vmatpush1.msra.mxu0 0.0
        %1996 = vmatprep.subr.mxu0 0.0
        %1997 = vmatpush1.msra.mxu0 0.0
        %1998 = vmatprep.subr.mxu0 0.0
        %1999 = vmatpush1.msra.mxu0 0.0
        %2000 = vmatprep.subr.mxu0 0.0
        %2001 = vmatpush1.msra.mxu0 0.0
        %2002 = vmatprep.subr.mxu0 0.0
        %2003 = vmatpush1.msra.mxu0 0.0
        %2004 = vmatprep.subr.mxu0 0.0
        %2005 = vmatpush1.msra.mxu0 0.0
        %2006 = vmatprep.subr.mxu0 0.0
        %2007 = vmatpush1.msra.mxu0 0.0
        %2008 = vmatprep.subr.mxu0 0.0
        %2009 = vmatpush1.msra.mxu0 0.0
        %2010 = vmatprep.subr.mxu0 0.0
        %2011 = vmatpush1.msra.mxu0 0.0
        %2012 = vmatprep.subr.mxu0 0.0
        %2013 = vmatpush1.msra.mxu0 0.0
        %2014 = vmatprep.subr.mxu0 0.0
        %2015 = vmatpush1.msra.mxu0 0.0
        %2016 = vmatprep.subr.mxu0 0.0
        %2017 = vmatpush1.msra.mxu0 0.0
        %2018 = vmatprep.subr.mxu0 0.0
        %2019 = vmatpush1.msra.mxu0 0.0
        %2020 = vmatprep.subr.mxu0 0.0
        %2021 = vmatpush1.msra.mxu0 0.0
        %2022 = vmatprep.subr.mxu0 0.0
        %2023 = vmatpush1.msra.mxu0 0.0
        %2024 = vmatprep.subr.mxu0 0.0
        %2025 = vmatpush1.msra.mxu0 0.0
        %2026 = vmatprep.subr.mxu0 0.0
        %2027 = vmatpush1.msra.mxu0 0.0
        %2028 = vmatprep.subr.mxu0 0.0
        %2029 = vmatpush1.msra.mxu0 0.0
        %2030 = vmatprep.subr.mxu0 0.0
        %2031 = vmatpush1.msra.mxu0 0.0
        %2032 = vmatprep.subr.mxu0 0.0
        %2033 = vmatpush1.msra.mxu0 0.0
        %2034 = vmatprep.subr.mxu0 0.0
        %2035 = vmatpush1.msra.mxu0 0.0
        %2036 = vmatprep.mubr.f32.mxu0 0.0
        %2037 = vmatmul.mubr.f32.gmra.mrb[0].mxu0 %v1970
        %v2038 = vpop.f32.mrb[0].mxu0
        %v2039 = vadd.f32 %v1968, %v2038
        %v2040 = vpop.f32.mrb[0].mxu0
        %2041 = vdwg.mxu0
        %v2042 = vadd.f32 %v634, %v2039
        %v2043 = vsel %vm651, %v2042, 0.0
        %2044 = vadd.xlane.f32.xlu0 %v2043
        %v2045 = vpop.xlane.xlu0 %2044
        %v2046 = vrcp.pop 32.0
        %v2047 = vmul.f32 %v2045, %v2046
        %v2048 = vsub.f32 %v2042, %v2047
        %v2049 = vmul.f32 %v2048, %v2048
        %v2050 = vsel %vm651, %v2049, 0.0
        %2051 = vadd.xlane.f32.xlu0 %v2050
        %v2052 = vpop.xlane.xlu0 %2051
        %v2053 = vmul.f32 %v2052, %v2046
        %v2054 = vadd.f32 %v2053, 1e-05
        %v2055 = vrsqrt.pop %v2054
        %v2056 = vmul.f32 %v2048, %v2055
        %v2057 = vlaneseq
        %v2058 = vshrl.u32 %v2057, 7
        %v2059 = vsub.s32 0, %v2058
        %v2060 = vrot.slane %v641, %v2059
        %v2061 = vmul.f32 %v2056, %v2060
        %v2062 = vlaneseq
        %v2063 = vshrl.u32 %v2062, 7
        %v2064 = vsub.s32 1, %v2063
        %v2065 = vrot.slane %v641, %v2064
        %v2066 = vadd.f32 %v2061, %v2065
        %v2067 = vadd.f32 %v2066, %v635
        %v2068 = vld [vmem:[#allocation7] sm:$0xff]
        %v2069 = vld [vmem:[#allocation7 + $0x8] sm:$0xff]
        %v2070 = vld [vmem:[#allocation7 + $0x10] sm:$0xff]
        %v2071 = vld [vmem:[#allocation7 + $0x18] sm:$0xff]
        %v2072 = vlaneseq
        %v2073 = vshrl.u32 %v2072, 7
        %v2074 = vsub.s32 1, %v2073
        %v2075 = vrot.slane %v640, %v2074
        %v2077 = vsel %vm651, %v2067, 0
        %2079 = vmatprep.subr.mxu0 0.0
        %2080 = vmatpush1.msra.mxu0 %v2068
        %2081 = vmatprep.subr.mxu0 0.0
        %2082 = vmatpush1.msra.mxu0 %v2069
        %2083 = vmatprep.subr.mxu0 0.0
        %2084 = vmatpush1.msra.mxu0 %v2070
        %2085 = vmatprep.subr.mxu0 0.0
        %2086 = vmatpush1.msra.mxu0 %v2071
        %2087 = vmatprep.subr.mxu0 0.0
        %2088 = vmatpush1.msra.mxu0 0.0
        %2089 = vmatprep.subr.mxu0 0.0
        %2090 = vmatpush1.msra.mxu0 0.0
        %2091 = vmatprep.subr.mxu0 0.0
        %2092 = vmatpush1.msra.mxu0 0.0
        %2093 = vmatprep.subr.mxu0 0.0
        %2094 = vmatpush1.msra.mxu0 0.0
        %2095 = vmatprep.subr.mxu0 0.0
        %2096 = vmatpush1.msra.mxu0 0.0
        %2097 = vmatprep.subr.mxu0 0.0
        %2098 = vmatpush1.msra.mxu0 0.0
        %2099 = vmatprep.subr.mxu0 0.0
        %2100 = vmatpush1.msra.mxu0 0.0
        %2101 = vmatprep.subr.mxu0 0.0
        %2102 = vmatpush1.msra.mxu0 0.0
        %2103 = vmatprep.subr.mxu0 0.0
        %2104 = vmatpush1.msra.mxu0 0.0
        %2105 = vmatprep.subr.mxu0 0.0
        %2106 = vmatpush1.msra.mxu0 0.0
        %2107 = vmatprep.subr.mxu0 0.0
        %2108 = vmatpush1.msra.mxu0 0.0
        %2109 = vmatprep.subr.mxu0 0.0
        %2110 = vmatpush1.msra.mxu0 0.0
        %2111 = vmatprep.subr.mxu0 0.0
        %2112 = vmatpush1.msra.mxu0 0.0
        %2113 = vmatprep.subr.mxu0 0.0
        %2114 = vmatpush1.msra.mxu0 0.0
        %2115 = vmatprep.subr.mxu0 0.0
        %2116 = vmatpush1.msra.mxu0 0.0
        %2117 = vmatprep.subr.mxu0 0.0
        %2118 = vmatpush1.msra.mxu0 0.0
        %2119 = vmatprep.subr.mxu0 0.0
        %2120 = vmatpush1.msra.mxu0 0.0
        %2121 = vmatprep.subr.mxu0 0.0
        %2122 = vmatpush1.msra.mxu0 0.0
        %2123 = vmatprep.subr.mxu0 0.0
        %2124 = vmatpush1.msra.mxu0 0.0
        %2125 = vmatprep.subr.mxu0 0.0
        %2126 = vmatpush1.msra.mxu0 0.0
        %2127 = vmatprep.subr.mxu0 0.0
        %2128 = vmatpush1.msra.mxu0 0.0
        %2129 = vmatprep.subr.mxu0 0.0
        %2130 = vmatpush1.msra.mxu0 0.0
        %2131 = vmatprep.subr.mxu0 0.0
        %2132 = vmatpush1.msra.mxu0 0.0
        %2133 = vmatprep.subr.mxu0 0.0
        %2134 = vmatpush1.msra.mxu0 0.0
        %2135 = vmatprep.subr.mxu0 0.0
        %2136 = vmatpush1.msra.mxu0 0.0
        %2137 = vmatprep.subr.mxu0 0.0
        %2138 = vmatpush1.msra.mxu0 0.0
        %2139 = vmatprep.subr.mxu0 0.0
        %2140 = vmatpush1.msra.mxu0 0.0
        %2141 = vmatprep.subr.mxu0 0.0
        %2142 = vmatpush1.msra.mxu0 0.0
        %2143 = vmatprep.mubr.f32.mxu0 0.0
        %2144 = vmatmul.mubr.f32.gmra.mrb[0].mxu0 %v2077
        %v2145 = vpop.f32.mrb[0].mxu0
        %v2146 = vadd.f32 %v2075, %v2145
        %v2147 = vpop.f32.mrb[0].mxu0
        %2148 = vdwg.mxu0
        %v2149 = vld [vmem:[#allocation8] sm:$0xff]
        %v2150 = vld [vmem:[#allocation8 + $0x8] sm:$0xff]
        %v2151 = vld [vmem:[#allocation8 + $0x10] sm:$0xff]
        %v2152 = vld [vmem:[#allocation8 + $0x18] sm:$0xff]
        %v2153 = vlaneseq
        %v2154 = vshrl.u32 %v2153, 7
        %v2155 = vsub.s32 2, %v2154
        %v2156 = vrot.slane %v640, %v2155
        %v2158 = vsel %vm651, %v638, 0
        %v2161 = vsel %vm651, %v639, 0
        %2163 = vmatprep.subr.mxu0 0.0
        %2164 = vmatpush1.msra.mxu0 %v2149
        %2165 = vmatprep.subr.mxu0 0.0
        %2166 = vmatpush1.msra.mxu0 %v2150
        %2167 = vmatprep.subr.mxu0 0.0
        %2168 = vmatpush1.msra.mxu0 %v2151
        %2169 = vmatprep.subr.mxu0 0.0
        %2170 = vmatpush1.msra.mxu0 %v2152
        %2171 = vmatprep.subr.mxu0 0.0
        %2172 = vmatpush1.msra.mxu0 0.0
        %2173 = vmatprep.subr.mxu0 0.0
        %2174 = vmatpush1.msra.mxu0 0.0
        %2175 = vmatprep.subr.mxu0 0.0
        %2176 = vmatpush1.msra.mxu0 0.0
        %2177 = vmatprep.subr.mxu0 0.0
        %2178 = vmatpush1.msra.mxu0 0.0
        %2179 = vmatprep.subr.mxu0 0.0
        %2180 = vmatpush1.msra.mxu0 0.0
        %2181 = vmatprep.subr.mxu0 0.0
        %2182 = vmatpush1.msra.mxu0 0.0
        %2183 = vmatprep.subr.mxu0 0.0
        %2184 = vmatpush1.msra.mxu0 0.0
        %2185 = vmatprep.subr.mxu0 0.0
        %2186 = vmatpush1.msra.mxu0 0.0
        %2187 = vmatprep.subr.mxu0 0.0
        %2188 = vmatpush1.msra.mxu0 0.0
        %2189 = vmatprep.subr.mxu0 0.0
        %2190 = vmatpush1.msra.mxu0 0.0
        %2191 = vmatprep.subr.mxu0 0.0
        %2192 = vmatpush1.msra.mxu0 0.0
        %2193 = vmatprep.subr.mxu0 0.0
        %2194 = vmatpush1.msra.mxu0 0.0
        %2195 = vmatprep.subr.mxu0 0.0
        %2196 = vmatpush1.msra.mxu0 0.0
        %2197 = vmatprep.subr.mxu0 0.0
        %2198 = vmatpush1.msra.mxu0 0.0
        %2199 = vmatprep.subr.mxu0 0.0
        %2200 = vmatpush1.msra.mxu0 0.0
        %2201 = vmatprep.subr.mxu0 0.0
        %2202 = vmatpush1.msra.mxu0 0.0
        %2203 = vmatprep.subr.mxu0 0.0
        %2204 = vmatpush1.msra.mxu0 0.0
        %2205 = vmatprep.subr.mxu0 0.0
        %2206 = vmatpush1.msra.mxu0 0.0
        %2207 = vmatprep.subr.mxu0 0.0
        %2208 = vmatpush1.msra.mxu0 0.0
        %2209 = vmatprep.subr.mxu0 0.0
        %2210 = vmatpush1.msra.mxu0 0.0
        %2211 = vmatprep.subr.mxu0 0.0
        %2212 = vmatpush1.msra.mxu0 0.0
        %2213 = vmatprep.subr.mxu0 0.0
        %2214 = vmatpush1.msra.mxu0 0.0
        %2215 = vmatprep.subr.mxu0 0.0
        %2216 = vmatpush1.msra.mxu0 0.0
        %2217 = vmatprep.subr.mxu0 0.0
        %2218 = vmatpush1.msra.mxu0 0.0
        %2219 = vmatprep.subr.mxu0 0.0
        %2220 = vmatpush1.msra.mxu0 0.0
        %2221 = vmatprep.subr.mxu0 0.0
        %2222 = vmatpush1.msra.mxu0 0.0
        %2223 = vmatprep.subr.mxu0 0.0
        %2224 = vmatpush1.msra.mxu0 0.0
        %2225 = vmatprep.subr.mxu0 0.0
        %2226 = vmatpush1.msra.mxu0 0.0
        %2227 = vmatprep.mubr.f32.mxu0 0.0
        %2228 = vmatmul.mubr.f32.gmra.mrb[0].mxu0 %v2158
        %v2229 = vpop.f32.mrb[0].mxu0
        %v2230 = vadd.f32 %v2156, %v2229
        %v2231 = vpop.f32.mrb[0].mxu0
        %2232 = vmatprep.mubr.f32.mxu0 0.0
        %2233 = vmatmul.mubr.f32.gmra.mrb[0].mxu0 %v2161
        %v2234 = vpop.f32.mrb[0].mxu0
        %v2235 = vadd.f32 %v2156, %v2234
        %v2236 = vpop.f32.mrb[0].mxu0
        %2237 = vdwg.mxu0
        %v2238 = vld [vmem:[#allocation10] sm:$0xff]
        %v2239 = vld [vmem:[#allocation10 + $0x8] sm:$0xff]
        %v2240 = vld [vmem:[#allocation10 + $0x10] sm:$0xff]
        %v2241 = vld [vmem:[#allocation10 + $0x18] sm:$0xff]
        %v2242 = vlaneseq
        %v2243 = vshrl.u32 %v2242, 7
        %v2244 = vsub.s32 3, %v2243
        %v2245 = vrot.slane %v640, %v2244
        %v2247 = vsel %vm651, %v636, 0
        %v2250 = vsel %vm651, %v637, 0
        %2252 = vmatprep.subr.mxu0 0.0
        %2253 = vmatpush1.msra.mxu0 %v2238
        %2254 = vmatprep.subr.mxu0 0.0
        %2255 = vmatpush1.msra.mxu0 %v2239
        %2256 = vmatprep.subr.mxu0 0.0
        %2257 = vmatpush1.msra.mxu0 %v2240
        %2258 = vmatprep.subr.mxu0 0.0
        %2259 = vmatpush1.msra.mxu0 %v2241
        %2260 = vmatprep.subr.mxu0 0.0
        %2261 = vmatpush1.msra.mxu0 0.0
        %2262 = vmatprep.subr.mxu0 0.0
        %2263 = vmatpush1.msra.mxu0 0.0
        %2264 = vmatprep.subr.mxu0 0.0
        %2265 = vmatpush1.msra.mxu0 0.0
        %2266 = vmatprep.subr.mxu0 0.0
        %2267 = vmatpush1.msra.mxu0 0.0
        %2268 = vmatprep.subr.mxu0 0.0
        %2269 = vmatpush1.msra.mxu0 0.0
        %2270 = vmatprep.subr.mxu0 0.0
        %2271 = vmatpush1.msra.mxu0 0.0
        %2272 = vmatprep.subr.mxu0 0.0
        %2273 = vmatpush1.msra.mxu0 0.0
        %2274 = vmatprep.subr.mxu0 0.0
        %2275 = vmatpush1.msra.mxu0 0.0
        %2276 = vmatprep.subr.mxu0 0.0
        %2277 = vmatpush1.msra.mxu0 0.0
        %2278 = vmatprep.subr.mxu0 0.0
        %2279 = vmatpush1.msra.mxu0 0.0
        %2280 = vmatprep.subr.mxu0 0.0
        %2281 = vmatpush1.msra.mxu0 0.0
        %2282 = vmatprep.subr.mxu0 0.0
        %2283 = vmatpush1.msra.mxu0 0.0
        %2284 = vmatprep.subr.mxu0 0.0
        %2285 = vmatpush1.msra.mxu0 0.0
        %2286 = vmatprep.subr.mxu0 0.0
        %2287 = vmatpush1.msra.mxu0 0.0
        %2288 = vmatprep.subr.mxu0 0.0
        %2289 = vmatpush1.msra.mxu0 0.0
        %2290 = vmatprep.subr.mxu0 0.0
        %2291 = vmatpush1.msra.mxu0 0.0
        %2292 = vmatprep.subr.mxu0 0.0
        %2293 = vmatpush1.msra.mxu0 0.0
        %2294 = vmatprep.subr.mxu0 0.0
        %2295 = vmatpush1.msra.mxu0 0.0
        %2296 = vmatprep.subr.mxu0 0.0
        %2297 = vmatpush1.msra.mxu0 0.0
        %2298 = vmatprep.subr.mxu0 0.0
        %2299 = vmatpush1.msra.mxu0 0.0
        %2300 = vmatprep.subr.mxu0 0.0
        %2301 = vmatpush1.msra.mxu0 0.0
        %2302 = vmatprep.subr.mxu0 0.0
        %2303 = vmatpush1.msra.mxu0 0.0
        %2304 = vmatprep.subr.mxu0 0.0
        %2305 = vmatpush1.msra.mxu0 0.0
        %2306 = vmatprep.subr.mxu0 0.0
        %2307 = vmatpush1.msra.mxu0 0.0
        %2308 = vmatprep.subr.mxu0 0.0
        %2309 = vmatpush1.msra.mxu0 0.0
        %2310 = vmatprep.subr.mxu0 0.0
        %2311 = vmatpush1.msra.mxu0 0.0
        %2312 = vmatprep.subr.mxu0 0.0
        %2313 = vmatpush1.msra.mxu0 0.0
        %2314 = vmatprep.subr.mxu0 0.0
        %2315 = vmatpush1.msra.mxu0 0.0
        %2316 = vmatprep.mubr.f32.mxu0 0.0
        %2317 = vmatmul.mubr.f32.gmra.mrb[0].mxu0 %v2247
        %v2318 = vpop.f32.mrb[0].mxu0
        %v2319 = vadd.f32 %v2245, %v2318
        %v2320 = vpop.f32.mrb[0].mxu0
        %2321 = vmatprep.mubr.f32.mxu0 0.0
        %2322 = vmatmul.mubr.f32.gmra.mrb[0].mxu0 %v2250
        %v2323 = vpop.f32.mrb[0].mxu0
        %v2324 = vadd.f32 %v2245, %v2323
        %v2325 = vpop.f32.mrb[0].mxu0
        %2326 = vdwg.mxu0
        %2328 = vrot.lane.b32.xlu0 %v2146, 120
        %v2329 = vpop.permute.xlu0 %2328
        %2331 = vrot.lane.b32.xlu0 %v2146, 112
        %v2332 = vpop.permute.xlu0 %2331
        %2334 = vrot.lane.b32.xlu0 %v2146, 104
        %v2335 = vpop.permute.xlu0 %2334
        %v2337 = vcombine.low %v2146, %v2332
        %v2338 = vcombine.high %v2146, %v2332
        %v2340 = vunpack.c.l.s4 1983009808
        %v2341 = vunpack.c.0.s8 %v2340
        %v2342 = vlaneseq
        %v2343 = vshrl.u32 %v2342, 7
        %v2344 = vsub.s32 %v2341, %v2343
        %v2345 = vrot.slane %v2337, %v2344
        %v2347 = vunpack.c.l.s4 1983009808
        %v2348 = vunpack.c.0.s8 %v2347
        %v2349 = vlaneseq
        %v2350 = vshrl.u32 %v2349, 7
        %v2351 = vsub.s32 %v2348, %v2350
        %v2352 = vrot.slane %v2338, %v2351
        %v2353 = vcombine.low %v2329, %v2335
        %v2354 = vcombine.high %v2329, %v2335
        %v2356 = vunpack.c.l.s4 1983009808
        %v2357 = vunpack.c.0.s8 %v2356
        %v2358 = vlaneseq
        %v2359 = vshrl.u32 %v2358, 7
        %v2360 = vsub.s32 %v2357, %v2359
        %v2361 = vrot.slane %v2353, %v2360
        %v2363 = vunpack.c.l.s4 1983009808
        %v2364 = vunpack.c.0.s8 %v2363
        %v2365 = vlaneseq
        %v2366 = vshrl.u32 %v2365, 7
        %v2367 = vsub.s32 %v2364, %v2366
        %v2368 = vrot.slane %v2354, %v2367
        %v2369 = vcombine.low %v2345, %v2361
        %v2370 = vcombine.high %v2345, %v2361
        %v2372 = vunpack.c.l.s4 1934713408
        %v2373 = vunpack.c.0.s8 %v2372
        %v2374 = vlaneseq
        %v2375 = vshrl.u32 %v2374, 7
        %v2376 = vsub.s32 %v2373, %v2375
        %v2377 = vrot.slane %v2369, %v2376
        %v2379 = vunpack.c.l.s4 1934713408
        %v2380 = vunpack.c.0.s8 %v2379
        %v2381 = vlaneseq
        %v2382 = vshrl.u32 %v2381, 7
        %v2383 = vsub.s32 %v2380, %v2382
        %v2384 = vrot.slane %v2370, %v2383
        %v2385 = vcombine.low %v2352, %v2368
        %v2386 = vcombine.high %v2352, %v2368
        %v2388 = vunpack.c.l.s4 1934713408
        %v2389 = vunpack.c.0.s8 %v2388
        %v2390 = vlaneseq
        %v2391 = vshrl.u32 %v2390, 7
        %v2392 = vsub.s32 %v2389, %v2391
        %v2393 = vrot.slane %v2385, %v2392
        %v2395 = vunpack.c.l.s4 1934713408
        %v2396 = vunpack.c.0.s8 %v2395
        %v2397 = vlaneseq
        %v2398 = vshrl.u32 %v2397, 7
        %v2399 = vsub.s32 %v2396, %v2398
        %v2400 = vrot.slane %v2386, %v2399
        %v2401 = vcombine.high %v2377, 0.0
        %v2402 = vcombine.high %v2384, 0.0
        %v2403 = vcombine.high %v2393, 0.0
        %v2404 = vcombine.high %v2400, 0.0
        %v2405 = vcombine.low %v2377, %v2384
        %v2407 = vunpack.c.l.s4 1983009808
        %v2408 = vunpack.c.0.s8 %v2407
        %v2409 = vlaneseq
        %v2410 = vshrl.u32 %v2409, 7
        %v2411 = vsub.s32 %v2408, %v2410
        %v2412 = vrot.slane %v2405, %v2411
        %v2413 = vcombine.low %v2401, %v2402
        %v2415 = vunpack.c.l.s4 1983009808
        %v2416 = vunpack.c.0.s8 %v2415
        %v2417 = vlaneseq
        %v2418 = vshrl.u32 %v2417, 7
        %v2419 = vsub.s32 %v2416, %v2418
        %v2420 = vrot.slane %v2413, %v2419
        %v2421 = vcombine.low %v2393, %v2400
        %v2423 = vunpack.c.l.s4 1983009808
        %v2424 = vunpack.c.0.s8 %v2423
        %v2425 = vlaneseq
        %v2426 = vshrl.u32 %v2425, 7
        %v2427 = vsub.s32 %v2424, %v2426
        %v2428 = vrot.slane %v2421, %v2427
        %v2429 = vcombine.low %v2403, %v2404
        %v2431 = vunpack.c.l.s4 1983009808
        %v2432 = vunpack.c.0.s8 %v2431
        %v2433 = vlaneseq
        %v2434 = vshrl.u32 %v2433, 7
        %v2435 = vsub.s32 %v2432, %v2434
        %v2436 = vrot.slane %v2429, %v2435
        %v2437 = vcombine.low %v2412, %v2420
        %v2438 = vcombine.high %v2412, %v2420
        %v2440 = vunpack.c.l.s4 1934713408
        %v2441 = vunpack.c.0.s8 %v2440
        %v2442 = vlaneseq
        %v2443 = vshrl.u32 %v2442, 7
        %v2444 = vsub.s32 %v2441, %v2443
        %v2445 = vrot.slane %v2437, %v2444
        %v2447 = vunpack.c.l.s4 1934713408
        %v2448 = vunpack.c.0.s8 %v2447
        %v2449 = vlaneseq
        %v2450 = vshrl.u32 %v2449, 7
        %v2451 = vsub.s32 %v2448, %v2450
        %v2452 = vrot.slane %v2438, %v2451
        %v2453 = vcombine.low %v2428, %v2436
        %v2454 = vcombine.high %v2428, %v2436
        %v2456 = vunpack.c.l.s4 1934713408
        %v2457 = vunpack.c.0.s8 %v2456
        %v2458 = vlaneseq
        %v2459 = vshrl.u32 %v2458, 7
        %v2460 = vsub.s32 %v2457, %v2459
        %v2461 = vrot.slane %v2453, %v2460
        %v2463 = vunpack.c.l.s4 1934713408
        %v2464 = vunpack.c.0.s8 %v2463
        %v2465 = vlaneseq
        %v2466 = vshrl.u32 %v2465, 7
        %v2467 = vsub.s32 %v2464, %v2466
        %v2468 = vrot.slane %v2454, %v2467
        %v2469 = vcombine.low %v2445, %v2461
        %v2470 = vcombine.high %v2445, %v2461
        %v2471 = vcombine.low %v2452, %v2468
        %v2472 = vcombine.high %v2452, %v2468
        %2475 = vrot.lane.b32.xlu0 %v2230, 120
        %v2476 = vpop.permute.xlu0 %2475
        %2477 = vrot.lane.b32.xlu0 %v2235, 120
        %v2478 = vpop.permute.xlu0 %2477
        %2481 = vrot.lane.b32.xlu0 %v2230, 112
        %v2482 = vpop.permute.xlu0 %2481
        %2483 = vrot.lane.b32.xlu0 %v2235, 112
        %v2484 = vpop.permute.xlu0 %2483
        %2487 = vrot.lane.b32.xlu0 %v2230, 104
        %v2488 = vpop.permute.xlu0 %2487
        %2489 = vrot.lane.b32.xlu0 %v2235, 104
        %v2490 = vpop.permute.xlu0 %2489
        %v2493 = vcombine.low %v2230, %v2482
        %v2494 = vcombine.high %v2230, %v2482
        %v2496 = vunpack.c.l.s4 1983009808
        %v2497 = vunpack.c.0.s8 %v2496
        %v2498 = vlaneseq
        %v2499 = vshrl.u32 %v2498, 7
        %v2500 = vsub.s32 %v2497, %v2499
        %v2501 = vrot.slane %v2493, %v2500
        %v2503 = vunpack.c.l.s4 1983009808
        %v2504 = vunpack.c.0.s8 %v2503
        %v2505 = vlaneseq
        %v2506 = vshrl.u32 %v2505, 7
        %v2507 = vsub.s32 %v2504, %v2506
        %v2508 = vrot.slane %v2494, %v2507
        %v2509 = vcombine.low %v2476, %v2488
        %v2510 = vcombine.high %v2476, %v2488
        %v2512 = vunpack.c.l.s4 1983009808
        %v2513 = vunpack.c.0.s8 %v2512
        %v2514 = vlaneseq
        %v2515 = vshrl.u32 %v2514, 7
        %v2516 = vsub.s32 %v2513, %v2515
        %v2517 = vrot.slane %v2509, %v2516
        %v2519 = vunpack.c.l.s4 1983009808
        %v2520 = vunpack.c.0.s8 %v2519
        %v2521 = vlaneseq
        %v2522 = vshrl.u32 %v2521, 7
        %v2523 = vsub.s32 %v2520, %v2522
        %v2524 = vrot.slane %v2510, %v2523
        %v2525 = vcombine.low %v2501, %v2517
        %v2526 = vcombine.high %v2501, %v2517
        %v2528 = vunpack.c.l.s4 1934713408
        %v2529 = vunpack.c.0.s8 %v2528
        %v2530 = vlaneseq
        %v2531 = vshrl.u32 %v2530, 7
        %v2532 = vsub.s32 %v2529, %v2531
        %v2533 = vrot.slane %v2525, %v2532
        %v2535 = vunpack.c.l.s4 1934713408
        %v2536 = vunpack.c.0.s8 %v2535
        %v2537 = vlaneseq
        %v2538 = vshrl.u32 %v2537, 7
        %v2539 = vsub.s32 %v2536, %v2538
        %v2540 = vrot.slane %v2526, %v2539
        %v2541 = vcombine.low %v2508, %v2524
        %v2542 = vcombine.high %v2508, %v2524
        %v2544 = vunpack.c.l.s4 1934713408
        %v2545 = vunpack.c.0.s8 %v2544
        %v2546 = vlaneseq
        %v2547 = vshrl.u32 %v2546, 7
        %v2548 = vsub.s32 %v2545, %v2547
        %v2549 = vrot.slane %v2541, %v2548
        %v2551 = vunpack.c.l.s4 1934713408
        %v2552 = vunpack.c.0.s8 %v2551
        %v2553 = vlaneseq
        %v2554 = vshrl.u32 %v2553, 7
        %v2555 = vsub.s32 %v2552, %v2554
        %v2556 = vrot.slane %v2542, %v2555
        %v2557 = vcombine.high %v2533, 0.0
        %v2558 = vcombine.high %v2540, 0.0
        %v2559 = vcombine.high %v2549, 0.0
        %v2560 = vcombine.high %v2556, 0.0
        %v2561 = vcombine.low %v2235, %v2484
        %v2562 = vcombine.high %v2235, %v2484
        %v2564 = vunpack.c.l.s4 1983009808
        %v2565 = vunpack.c.0.s8 %v2564
        %v2566 = vlaneseq
        %v2567 = vshrl.u32 %v2566, 7
        %v2568 = vsub.s32 %v2565, %v2567
        %v2569 = vrot.slane %v2561, %v2568
        %v2571 = vunpack.c.l.s4 1983009808
        %v2572 = vunpack.c.0.s8 %v2571
        %v2573 = vlaneseq
        %v2574 = vshrl.u32 %v2573, 7
        %v2575 = vsub.s32 %v2572, %v2574
        %v2576 = vrot.slane %v2562, %v2575
        %v2577 = vcombine.low %v2478, %v2490
        %v2578 = vcombine.high %v2478, %v2490
        %v2580 = vunpack.c.l.s4 1983009808
        %v2581 = vunpack.c.0.s8 %v2580
        %v2582 = vlaneseq
        %v2583 = vshrl.u32 %v2582, 7
        %v2584 = vsub.s32 %v2581, %v2583
        %v2585 = vrot.slane %v2577, %v2584
        %v2587 = vunpack.c.l.s4 1983009808
        %v2588 = vunpack.c.0.s8 %v2587
        %v2589 = vlaneseq
        %v2590 = vshrl.u32 %v2589, 7
        %v2591 = vsub.s32 %v2588, %v2590
        %v2592 = vrot.slane %v2578, %v2591
        %v2593 = vcombine.low %v2569, %v2585
        %v2594 = vcombine.high %v2569, %v2585
        %v2596 = vunpack.c.l.s4 1934713408
        %v2597 = vunpack.c.0.s8 %v2596
        %v2598 = vlaneseq
        %v2599 = vshrl.u32 %v2598, 7
        %v2600 = vsub.s32 %v2597, %v2599
        %v2601 = vrot.slane %v2593, %v2600
        %v2603 = vunpack.c.l.s4 1934713408
        %v2604 = vunpack.c.0.s8 %v2603
        %v2605 = vlaneseq
        %v2606 = vshrl.u32 %v2605, 7
        %v2607 = vsub.s32 %v2604, %v2606
        %v2608 = vrot.slane %v2594, %v2607
        %v2609 = vcombine.low %v2576, %v2592
        %v2610 = vcombine.high %v2576, %v2592
        %v2612 = vunpack.c.l.s4 1934713408
        %v2613 = vunpack.c.0.s8 %v2612
        %v2614 = vlaneseq
        %v2615 = vshrl.u32 %v2614, 7
        %v2616 = vsub.s32 %v2613, %v2615
        %v2617 = vrot.slane %v2609, %v2616
        %v2619 = vunpack.c.l.s4 1934713408
        %v2620 = vunpack.c.0.s8 %v2619
        %v2621 = vlaneseq
        %v2622 = vshrl.u32 %v2621, 7
        %v2623 = vsub.s32 %v2620, %v2622
        %v2624 = vrot.slane %v2610, %v2623
        %v2625 = vcombine.high %v2601, 0.0
        %v2626 = vcombine.high %v2608, 0.0
        %v2627 = vcombine.high %v2617, 0.0
        %v2628 = vcombine.high %v2624, 0.0
        %v2629 = vcombine.low %v2533, %v2540
        %v2631 = vunpack.c.l.s4 1983009808
        %v2632 = vunpack.c.0.s8 %v2631
        %v2633 = vlaneseq
        %v2634 = vshrl.u32 %v2633, 7
        %v2635 = vsub.s32 %v2632, %v2634
        %v2636 = vrot.slane %v2629, %v2635
        %v2637 = vcombine.low %v2557, %v2558
        %v2639 = vunpack.c.l.s4 1983009808
        %v2640 = vunpack.c.0.s8 %v2639
        %v2641 = vlaneseq
        %v2642 = vshrl.u32 %v2641, 7
        %v2643 = vsub.s32 %v2640, %v2642
        %v2644 = vrot.slane %v2637, %v2643
        %v2645 = vcombine.low %v2549, %v2556
        %v2647 = vunpack.c.l.s4 1983009808
        %v2648 = vunpack.c.0.s8 %v2647
        %v2649 = vlaneseq
        %v2650 = vshrl.u32 %v2649, 7
        %v2651 = vsub.s32 %v2648, %v2650
        %v2652 = vrot.slane %v2645, %v2651
        %v2653 = vcombine.low %v2559, %v2560
        %v2655 = vunpack.c.l.s4 1983009808
        %v2656 = vunpack.c.0.s8 %v2655
        %v2657 = vlaneseq
        %v2658 = vshrl.u32 %v2657, 7
        %v2659 = vsub.s32 %v2656, %v2658
        %v2660 = vrot.slane %v2653, %v2659
        %v2661 = vcombine.low %v2636, %v2644
        %v2662 = vcombine.high %v2636, %v2644
        %v2664 = vunpack.c.l.s4 1934713408
        %v2665 = vunpack.c.0.s8 %v2664
        %v2666 = vlaneseq
        %v2667 = vshrl.u32 %v2666, 7
        %v2668 = vsub.s32 %v2665, %v2667
        %v2669 = vrot.slane %v2661, %v2668
        %v2671 = vunpack.c.l.s4 1934713408
        %v2672 = vunpack.c.0.s8 %v2671
        %v2673 = vlaneseq
        %v2674 = vshrl.u32 %v2673, 7
        %v2675 = vsub.s32 %v2672, %v2674
        %v2676 = vrot.slane %v2662, %v2675
        %v2677 = vcombine.low %v2652, %v2660
        %v2678 = vcombine.high %v2652, %v2660
        %v2680 = vunpack.c.l.s4 1934713408
        %v2681 = vunpack.c.0.s8 %v2680
        %v2682 = vlaneseq
        %v2683 = vshrl.u32 %v2682, 7
        %v2684 = vsub.s32 %v2681, %v2683
        %v2685 = vrot.slane %v2677, %v2684
        %v2687 = vunpack.c.l.s4 1934713408
        %v2688 = vunpack.c.0.s8 %v2687
        %v2689 = vlaneseq
        %v2690 = vshrl.u32 %v2689, 7
        %v2691 = vsub.s32 %v2688, %v2690
        %v2692 = vrot.slane %v2678, %v2691
        %v2693 = vcombine.low %v2669, %v2685
        %v2694 = vcombine.high %v2669, %v2685
        %v2695 = vcombine.low %v2676, %v2692
        %v2696 = vcombine.high %v2676, %v2692
        %v2697 = vcombine.low %v2601, %v2608
        %v2699 = vunpack.c.l.s4 1983009808
        %v2700 = vunpack.c.0.s8 %v2699
        %v2701 = vlaneseq
        %v2702 = vshrl.u32 %v2701, 7
        %v2703 = vsub.s32 %v2700, %v2702
        %v2704 = vrot.slane %v2697, %v2703
        %v2705 = vcombine.low %v2625, %v2626
        %v2707 = vunpack.c.l.s4 1983009808
        %v2708 = vunpack.c.0.s8 %v2707
        %v2709 = vlaneseq
        %v2710 = vshrl.u32 %v2709, 7
        %v2711 = vsub.s32 %v2708, %v2710
        %v2712 = vrot.slane %v2705, %v2711
        %v2713 = vcombine.low %v2617, %v2624
        %v2715 = vunpack.c.l.s4 1983009808
        %v2716 = vunpack.c.0.s8 %v2715
        %v2717 = vlaneseq
        %v2718 = vshrl.u32 %v2717, 7
        %v2719 = vsub.s32 %v2716, %v2718
        %v2720 = vrot.slane %v2713, %v2719
        %v2721 = vcombine.low %v2627, %v2628
        %v2723 = vunpack.c.l.s4 1983009808
        %v2724 = vunpack.c.0.s8 %v2723
        %v2725 = vlaneseq
        %v2726 = vshrl.u32 %v2725, 7
        %v2727 = vsub.s32 %v2724, %v2726
        %v2728 = vrot.slane %v2721, %v2727
        %v2729 = vcombine.low %v2704, %v2712
        %v2730 = vcombine.high %v2704, %v2712
        %v2732 = vunpack.c.l.s4 1934713408
        %v2733 = vunpack.c.0.s8 %v2732
        %v2734 = vlaneseq
        %v2735 = vshrl.u32 %v2734, 7
        %v2736 = vsub.s32 %v2733, %v2735
        %v2737 = vrot.slane %v2729, %v2736
        %v2739 = vunpack.c.l.s4 1934713408
        %v2740 = vunpack.c.0.s8 %v2739
        %v2741 = vlaneseq
        %v2742 = vshrl.u32 %v2741, 7
        %v2743 = vsub.s32 %v2740, %v2742
        %v2744 = vrot.slane %v2730, %v2743
        %v2745 = vcombine.low %v2720, %v2728
        %v2746 = vcombine.high %v2720, %v2728
        %v2748 = vunpack.c.l.s4 1934713408
        %v2749 = vunpack.c.0.s8 %v2748
        %v2750 = vlaneseq
        %v2751 = vshrl.u32 %v2750, 7
        %v2752 = vsub.s32 %v2749, %v2751
        %v2753 = vrot.slane %v2745, %v2752
        %v2755 = vunpack.c.l.s4 1934713408
        %v2756 = vunpack.c.0.s8 %v2755
        %v2757 = vlaneseq
        %v2758 = vshrl.u32 %v2757, 7
        %v2759 = vsub.s32 %v2756, %v2758
        %v2760 = vrot.slane %v2746, %v2759
        %v2761 = vcombine.low %v2737, %v2753
        %v2762 = vcombine.high %v2737, %v2753
        %v2763 = vcombine.low %v2744, %v2760
        %v2764 = vcombine.high %v2744, %v2760
        %2767 = vrot.lane.b32.xlu0 %v2319, 120
        %v2768 = vpop.permute.xlu0 %2767
        %2769 = vrot.lane.b32.xlu0 %v2324, 120
        %v2770 = vpop.permute.xlu0 %2769
        %2773 = vrot.lane.b32.xlu0 %v2319, 112
        %v2774 = vpop.permute.xlu0 %2773
        %2775 = vrot.lane.b32.xlu0 %v2324, 112
        %v2776 = vpop.permute.xlu0 %2775
        %2779 = vrot.lane.b32.xlu0 %v2319, 104
        %v2780 = vpop.permute.xlu0 %2779
        %2781 = vrot.lane.b32.xlu0 %v2324, 104
        %v2782 = vpop.permute.xlu0 %2781
        %v2785 = vcombine.low %v2319, %v2774
        %v2786 = vcombine.high %v2319, %v2774
        %v2788 = vunpack.c.l.s4 1983009808
        %v2789 = vunpack.c.0.s8 %v2788
        %v2790 = vlaneseq
        %v2791 = vshrl.u32 %v2790, 7
        %v2792 = vsub.s32 %v2789, %v2791
        %v2793 = vrot.slane %v2785, %v2792
        %v2795 = vunpack.c.l.s4 1983009808
        %v2796 = vunpack.c.0.s8 %v2795
        %v2797 = vlaneseq
        %v2798 = vshrl.u32 %v2797, 7
        %v2799 = vsub.s32 %v2796, %v2798
        %v2800 = vrot.slane %v2786, %v2799
        %v2801 = vcombine.low %v2768, %v2780
        %v2802 = vcombine.high %v2768, %v2780
        %v2804 = vunpack.c.l.s4 1983009808
        %v2805 = vunpack.c.0.s8 %v2804
        %v2806 = vlaneseq
        %v2807 = vshrl.u32 %v2806, 7
        %v2808 = vsub.s32 %v2805, %v2807
        %v2809 = vrot.slane %v2801, %v2808
        %v2811 = vunpack.c.l.s4 1983009808
        %v2812 = vunpack.c.0.s8 %v2811
        %v2813 = vlaneseq
        %v2814 = vshrl.u32 %v2813, 7
        %v2815 = vsub.s32 %v2812, %v2814
        %v2816 = vrot.slane %v2802, %v2815
        %v2817 = vcombine.low %v2793, %v2809
        %v2818 = vcombine.high %v2793, %v2809
        %v2820 = vunpack.c.l.s4 1934713408
        %v2821 = vunpack.c.0.s8 %v2820
        %v2822 = vlaneseq
        %v2823 = vshrl.u32 %v2822, 7
        %v2824 = vsub.s32 %v2821, %v2823
        %v2825 = vrot.slane %v2817, %v2824
        %v2827 = vunpack.c.l.s4 1934713408
        %v2828 = vunpack.c.0.s8 %v2827
        %v2829 = vlaneseq
        %v2830 = vshrl.u32 %v2829, 7
        %v2831 = vsub.s32 %v2828, %v2830
        %v2832 = vrot.slane %v2818, %v2831
        %v2833 = vcombine.low %v2800, %v2816
        %v2834 = vcombine.high %v2800, %v2816
        %v2836 = vunpack.c.l.s4 1934713408
        %v2837 = vunpack.c.0.s8 %v2836
        %v2838 = vlaneseq
        %v2839 = vshrl.u32 %v2838, 7
        %v2840 = vsub.s32 %v2837, %v2839
        %v2841 = vrot.slane %v2833, %v2840
        %v2843 = vunpack.c.l.s4 1934713408
        %v2844 = vunpack.c.0.s8 %v2843
        %v2845 = vlaneseq
        %v2846 = vshrl.u32 %v2845, 7
        %v2847 = vsub.s32 %v2844, %v2846
        %v2848 = vrot.slane %v2834, %v2847
        %v2849 = vcombine.high %v2825, 0.0
        %v2850 = vcombine.high %v2832, 0.0
        %v2851 = vcombine.high %v2841, 0.0
        %v2852 = vcombine.high %v2848, 0.0
        %v2853 = vcombine.low %v2324, %v2776
        %v2854 = vcombine.high %v2324, %v2776
        %v2856 = vunpack.c.l.s4 1983009808
        %v2857 = vunpack.c.0.s8 %v2856
        %v2858 = vlaneseq
        %v2859 = vshrl.u32 %v2858, 7
        %v2860 = vsub.s32 %v2857, %v2859
        %v2861 = vrot.slane %v2853, %v2860
        %v2863 = vunpack.c.l.s4 1983009808
        %v2864 = vunpack.c.0.s8 %v2863
        %v2865 = vlaneseq
        %v2866 = vshrl.u32 %v2865, 7
        %v2867 = vsub.s32 %v2864, %v2866
        %v2868 = vrot.slane %v2854, %v2867
        %v2869 = vcombine.low %v2770, %v2782
        %v2870 = vcombine.high %v2770, %v2782
        %v2872 = vunpack.c.l.s4 1983009808
        %v2873 = vunpack.c.0.s8 %v2872
        %v2874 = vlaneseq
        %v2875 = vshrl.u32 %v2874, 7
        %v2876 = vsub.s32 %v2873, %v2875
        %v2877 = vrot.slane %v2869, %v2876
        %v2879 = vunpack.c.l.s4 1983009808
        %v2880 = vunpack.c.0.s8 %v2879
        %v2881 = vlaneseq
        %v2882 = vshrl.u32 %v2881, 7
        %v2883 = vsub.s32 %v2880, %v2882
        %v2884 = vrot.slane %v2870, %v2883
        %v2885 = vcombine.low %v2861, %v2877
        %v2886 = vcombine.high %v2861, %v2877
        %v2888 = vunpack.c.l.s4 1934713408
        %v2889 = vunpack.c.0.s8 %v2888
        %v2890 = vlaneseq
        %v2891 = vshrl.u32 %v2890, 7
        %v2892 = vsub.s32 %v2889, %v2891
        %v2893 = vrot.slane %v2885, %v2892
        %v2895 = vunpack.c.l.s4 1934713408
        %v2896 = vunpack.c.0.s8 %v2895
        %v2897 = vlaneseq
        %v2898 = vshrl.u32 %v2897, 7
        %v2899 = vsub.s32 %v2896, %v2898
        %v2900 = vrot.slane %v2886, %v2899
        %v2901 = vcombine.low %v2868, %v2884
        %v2902 = vcombine.high %v2868, %v2884
        %v2904 = vunpack.c.l.s4 1934713408
        %v2905 = vunpack.c.0.s8 %v2904
        %v2906 = vlaneseq
        %v2907 = vshrl.u32 %v2906, 7
        %v2908 = vsub.s32 %v2905, %v2907
        %v2909 = vrot.slane %v2901, %v2908
        %v2911 = vunpack.c.l.s4 1934713408
        %v2912 = vunpack.c.0.s8 %v2911
        %v2913 = vlaneseq
        %v2914 = vshrl.u32 %v2913, 7
        %v2915 = vsub.s32 %v2912, %v2914
        %v2916 = vrot.slane %v2902, %v2915
        %v2917 = vcombine.high %v2893, 0.0
        %v2918 = vcombine.high %v2900, 0.0
        %v2919 = vcombine.high %v2909, 0.0
        %v2920 = vcombine.high %v2916, 0.0
        %v2921 = vcombine.low %v2825, %v2832
        %v2923 = vunpack.c.l.s4 1983009808
        %v2924 = vunpack.c.0.s8 %v2923
        %v2925 = vlaneseq
        %v2926 = vshrl.u32 %v2925, 7
        %v2927 = vsub.s32 %v2924, %v2926
        %v2928 = vrot.slane %v2921, %v2927
        %v2929 = vcombine.low %v2849, %v2850
        %v2931 = vunpack.c.l.s4 1983009808
        %v2932 = vunpack.c.0.s8 %v2931
        %v2933 = vlaneseq
        %v2934 = vshrl.u32 %v2933, 7
        %v2935 = vsub.s32 %v2932, %v2934
        %v2936 = vrot.slane %v2929, %v2935
        %v2937 = vcombine.low %v2841, %v2848
        %v2939 = vunpack.c.l.s4 1983009808
        %v2940 = vunpack.c.0.s8 %v2939
        %v2941 = vlaneseq
        %v2942 = vshrl.u32 %v2941, 7
        %v2943 = vsub.s32 %v2940, %v2942
        %v2944 = vrot.slane %v2937, %v2943
        %v2945 = vcombine.low %v2851, %v2852
        %v2947 = vunpack.c.l.s4 1983009808
        %v2948 = vunpack.c.0.s8 %v2947
        %v2949 = vlaneseq
        %v2950 = vshrl.u32 %v2949, 7
        %v2951 = vsub.s32 %v2948, %v2950
        %v2952 = vrot.slane %v2945, %v2951
        %v2953 = vcombine.low %v2928, %v2936
        %v2954 = vcombine.high %v2928, %v2936
        %v2956 = vunpack.c.l.s4 1934713408
        %v2957 = vunpack.c.0.s8 %v2956
        %v2958 = vlaneseq
        %v2959 = vshrl.u32 %v2958, 7
        %v2960 = vsub.s32 %v2957, %v2959
        %v2961 = vrot.slane %v2953, %v2960
        %v2963 = vunpack.c.l.s4 1934713408
        %v2964 = vunpack.c.0.s8 %v2963
        %v2965 = vlaneseq
        %v2966 = vshrl.u32 %v2965, 7
        %v2967 = vsub.s32 %v2964, %v2966
        %v2968 = vrot.slane %v2954, %v2967
        %v2969 = vcombine.low %v2944, %v2952
        %v2970 = vcombine.high %v2944, %v2952
        %v2972 = vunpack.c.l.s4 1934713408
        %v2973 = vunpack.c.0.s8 %v2972
        %v2974 = vlaneseq
        %v2975 = vshrl.u32 %v2974, 7
        %v2976 = vsub.s32 %v2973, %v2975
        %v2977 = vrot.slane %v2969, %v2976
        %v2979 = vunpack.c.l.s4 1934713408
        %v2980 = vunpack.c.0.s8 %v2979
        %v2981 = vlaneseq
        %v2982 = vshrl.u32 %v2981, 7
        %v2983 = vsub.s32 %v2980, %v2982
        %v2984 = vrot.slane %v2970, %v2983
        %v2985 = vcombine.low %v2961, %v2977
        %v2986 = vcombine.high %v2961, %v2977
        %v2987 = vcombine.low %v2968, %v2984
        %v2988 = vcombine.high %v2968, %v2984
        %v2989 = vcombine.low %v2893, %v2900
        %v2991 = vunpack.c.l.s4 1983009808
        %v2992 = vunpack.c.0.s8 %v2991
        %v2993 = vlaneseq
        %v2994 = vshrl.u32 %v2993, 7
        %v2995 = vsub.s32 %v2992, %v2994
        %v2996 = vrot.slane %v2989, %v2995
        %v2997 = vcombine.low %v2917, %v2918
        %v2999 = vunpack.c.l.s4 1983009808
        %v3000 = vunpack.c.0.s8 %v2999
        %v3001 = vlaneseq
        %v3002 = vshrl.u32 %v3001, 7
        %v3003 = vsub.s32 %v3000, %v3002
        %v3004 = vrot.slane %v2997, %v3003
        %v3005 = vcombine.low %v2909, %v2916
        %v3007 = vunpack.c.l.s4 1983009808
        %v3008 = vunpack.c.0.s8 %v3007
        %v3009 = vlaneseq
        %v3010 = vshrl.u32 %v3009, 7
        %v3011 = vsub.s32 %v3008, %v3010
        %v3012 = vrot.slane %v3005, %v3011
        %v3013 = vcombine.low %v2919, %v2920
        %v3015 = vunpack.c.l.s4 1983009808
        %v3016 = vunpack.c.0.s8 %v3015
        %v3017 = vlaneseq
        %v3018 = vshrl.u32 %v3017, 7
        %v3019 = vsub.s32 %v3016, %v3018
        %v3020 = vrot.slane %v3013, %v3019
        %v3021 = vcombine.low %v2996, %v3004
        %v3022 = vcombine.high %v2996, %v3004
        %v3024 = vunpack.c.l.s4 1934713408
        %v3025 = vunpack.c.0.s8 %v3024
        %v3026 = vlaneseq
        %v3027 = vshrl.u32 %v3026, 7
        %v3028 = vsub.s32 %v3025, %v3027
        %v3029 = vrot.slane %v3021, %v3028
        %v3031 = vunpack.c.l.s4 1934713408
        %v3032 = vunpack.c.0.s8 %v3031
        %v3033 = vlaneseq
        %v3034 = vshrl.u32 %v3033, 7
        %v3035 = vsub.s32 %v3032, %v3034
        %v3036 = vrot.slane %v3022, %v3035
        %v3037 = vcombine.low %v3012, %v3020
        %v3038 = vcombine.high %v3012, %v3020
        %v3040 = vunpack.c.l.s4 1934713408
        %v3041 = vunpack.c.0.s8 %v3040
        %v3042 = vlaneseq
        %v3043 = vshrl.u32 %v3042, 7
        %v3044 = vsub.s32 %v3041, %v3043
        %v3045 = vrot.slane %v3037, %v3044
        %v3047 = vunpack.c.l.s4 1934713408
        %v3048 = vunpack.c.0.s8 %v3047
        %v3049 = vlaneseq
        %v3050 = vshrl.u32 %v3049, 7
        %v3051 = vsub.s32 %v3048, %v3050
        %v3052 = vrot.slane %v3038, %v3051
        %v3053 = vcombine.low %v3029, %v3045
        %v3054 = vcombine.high %v3029, %v3045
        %v3055 = vcombine.low %v3036, %v3052
        %v3056 = vcombine.high %v3036, %v3052
        %v3058 = vsel %vm1167, %v2469, 0
        %v3061 = vsel %vm1167, %v2693, 0
        %v3064 = vsel %vm1167, %v2761, 0
        %3066 = vmatprep.subr.mxu0 0.0
        %3067 = vmatpush1.xpose.msra.mxu0 %v3061
        %3068 = vmatprep.subr.mxu0 0.0
        %3069 = vmatpush1.xpose.msra.mxu0 %v3064
        %3070 = vmatprep.subr.mxu0 0.0
        %3071 = vmatpush1.xpose.msra.mxu0 0.0
        %3072 = vmatprep.subr.mxu0 0.0
        %3073 = vmatpush1.xpose.msra.mxu0 0.0
        %3074 = vmatprep.subr.mxu0 0.0
        %3075 = vmatpush1.xpose.msra.mxu0 0.0
        %3076 = vmatprep.subr.mxu0 0.0
        %3077 = vmatpush1.xpose.msra.mxu0 0.0
        %3078 = vmatprep.subr.mxu0 0.0
        %3079 = vmatpush1.xpose.msra.mxu0 0.0
        %3080 = vmatprep.subr.mxu0 0.0
        %3081 = vmatpush1.xpose.msra.mxu0 0.0
        %3082 = vmatprep.subr.mxu0 0.0
        %3083 = vmatpush1.xpose.msra.mxu0 0.0
        %3084 = vmatprep.subr.mxu0 0.0
        %3085 = vmatpush1.xpose.msra.mxu0 0.0
        %3086 = vmatprep.subr.mxu0 0.0
        %3087 = vmatpush1.xpose.msra.mxu0 0.0
        %3088 = vmatprep.subr.mxu0 0.0
        %3089 = vmatpush1.xpose.msra.mxu0 0.0
        %3090 = vmatprep.subr.mxu0 0.0
        %3091 = vmatpush1.xpose.msra.mxu0 0.0
        %3092 = vmatprep.subr.mxu0 0.0
        %3093 = vmatpush1.xpose.msra.mxu0 0.0
        %3094 = vmatprep.subr.mxu0 0.0
        %3095 = vmatpush1.xpose.msra.mxu0 0.0
        %3096 = vmatprep.subr.mxu0 0.0
        %3097 = vmatpush1.xpose.msra.mxu0 0.0
        %3098 = vmatprep.subr.mxu0 0.0
        %3099 = vmatpush1.xpose.msra.mxu0 0.0
        %3100 = vmatprep.subr.mxu0 0.0
        %3101 = vmatpush1.xpose.msra.mxu0 0.0
        %3102 = vmatprep.subr.mxu0 0.0
        %3103 = vmatpush1.xpose.msra.mxu0 0.0
        %3104 = vmatprep.subr.mxu0 0.0
        %3105 = vmatpush1.xpose.msra.mxu0 0.0
        %3106 = vmatprep.subr.mxu0 0.0
        %3107 = vmatpush1.xpose.msra.mxu0 0.0
        %3108 = vmatprep.subr.mxu0 0.0
        %3109 = vmatpush1.xpose.msra.mxu0 0.0
        %3110 = vmatprep.subr.mxu0 0.0
        %3111 = vmatpush1.xpose.msra.mxu0 0.0
        %3112 = vmatprep.subr.mxu0 0.0
        %3113 = vmatpush1.xpose.msra.mxu0 0.0
        %3114 = vmatprep.subr.mxu0 0.0
        %3115 = vmatpush1.xpose.msra.mxu0 0.0
        %3116 = vmatprep.subr.mxu0 0.0
        %3117 = vmatpush1.xpose.msra.mxu0 0.0
        %3118 = vmatprep.subr.mxu0 0.0
        %3119 = vmatpush1.xpose.msra.mxu0 0.0
        %3120 = vmatprep.subr.mxu0 0.0
        %3121 = vmatpush1.xpose.msra.mxu0 0.0
        %3122 = vmatprep.subr.mxu0 0.0
        %3123 = vmatpush1.xpose.msra.mxu0 0.0
        %3124 = vmatprep.subr.mxu0 0.0
        %3125 = vmatpush1.xpose.msra.mxu0 0.0
        %3126 = vmatprep.subr.mxu0 0.0
        %3127 = vmatpush1.xpose.msra.mxu0 0.0
        %3128 = vmatprep.subr.mxu0 0.0
        %3129 = vmatpush1.xpose.msra.mxu0 0.0
        %3130 = vmatprep.mubr.f32.mxu0 0.0
        %3131 = vmatmul.mubr.f32.gmra.mrb[0].mxu0 %v3058
        %v3132 = vpop.f32.mrb[0].mxu0
        %v3133 = vadd.f32 0.0, %v3132
        %v3134 = vpop.f32.mrb[0].mxu0
        %3135 = vdwg.mxu0
        %v3137 = vsel %vm1167, %v2470, 0
        %v3140 = vsel %vm1167, %v2694, 0
        %v3143 = vsel %vm1167, %v2762, 0
        %3145 = vmatprep.subr.mxu0 0.0
        %3146 = vmatpush1.xpose.msra.mxu0 %v3140
        %3147 = vmatprep.subr.mxu0 0.0
        %3148 = vmatpush1.xpose.msra.mxu0 %v3143
        %3149 = vmatprep.subr.mxu0 0.0
        %3150 = vmatpush1.xpose.msra.mxu0 0.0
        %3151 = vmatprep.subr.mxu0 0.0
        %3152 = vmatpush1.xpose.msra.mxu0 0.0
        %3153 = vmatprep.subr.mxu0 0.0
        %3154 = vmatpush1.xpose.msra.mxu0 0.0
        %3155 = vmatprep.subr.mxu0 0.0
        %3156 = vmatpush1.xpose.msra.mxu0 0.0
        %3157 = vmatprep.subr.mxu0 0.0
        %3158 = vmatpush1.xpose.msra.mxu0 0.0
        %3159 = vmatprep.subr.mxu0 0.0
        %3160 = vmatpush1.xpose.msra.mxu0 0.0
        %3161 = vmatprep.subr.mxu0 0.0
        %3162 = vmatpush1.xpose.msra.mxu0 0.0
        %3163 = vmatprep.subr.mxu0 0.0
        %3164 = vmatpush1.xpose.msra.mxu0 0.0
        %3165 = vmatprep.subr.mxu0 0.0
        %3166 = vmatpush1.xpose.msra.mxu0 0.0
        %3167 = vmatprep.subr.mxu0 0.0
        %3168 = vmatpush1.xpose.msra.mxu0 0.0
        %3169 = vmatprep.subr.mxu0 0.0
        %3170 = vmatpush1.xpose.msra.mxu0 0.0
        %3171 = vmatprep.subr.mxu0 0.0
        %3172 = vmatpush1.xpose.msra.mxu0 0.0
        %3173 = vmatprep.subr.mxu0 0.0
        %3174 = vmatpush1.xpose.msra.mxu0 0.0
        %3175 = vmatprep.subr.mxu0 0.0
        %3176 = vmatpush1.xpose.msra.mxu0 0.0
        %3177 = vmatprep.subr.mxu0 0.0
        %3178 = vmatpush1.xpose.msra.mxu0 0.0
        %3179 = vmatprep.subr.mxu0 0.0
        %3180 = vmatpush1.xpose.msra.mxu0 0.0
        %3181 = vmatprep.subr.mxu0 0.0
        %3182 = vmatpush1.xpose.msra.mxu0 0.0
        %3183 = vmatprep.subr.mxu0 0.0
        %3184 = vmatpush1.xpose.msra.mxu0 0.0
        %3185 = vmatprep.subr.mxu0 0.0
        %3186 = vmatpush1.xpose.msra.mxu0 0.0
        %3187 = vmatprep.subr.mxu0 0.0
        %3188 = vmatpush1.xpose.msra.mxu0 0.0
        %3189 = vmatprep.subr.mxu0 0.0
        %3190 = vmatpush1.xpose.msra.mxu0 0.0
        %3191 = vmatprep.subr.mxu0 0.0
        %3192 = vmatpush1.xpose.msra.mxu0 0.0
        %3193 = vmatprep.subr.mxu0 0.0
        %3194 = vmatpush1.xpose.msra.mxu0 0.0
        %3195 = vmatprep.subr.mxu0 0.0
        %3196 = vmatpush1.xpose.msra.mxu0 0.0
        %3197 = vmatprep.subr.mxu0 0.0
        %3198 = vmatpush1.xpose.msra.mxu0 0.0
        %3199 = vmatprep.subr.mxu0 0.0
        %3200 = vmatpush1.xpose.msra.mxu0 0.0
        %3201 = vmatprep.subr.mxu0 0.0
        %3202 = vmatpush1.xpose.msra.mxu0 0.0
        %3203 = vmatprep.subr.mxu0 0.0
        %3204 = vmatpush1.xpose.msra.mxu0 0.0
        %3205 = vmatprep.subr.mxu0 0.0
        %3206 = vmatpush1.xpose.msra.mxu0 0.0
        %3207 = vmatprep.subr.mxu0 0.0
        %3208 = vmatpush1.xpose.msra.mxu0 0.0
        %3209 = vmatprep.mubr.f32.mxu0 0.0
        %3210 = vmatmul.mubr.f32.gmra.mrb[0].mxu0 %v3137
        %v3211 = vpop.f32.mrb[0].mxu0
        %v3212 = vadd.f32 0.0, %v3211
        %v3213 = vpop.f32.mrb[0].mxu0
        %3214 = vdwg.mxu0
        %v3216 = vsel %vm1167, %v2471, 0
        %v3219 = vsel %vm1167, %v2695, 0
        %v3222 = vsel %vm1167, %v2763, 0
        %3224 = vmatprep.subr.mxu0 0.0
        %3225 = vmatpush1.xpose.msra.mxu0 %v3219
        %3226 = vmatprep.subr.mxu0 0.0
        %3227 = vmatpush1.xpose.msra.mxu0 %v3222
        %3228 = vmatprep.subr.mxu0 0.0
        %3229 = vmatpush1.xpose.msra.mxu0 0.0
        %3230 = vmatprep.subr.mxu0 0.0
        %3231 = vmatpush1.xpose.msra.mxu0 0.0
        %3232 = vmatprep.subr.mxu0 0.0
        %3233 = vmatpush1.xpose.msra.mxu0 0.0
        %3234 = vmatprep.subr.mxu0 0.0
        %3235 = vmatpush1.xpose.msra.mxu0 0.0
        %3236 = vmatprep.subr.mxu0 0.0
        %3237 = vmatpush1.xpose.msra.mxu0 0.0
        %3238 = vmatprep.subr.mxu0 0.0
        %3239 = vmatpush1.xpose.msra.mxu0 0.0
        %3240 = vmatprep.subr.mxu0 0.0
        %3241 = vmatpush1.xpose.msra.mxu0 0.0
        %3242 = vmatprep.subr.mxu0 0.0
        %3243 = vmatpush1.xpose.msra.mxu0 0.0
        %3244 = vmatprep.subr.mxu0 0.0
        %3245 = vmatpush1.xpose.msra.mxu0 0.0
        %3246 = vmatprep.subr.mxu0 0.0
        %3247 = vmatpush1.xpose.msra.mxu0 0.0
        %3248 = vmatprep.subr.mxu0 0.0
        %3249 = vmatpush1.xpose.msra.mxu0 0.0
        %3250 = vmatprep.subr.mxu0 0.0
        %3251 = vmatpush1.xpose.msra.mxu0 0.0
        %3252 = vmatprep.subr.mxu0 0.0
        %3253 = vmatpush1.xpose.msra.mxu0 0.0
        %3254 = vmatprep.subr.mxu0 0.0
        %3255 = vmatpush1.xpose.msra.mxu0 0.0
        %3256 = vmatprep.subr.mxu0 0.0
        %3257 = vmatpush1.xpose.msra.mxu0 0.0
        %3258 = vmatprep.subr.mxu0 0.0
        %3259 = vmatpush1.xpose.msra.mxu0 0.0
        %3260 = vmatprep.subr.mxu0 0.0
        %3261 = vmatpush1.xpose.msra.mxu0 0.0
        %3262 = vmatprep.subr.mxu0 0.0
        %3263 = vmatpush1.xpose.msra.mxu0 0.0
        %3264 = vmatprep.subr.mxu0 0.0
        %3265 = vmatpush1.xpose.msra.mxu0 0.0
        %3266 = vmatprep.subr.mxu0 0.0
        %3267 = vmatpush1.xpose.msra.mxu0 0.0
        %3268 = vmatprep.subr.mxu0 0.0
        %3269 = vmatpush1.xpose.msra.mxu0 0.0
        %3270 = vmatprep.subr.mxu0 0.0
        %3271 = vmatpush1.xpose.msra.mxu0 0.0
        %3272 = vmatprep.subr.mxu0 0.0
        %3273 = vmatpush1.xpose.msra.mxu0 0.0
        %3274 = vmatprep.subr.mxu0 0.0
        %3275 = vmatpush1.xpose.msra.mxu0 0.0
        %3276 = vmatprep.subr.mxu0 0.0
        %3277 = vmatpush1.xpose.msra.mxu0 0.0
        %3278 = vmatprep.subr.mxu0 0.0
        %3279 = vmatpush1.xpose.msra.mxu0 0.0
        %3280 = vmatprep.subr.mxu0 0.0
        %3281 = vmatpush1.xpose.msra.mxu0 0.0
        %3282 = vmatprep.subr.mxu0 0.0
        %3283 = vmatpush1.xpose.msra.mxu0 0.0
        %3284 = vmatprep.subr.mxu0 0.0
        %3285 = vmatpush1.xpose.msra.mxu0 0.0
        %3286 = vmatprep.subr.mxu0 0.0
        %3287 = vmatpush1.xpose.msra.mxu0 0.0
        %3288 = vmatprep.mubr.f32.mxu0 0.0
        %3289 = vmatmul.mubr.f32.gmra.mrb[0].mxu0 %v3216
        %v3290 = vpop.f32.mrb[0].mxu0
        %v3291 = vadd.f32 0.0, %v3290
        %v3292 = vpop.f32.mrb[0].mxu0
        %3293 = vdwg.mxu0
        %v3295 = vsel %vm1167, %v2472, 0
        %v3298 = vsel %vm1167, %v2696, 0
        %v3301 = vsel %vm1167, %v2764, 0
        %3303 = vmatprep.subr.mxu0 0.0
        %3304 = vmatpush1.xpose.msra.mxu0 %v3298
        %3305 = vmatprep.subr.mxu0 0.0
        %3306 = vmatpush1.xpose.msra.mxu0 %v3301
        %3307 = vmatprep.subr.mxu0 0.0
        %3308 = vmatpush1.xpose.msra.mxu0 0.0
        %3309 = vmatprep.subr.mxu0 0.0
        %3310 = vmatpush1.xpose.msra.mxu0 0.0
        %3311 = vmatprep.subr.mxu0 0.0
        %3312 = vmatpush1.xpose.msra.mxu0 0.0
        %3313 = vmatprep.subr.mxu0 0.0
        %3314 = vmatpush1.xpose.msra.mxu0 0.0
        %3315 = vmatprep.subr.mxu0 0.0
        %3316 = vmatpush1.xpose.msra.mxu0 0.0
        %3317 = vmatprep.subr.mxu0 0.0
        %3318 = vmatpush1.xpose.msra.mxu0 0.0
        %3319 = vmatprep.subr.mxu0 0.0
        %3320 = vmatpush1.xpose.msra.mxu0 0.0
        %3321 = vmatprep.subr.mxu0 0.0
        %3322 = vmatpush1.xpose.msra.mxu0 0.0
        %3323 = vmatprep.subr.mxu0 0.0
        %3324 = vmatpush1.xpose.msra.mxu0 0.0
        %3325 = vmatprep.subr.mxu0 0.0
        %3326 = vmatpush1.xpose.msra.mxu0 0.0
        %3327 = vmatprep.subr.mxu0 0.0
        %3328 = vmatpush1.xpose.msra.mxu0 0.0
        %3329 = vmatprep.subr.mxu0 0.0
        %3330 = vmatpush1.xpose.msra.mxu0 0.0
        %3331 = vmatprep.subr.mxu0 0.0
        %3332 = vmatpush1.xpose.msra.mxu0 0.0
        %3333 = vmatprep.subr.mxu0 0.0
        %3334 = vmatpush1.xpose.msra.mxu0 0.0
        %3335 = vmatprep.subr.mxu0 0.0
        %3336 = vmatpush1.xpose.msra.mxu0 0.0
        %3337 = vmatprep.subr.mxu0 0.0
        %3338 = vmatpush1.xpose.msra.mxu0 0.0
        %3339 = vmatprep.subr.mxu0 0.0
        %3340 = vmatpush1.xpose.msra.mxu0 0.0
        %3341 = vmatprep.subr.mxu0 0.0
        %3342 = vmatpush1.xpose.msra.mxu0 0.0
        %3343 = vmatprep.subr.mxu0 0.0
        %3344 = vmatpush1.xpose.msra.mxu0 0.0
        %3345 = vmatprep.subr.mxu0 0.0
        %3346 = vmatpush1.xpose.msra.mxu0 0.0
        %3347 = vmatprep.subr.mxu0 0.0
        %3348 = vmatpush1.xpose.msra.mxu0 0.0
        %3349 = vmatprep.subr.mxu0 0.0
        %3350 = vmatpush1.xpose.msra.mxu0 0.0
        %3351 = vmatprep.subr.mxu0 0.0
        %3352 = vmatpush1.xpose.msra.mxu0 0.0
        %3353 = vmatprep.subr.mxu0 0.0
        %3354 = vmatpush1.xpose.msra.mxu0 0.0
        %3355 = vmatprep.subr.mxu0 0.0
        %3356 = vmatpush1.xpose.msra.mxu0 0.0
        %3357 = vmatprep.subr.mxu0 0.0
        %3358 = vmatpush1.xpose.msra.mxu0 0.0
        %3359 = vmatprep.subr.mxu0 0.0
        %3360 = vmatpush1.xpose.msra.mxu0 0.0
        %3361 = vmatprep.subr.mxu0 0.0
        %3362 = vmatpush1.xpose.msra.mxu0 0.0
        %3363 = vmatprep.subr.mxu0 0.0
        %3364 = vmatpush1.xpose.msra.mxu0 0.0
        %3365 = vmatprep.subr.mxu0 0.0
        %3366 = vmatpush1.xpose.msra.mxu0 0.0
        %3367 = vmatprep.mubr.f32.mxu0 0.0
        %3368 = vmatmul.mubr.f32.gmra.mrb[0].mxu0 %v3295
        %v3369 = vpop.f32.mrb[0].mxu0
        %v3370 = vadd.f32 0.0, %v3369
        %v3371 = vpop.f32.mrb[0].mxu0
        %3372 = vdwg.mxu0
        %v3373 = vsel %vm1957, %v3133, -inf
        %3374 = vmax.xlane.f32.xlu0 %v3373
        %v3375 = vpop.xlane.xlu0 %3374
        %v3376 = vsel %vm1957, %v3212, -inf
        %3377 = vmax.xlane.f32.xlu0 %v3376
        %v3378 = vpop.xlane.xlu0 %3377
        %v3379 = vsel %vm1957, %v3291, -inf
        %3380 = vmax.xlane.f32.xlu0 %v3379
        %v3381 = vpop.xlane.xlu0 %3380
        %v3382 = vsel %vm1957, %v3370, -inf
        %3383 = vmax.xlane.f32.xlu0 %v3382
        %v3384 = vpop.xlane.xlu0 %3383
        %v3385 = vsub.f32 %v3133, %v3375
        %v3386 = vsub.f32 %v3212, %v3378
        %v3387 = vsub.f32 %v3291, %v3381
        %v3388 = vsub.f32 %v3370, %v3384
        %v3389 = vmul.f32 %v3385, 1.442695
        %v3390 = vpow.pop %v3389
        %v3391 = vmul.f32 %v3386, 1.442695
        %v3392 = vpow.pop %v3391
        %v3393 = vmul.f32 %v3387, 1.442695
        %v3394 = vpow.pop %v3393
        %v3395 = vmul.f32 %v3388, 1.442695
        %v3396 = vpow.pop %v3395
        %v3397 = vsel %vm1957, %v3390, 0.0
        %3398 = vadd.xlane.f32.xlu0 %v3397
        %v3399 = vpop.xlane.xlu0 %3398
        %v3400 = vsel %vm1957, %v3392, 0.0
        %3401 = vadd.xlane.f32.xlu0 %v3400
        %v3402 = vpop.xlane.xlu0 %3401
        %v3403 = vsel %vm1957, %v3394, 0.0
        %3404 = vadd.xlane.f32.xlu0 %v3403
        %v3405 = vpop.xlane.xlu0 %3404
        %v3406 = vsel %vm1957, %v3396, 0.0
        %3407 = vadd.xlane.f32.xlu0 %v3406
        %v3408 = vpop.xlane.xlu0 %3407
        %v3409 = vrcp.pop %v3399
        %v3410 = vrcp.pop %v3402
        %v3411 = vrcp.pop %v3405
        %v3412 = vrcp.pop %v3408
        %v3413 = vmul.f32 %v3390, %v3409
        %v3414 = vmul.f32 %v3392, %v3410
        %v3415 = vmul.f32 %v3394, %v3411
        %v3416 = vmul.f32 %v3396, %v3412
        %v3418 = vsel %vm1957, %v3413, 0
        %3420 = vmatprep.subr.mxu0 0.0
        %3421 = vmatpush1.msra.mxu0 %v2985
        %3422 = vmatprep.subr.mxu0 0.0
        %3423 = vmatpush1.msra.mxu0 %v3053
        %3424 = vmatprep.subr.mxu0 0.0
        %3425 = vmatpush1.msra.mxu0 0.0
        %3426 = vmatprep.subr.mxu0 0.0
        %3427 = vmatpush1.msra.mxu0 0.0
        %3428 = vmatprep.subr.mxu0 0.0
        %3429 = vmatpush1.msra.mxu0 0.0
        %3430 = vmatprep.subr.mxu0 0.0
        %3431 = vmatpush1.msra.mxu0 0.0
        %3432 = vmatprep.subr.mxu0 0.0
        %3433 = vmatpush1.msra.mxu0 0.0
        %3434 = vmatprep.subr.mxu0 0.0
        %3435 = vmatpush1.msra.mxu0 0.0
        %3436 = vmatprep.subr.mxu0 0.0
        %3437 = vmatpush1.msra.mxu0 0.0
        %3438 = vmatprep.subr.mxu0 0.0
        %3439 = vmatpush1.msra.mxu0 0.0
        %3440 = vmatprep.subr.mxu0 0.0
        %3441 = vmatpush1.msra.mxu0 0.0
        %3442 = vmatprep.subr.mxu0 0.0
        %3443 = vmatpush1.msra.mxu0 0.0
        %3444 = vmatprep.subr.mxu0 0.0
        %3445 = vmatpush1.msra.mxu0 0.0
        %3446 = vmatprep.subr.mxu0 0.0
        %3447 = vmatpush1.msra.mxu0 0.0
        %3448 = vmatprep.subr.mxu0 0.0
        %3449 = vmatpush1.msra.mxu0 0.0
        %3450 = vmatprep.subr.mxu0 0.0
        %3451 = vmatpush1.msra.mxu0 0.0
        %3452 = vmatprep.subr.mxu0 0.0
        %3453 = vmatpush1.msra.mxu0 0.0
        %3454 = vmatprep.subr.mxu0 0.0
        %3455 = vmatpush1.msra.mxu0 0.0
        %3456 = vmatprep.subr.mxu0 0.0
        %3457 = vmatpush1.msra.mxu0 0.0
        %3458 = vmatprep.subr.mxu0 0.0
        %3459 = vmatpush1.msra.mxu0 0.0
        %3460 = vmatprep.subr.mxu0 0.0
        %3461 = vmatpush1.msra.mxu0 0.0
        %3462 = vmatprep.subr.mxu0 0.0
        %3463 = vmatpush1.msra.mxu0 0.0
        %3464 = vmatprep.subr.mxu0 0.0
        %3465 = vmatpush1.msra.mxu0 0.0
        %3466 = vmatprep.subr.mxu0 0.0
        %3467 = vmatpush1.msra.mxu0 0.0
        %3468 = vmatprep.subr.mxu0 0.0
        %3469 = vmatpush1.msra.mxu0 0.0
        %3470 = vmatprep.subr.mxu0 0.0
        %3471 = vmatpush1.msra.mxu0 0.0
        %3472 = vmatprep.subr.mxu0 0.0
        %3473 = vmatpush1.msra.mxu0 0.0
        %3474 = vmatprep.subr.mxu0 0.0
        %3475 = vmatpush1.msra.mxu0 0.0
        %3476 = vmatprep.subr.mxu0 0.0
        %3477 = vmatpush1.msra.mxu0 0.0
        %3478 = vmatprep.subr.mxu0 0.0
        %3479 = vmatpush1.msra.mxu0 0.0
        %3480 = vmatprep.subr.mxu0 0.0
        %3481 = vmatpush1.msra.mxu0 0.0
        %3482 = vmatprep.subr.mxu0 0.0
        %3483 = vmatpush1.msra.mxu0 0.0
        %3484 = vmatprep.mubr.f32.mxu0 0.0
        %3485 = vmatmul.mubr.f32.gmra.mrb[0].mxu0 %v3418
        %v3486 = vpop.f32.mrb[0].mxu0
        %v3487 = vadd.f32 0.0, %v3486
        %v3488 = vpop.f32.mrb[0].mxu0
        %3489 = vdwg.mxu0
        %v3491 = vsel %vm1957, %v3414, 0
        %3493 = vmatprep.subr.mxu0 0.0
        %3494 = vmatpush1.msra.mxu0 %v2986
        %3495 = vmatprep.subr.mxu0 0.0
        %3496 = vmatpush1.msra.mxu0 %v3054
        %3497 = vmatprep.subr.mxu0 0.0
        %3498 = vmatpush1.msra.mxu0 0.0
        %3499 = vmatprep.subr.mxu0 0.0
        %3500 = vmatpush1.msra.mxu0 0.0
        %3501 = vmatprep.subr.mxu0 0.0
        %3502 = vmatpush1.msra.mxu0 0.0
        %3503 = vmatprep.subr.mxu0 0.0
        %3504 = vmatpush1.msra.mxu0 0.0
        %3505 = vmatprep.subr.mxu0 0.0
        %3506 = vmatpush1.msra.mxu0 0.0
        %3507 = vmatprep.subr.mxu0 0.0
        %3508 = vmatpush1.msra.mxu0 0.0
        %3509 = vmatprep.subr.mxu0 0.0
        %3510 = vmatpush1.msra.mxu0 0.0
        %3511 = vmatprep.subr.mxu0 0.0
        %3512 = vmatpush1.msra.mxu0 0.0
        %3513 = vmatprep.subr.mxu0 0.0
        %3514 = vmatpush1.msra.mxu0 0.0
        %3515 = vmatprep.subr.mxu0 0.0
        %3516 = vmatpush1.msra.mxu0 0.0
        %3517 = vmatprep.subr.mxu0 0.0
        %3518 = vmatpush1.msra.mxu0 0.0
        %3519 = vmatprep.subr.mxu0 0.0
        %3520 = vmatpush1.msra.mxu0 0.0
        %3521 = vmatprep.subr.mxu0 0.0
        %3522 = vmatpush1.msra.mxu0 0.0
        %3523 = vmatprep.subr.mxu0 0.0
        %3524 = vmatpush1.msra.mxu0 0.0
        %3525 = vmatprep.subr.mxu0 0.0
        %3526 = vmatpush1.msra.mxu0 0.0
        %3527 = vmatprep.subr.mxu0 0.0
        %3528 = vmatpush1.msra.mxu0 0.0
        %3529 = vmatprep.subr.mxu0 0.0
        %3530 = vmatpush1.msra.mxu0 0.0
        %3531 = vmatprep.subr.mxu0 0.0
        %3532 = vmatpush1.msra.mxu0 0.0
        %3533 = vmatprep.subr.mxu0 0.0
        %3534 = vmatpush1.msra.mxu0 0.0
        %3535 = vmatprep.subr.mxu0 0.0
        %3536 = vmatpush1.msra.mxu0 0.0
        %3537 = vmatprep.subr.mxu0 0.0
        %3538 = vmatpush1.msra.mxu0 0.0
        %3539 = vmatprep.subr.mxu0 0.0
        %3540 = vmatpush1.msra.mxu0 0.0
        %3541 = vmatprep.subr.mxu0 0.0
        %3542 = vmatpush1.msra.mxu0 0.0
        %3543 = vmatprep.subr.mxu0 0.0
        %3544 = vmatpush1.msra.mxu0 0.0
        %3545 = vmatprep.subr.mxu0 0.0
        %3546 = vmatpush1.msra.mxu0 0.0
        %3547 = vmatprep.subr.mxu0 0.0
        %3548 = vmatpush1.msra.mxu0 0.0
        %3549 = vmatprep.subr.mxu0 0.0
        %3550 = vmatpush1.msra.mxu0 0.0
        %3551 = vmatprep.subr.mxu0 0.0
        %3552 = vmatpush1.msra.mxu0 0.0
        %3553 = vmatprep.subr.mxu0 0.0
        %3554 = vmatpush1.msra.mxu0 0.0
        %3555 = vmatprep.subr.mxu0 0.0
        %3556 = vmatpush1.msra.mxu0 0.0
        %3557 = vmatprep.mubr.f32.mxu0 0.0
        %3558 = vmatmul.mubr.f32.gmra.mrb[0].mxu0 %v3491
        %v3559 = vpop.f32.mrb[0].mxu0
        %v3560 = vadd.f32 0.0, %v3559
        %v3561 = vpop.f32.mrb[0].mxu0
        %3562 = vdwg.mxu0
        %v3564 = vsel %vm1957, %v3415, 0
        %3566 = vmatprep.subr.mxu0 0.0
        %3567 = vmatpush1.msra.mxu0 %v2987
        %3568 = vmatprep.subr.mxu0 0.0
        %3569 = vmatpush1.msra.mxu0 %v3055
        %3570 = vmatprep.subr.mxu0 0.0
        %3571 = vmatpush1.msra.mxu0 0.0
        %3572 = vmatprep.subr.mxu0 0.0
        %3573 = vmatpush1.msra.mxu0 0.0
        %3574 = vmatprep.subr.mxu0 0.0
        %3575 = vmatpush1.msra.mxu0 0.0
        %3576 = vmatprep.subr.mxu0 0.0
        %3577 = vmatpush1.msra.mxu0 0.0
        %3578 = vmatprep.subr.mxu0 0.0
        %3579 = vmatpush1.msra.mxu0 0.0
        %3580 = vmatprep.subr.mxu0 0.0
        %3581 = vmatpush1.msra.mxu0 0.0
        %3582 = vmatprep.subr.mxu0 0.0
        %3583 = vmatpush1.msra.mxu0 0.0
        %3584 = vmatprep.subr.mxu0 0.0
        %3585 = vmatpush1.msra.mxu0 0.0
        %3586 = vmatprep.subr.mxu0 0.0
        %3587 = vmatpush1.msra.mxu0 0.0
        %3588 = vmatprep.subr.mxu0 0.0
        %3589 = vmatpush1.msra.mxu0 0.0
        %3590 = vmatprep.subr.mxu0 0.0
        %3591 = vmatpush1.msra.mxu0 0.0
        %3592 = vmatprep.subr.mxu0 0.0
        %3593 = vmatpush1.msra.mxu0 0.0
        %3594 = vmatprep.subr.mxu0 0.0
        %3595 = vmatpush1.msra.mxu0 0.0
        %3596 = vmatprep.subr.mxu0 0.0
        %3597 = vmatpush1.msra.mxu0 0.0
        %3598 = vmatprep.subr.mxu0 0.0
        %3599 = vmatpush1.msra.mxu0 0.0
        %3600 = vmatprep.subr.mxu0 0.0
        %3601 = vmatpush1.msra.mxu0 0.0
        %3602 = vmatprep.subr.mxu0 0.0
        %3603 = vmatpush1.msra.mxu0 0.0
        %3604 = vmatprep.subr.mxu0 0.0
        %3605 = vmatpush1.msra.mxu0 0.0
        %3606 = vmatprep.subr.mxu0 0.0
        %3607 = vmatpush1.msra.mxu0 0.0
        %3608 = vmatprep.subr.mxu0 0.0
        %3609 = vmatpush1.msra.mxu0 0.0
        %3610 = vmatprep.subr.mxu0 0.0
        %3611 = vmatpush1.msra.mxu0 0.0
        %3612 = vmatprep.subr.mxu0 0.0
        %3613 = vmatpush1.msra.mxu0 0.0
        %3614 = vmatprep.subr.mxu0 0.0
        %3615 = vmatpush1.msra.mxu0 0.0
        %3616 = vmatprep.subr.mxu0 0.0
        %3617 = vmatpush1.msra.mxu0 0.0
        %3618 = vmatprep.subr.mxu0 0.0
        %3619 = vmatpush1.msra.mxu0 0.0
        %3620 = vmatprep.subr.mxu0 0.0
        %3621 = vmatpush1.msra.mxu0 0.0
        %3622 = vmatprep.subr.mxu0 0.0
        %3623 = vmatpush1.msra.mxu0 0.0
        %3624 = vmatprep.subr.mxu0 0.0
        %3625 = vmatpush1.msra.mxu0 0.0
        %3626 = vmatprep.subr.mxu0 0.0
        %3627 = vmatpush1.msra.mxu0 0.0
        %3628 = vmatprep.subr.mxu0 0.0
        %3629 = vmatpush1.msra.mxu0 0.0
        %3630 = vmatprep.mubr.f32.mxu0 0.0
        %3631 = vmatmul.mubr.f32.gmra.mrb[0].mxu0 %v3564
        %v3632 = vpop.f32.mrb[0].mxu0
        %v3633 = vadd.f32 0.0, %v3632
        %v3634 = vpop.f32.mrb[0].mxu0
        %3635 = vdwg.mxu0
        %v3637 = vsel %vm1957, %v3416, 0
        %3639 = vmatprep.subr.mxu0 0.0
        %3640 = vmatpush1.msra.mxu0 %v2988
        %3641 = vmatprep.subr.mxu0 0.0
        %3642 = vmatpush1.msra.mxu0 %v3056
        %3643 = vmatprep.subr.mxu0 0.0
        %3644 = vmatpush1.msra.mxu0 0.0
        %3645 = vmatprep.subr.mxu0 0.0
        %3646 = vmatpush1.msra.mxu0 0.0
        %3647 = vmatprep.subr.mxu0 0.0
        %3648 = vmatpush1.msra.mxu0 0.0
        %3649 = vmatprep.subr.mxu0 0.0
        %3650 = vmatpush1.msra.mxu0 0.0
        %3651 = vmatprep.subr.mxu0 0.0
        %3652 = vmatpush1.msra.mxu0 0.0
        %3653 = vmatprep.subr.mxu0 0.0
        %3654 = vmatpush1.msra.mxu0 0.0
        %3655 = vmatprep.subr.mxu0 0.0
        %3656 = vmatpush1.msra.mxu0 0.0
        %3657 = vmatprep.subr.mxu0 0.0
        %3658 = vmatpush1.msra.mxu0 0.0
        %3659 = vmatprep.subr.mxu0 0.0
        %3660 = vmatpush1.msra.mxu0 0.0
        %3661 = vmatprep.subr.mxu0 0.0
        %3662 = vmatpush1.msra.mxu0 0.0
        %3663 = vmatprep.subr.mxu0 0.0
        %3664 = vmatpush1.msra.mxu0 0.0
        %3665 = vmatprep.subr.mxu0 0.0
        %3666 = vmatpush1.msra.mxu0 0.0
        %3667 = vmatprep.subr.mxu0 0.0
        %3668 = vmatpush1.msra.mxu0 0.0
        %3669 = vmatprep.subr.mxu0 0.0
        %3670 = vmatpush1.msra.mxu0 0.0
        %3671 = vmatprep.subr.mxu0 0.0
        %3672 = vmatpush1.msra.mxu0 0.0
        %3673 = vmatprep.subr.mxu0 0.0
        %3674 = vmatpush1.msra.mxu0 0.0
        %3675 = vmatprep.subr.mxu0 0.0
        %3676 = vmatpush1.msra.mxu0 0.0
        %3677 = vmatprep.subr.mxu0 0.0
        %3678 = vmatpush1.msra.mxu0 0.0
        %3679 = vmatprep.subr.mxu0 0.0
        %3680 = vmatpush1.msra.mxu0 0.0
        %3681 = vmatprep.subr.mxu0 0.0
        %3682 = vmatpush1.msra.mxu0 0.0
        %3683 = vmatprep.subr.mxu0 0.0
        %3684 = vmatpush1.msra.mxu0 0.0
        %3685 = vmatprep.subr.mxu0 0.0
        %3686 = vmatpush1.msra.mxu0 0.0
        %3687 = vmatprep.subr.mxu0 0.0
        %3688 = vmatpush1.msra.mxu0 0.0
        %3689 = vmatprep.subr.mxu0 0.0
        %3690 = vmatpush1.msra.mxu0 0.0
        %3691 = vmatprep.subr.mxu0 0.0
        %3692 = vmatpush1.msra.mxu0 0.0
        %3693 = vmatprep.subr.mxu0 0.0
        %3694 = vmatpush1.msra.mxu0 0.0
        %3695 = vmatprep.subr.mxu0 0.0
        %3696 = vmatpush1.msra.mxu0 0.0
        %3697 = vmatprep.subr.mxu0 0.0
        %3698 = vmatpush1.msra.mxu0 0.0
        %3699 = vmatprep.subr.mxu0 0.0
        %3700 = vmatpush1.msra.mxu0 0.0
        %3701 = vmatprep.subr.mxu0 0.0
        %3702 = vmatpush1.msra.mxu0 0.0
        %3703 = vmatprep.mubr.f32.mxu0 0.0
        %3704 = vmatmul.mubr.f32.gmra.mrb[0].mxu0 %v3637
        %v3705 = vpop.f32.mrb[0].mxu0
        %v3706 = vadd.f32 0.0, %v3705
        %v3707 = vpop.f32.mrb[0].mxu0
        %3708 = vdwg.mxu0
        %v3709 = vcombine.low %v3487, %v3633
        %v3710 = vcombine.high %v3487, %v3633
        %v3712 = vunpack.c.l.s4 1983009808
        %v3713 = vunpack.c.0.s8 %v3712
        %v3714 = vlaneseq
        %v3715 = vshrl.u32 %v3714, 7
        %v3716 = vsub.s32 %v3713, %v3715
        %v3717 = vrot.slane %v3709, %v3716
        %v3719 = vunpack.c.l.s4 1983009808
        %v3720 = vunpack.c.0.s8 %v3719
        %v3721 = vlaneseq
        %v3722 = vshrl.u32 %v3721, 7
        %v3723 = vsub.s32 %v3720, %v3722
        %v3724 = vrot.slane %v3710, %v3723
        %v3725 = vcombine.low %v3560, %v3706
        %v3726 = vcombine.high %v3560, %v3706
        %v3728 = vunpack.c.l.s4 1983009808
        %v3729 = vunpack.c.0.s8 %v3728
        %v3730 = vlaneseq
        %v3731 = vshrl.u32 %v3730, 7
        %v3732 = vsub.s32 %v3729, %v3731
        %v3733 = vrot.slane %v3725, %v3732
        %v3735 = vunpack.c.l.s4 1983009808
        %v3736 = vunpack.c.0.s8 %v3735
        %v3737 = vlaneseq
        %v3738 = vshrl.u32 %v3737, 7
        %v3739 = vsub.s32 %v3736, %v3738
        %v3740 = vrot.slane %v3726, %v3739
        %v3741 = vcombine.low %v3717, %v3733
        %v3742 = vcombine.high %v3717, %v3733
        %v3744 = vunpack.c.l.s4 1934713408
        %v3745 = vunpack.c.0.s8 %v3744
        %v3746 = vlaneseq
        %v3747 = vshrl.u32 %v3746, 7
        %v3748 = vsub.s32 %v3745, %v3747
        %v3749 = vrot.slane %v3741, %v3748
        %v3751 = vunpack.c.l.s4 1934713408
        %v3752 = vunpack.c.0.s8 %v3751
        %v3753 = vlaneseq
        %v3754 = vshrl.u32 %v3753, 7
        %v3755 = vsub.s32 %v3752, %v3754
        %v3756 = vrot.slane %v3742, %v3755
        %v3757 = vcombine.low %v3724, %v3740
        %v3758 = vcombine.high %v3724, %v3740
        %v3760 = vunpack.c.l.s4 1934713408
        %v3761 = vunpack.c.0.s8 %v3760
        %v3762 = vlaneseq
        %v3763 = vshrl.u32 %v3762, 7
        %v3764 = vsub.s32 %v3761, %v3763
        %v3765 = vrot.slane %v3757, %v3764
        %v3767 = vunpack.c.l.s4 1934713408
        %v3768 = vunpack.c.0.s8 %v3767
        %v3769 = vlaneseq
        %v3770 = vshrl.u32 %v3769, 7
        %v3771 = vsub.s32 %v3768, %v3770
        %v3772 = vrot.slane %v3758, %v3771
        %v3773 = vcombine.high %v3749, 0.0
        %v3774 = vcombine.high %v3756, 0.0
        %v3775 = vcombine.high %v3765, 0.0
        %v3776 = vcombine.high %v3772, 0.0
        %v3777 = vcombine.low %v3749, %v3756
        %v3779 = vunpack.c.l.s4 1983009808
        %v3780 = vunpack.c.0.s8 %v3779
        %v3781 = vlaneseq
        %v3782 = vshrl.u32 %v3781, 7
        %v3783 = vsub.s32 %v3780, %v3782
        %v3784 = vrot.slane %v3777, %v3783
        %v3785 = vcombine.low %v3773, %v3774
        %v3787 = vunpack.c.l.s4 1983009808
        %v3788 = vunpack.c.0.s8 %v3787
        %v3789 = vlaneseq
        %v3790 = vshrl.u32 %v3789, 7
        %v3791 = vsub.s32 %v3788, %v3790
        %v3792 = vrot.slane %v3785, %v3791
        %v3793 = vcombine.low %v3765, %v3772
        %v3795 = vunpack.c.l.s4 1983009808
        %v3796 = vunpack.c.0.s8 %v3795
        %v3797 = vlaneseq
        %v3798 = vshrl.u32 %v3797, 7
        %v3799 = vsub.s32 %v3796, %v3798
        %v3800 = vrot.slane %v3793, %v3799
        %v3801 = vcombine.low %v3775, %v3776
        %v3803 = vunpack.c.l.s4 1983009808
        %v3804 = vunpack.c.0.s8 %v3803
        %v3805 = vlaneseq
        %v3806 = vshrl.u32 %v3805, 7
        %v3807 = vsub.s32 %v3804, %v3806
        %v3808 = vrot.slane %v3801, %v3807
        %v3809 = vcombine.low %v3784, %v3792
        %v3810 = vcombine.high %v3784, %v3792
        %v3812 = vunpack.c.l.s4 1934713408
        %v3813 = vunpack.c.0.s8 %v3812
        %v3814 = vlaneseq
        %v3815 = vshrl.u32 %v3814, 7
        %v3816 = vsub.s32 %v3813, %v3815
        %v3817 = vrot.slane %v3809, %v3816
        %v3819 = vunpack.c.l.s4 1934713408
        %v3820 = vunpack.c.0.s8 %v3819
        %v3821 = vlaneseq
        %v3822 = vshrl.u32 %v3821, 7
        %v3823 = vsub.s32 %v3820, %v3822
        %v3824 = vrot.slane %v3810, %v3823
        %v3825 = vcombine.low %v3800, %v3808
        %v3826 = vcombine.high %v3800, %v3808
        %v3828 = vunpack.c.l.s4 1934713408
        %v3829 = vunpack.c.0.s8 %v3828
        %v3830 = vlaneseq
        %v3831 = vshrl.u32 %v3830, 7
        %v3832 = vsub.s32 %v3829, %v3831
        %v3833 = vrot.slane %v3825, %v3832
        %v3835 = vunpack.c.l.s4 1934713408
        %v3836 = vunpack.c.0.s8 %v3835
        %v3837 = vlaneseq
        %v3838 = vshrl.u32 %v3837, 7
        %v3839 = vsub.s32 %v3836, %v3838
        %v3840 = vrot.slane %v3826, %v3839
        %v3841 = vcombine.low %v3817, %v3833
        %v3842 = vcombine.high %v3817, %v3833
        %v3843 = vcombine.low %v3824, %v3840
        %v3844 = vcombine.high %v3824, %v3840
        %3846 = vrot.lane.b32.xlu0 %v3842, 8
        %v3847 = vpop.permute.xlu0 %3846
        %3850 = vrot.lane.b32.xlu0 %v3843, 16
        %v3851 = vpop.permute.xlu0 %3850
        %3854 = vrot.lane.b32.xlu0 %v3844, 24
        %v3855 = vpop.permute.xlu0 %3854
        %v3857 = vsel %vm1167, %v3841, %v3847
        %v3858 = vsel %vm1957, %v3857, %v3851
        %v3859 = vsel %vm1959, %v3858, %v3855
        %v3860 = vld [vmem:[#allocation13] sm:$0xff]
        %v3861 = vld [vmem:[#allocation13 + $0x8] sm:$0xff]
        %v3862 = vld [vmem:[#allocation13 + $0x10] sm:$0xff]
        %v3863 = vld [vmem:[#allocation13 + $0x18] sm:$0xff]
        %v3864 = vlaneseq
        %v3865 = vshrl.u32 %v3864, 7
        %v3866 = vsub.s32 5, %v3865
        %v3867 = vrot.slane %v640, %v3866
        %v3869 = vsel %vm651, %v3859, 0
        %3871 = vmatprep.subr.mxu0 0.0
        %3872 = vmatpush1.msra.mxu0 %v3860
        %3873 = vmatprep.subr.mxu0 0.0
        %3874 = vmatpush1.msra.mxu0 %v3861
        %3875 = vmatprep.subr.mxu0 0.0
        %3876 = vmatpush1.msra.mxu0 %v3862
        %3877 = vmatprep.subr.mxu0 0.0
        %3878 = vmatpush1.msra.mxu0 %v3863
        %3879 = vmatprep.subr.mxu0 0.0
        %3880 = vmatpush1.msra.mxu0 0.0
        %3881 = vmatprep.subr.mxu0 0.0
        %3882 = vmatpush1.msra.mxu0 0.0
        %3883 = vmatprep.subr.mxu0 0.0
        %3884 = vmatpush1.msra.mxu0 0.0
        %3885 = vmatprep.subr.mxu0 0.0
        %3886 = vmatpush1.msra.mxu0 0.0
        %3887 = vmatprep.subr.mxu0 0.0
        %3888 = vmatpush1.msra.mxu0 0.0
        %3889 = vmatprep.subr.mxu0 0.0
        %3890 = vmatpush1.msra.mxu0 0.0
        %3891 = vmatprep.subr.mxu0 0.0
        %3892 = vmatpush1.msra.mxu0 0.0
        %3893 = vmatprep.subr.mxu0 0.0
        %3894 = vmatpush1.msra.mxu0 0.0
        %3895 = vmatprep.subr.mxu0 0.0
        %3896 = vmatpush1.msra.mxu0 0.0
        %3897 = vmatprep.subr.mxu0 0.0
        %3898 = vmatpush1.msra.mxu0 0.0
        %3899 = vmatprep.subr.mxu0 0.0
        %3900 = vmatpush1.msra.mxu0 0.0
        %3901 = vmatprep.subr.mxu0 0.0
        %3902 = vmatpush1.msra.mxu0 0.0
        %3903 = vmatprep.subr.mxu0 0.0
        %3904 = vmatpush1.msra.mxu0 0.0
        %3905 = vmatprep.subr.mxu0 0.0
        %3906 = vmatpush1.msra.mxu0 0.0
        %3907 = vmatprep.subr.mxu0 0.0
        %3908 = vmatpush1.msra.mxu0 0.0
        %3909 = vmatprep.subr.mxu0 0.0
        %3910 = vmatpush1.msra.mxu0 0.0
        %3911 = vmatprep.subr.mxu0 0.0
        %3912 = vmatpush1.msra.mxu0 0.0
        %3913 = vmatprep.subr.mxu0 0.0
        %3914 = vmatpush1.msra.mxu0 0.0
        %3915 = vmatprep.subr.mxu0 0.0
        %3916 = vmatpush1.msra.mxu0 0.0
        %3917 = vmatprep.subr.mxu0 0.0
        %3918 = vmatpush1.msra.mxu0 0.0
        %3919 = vmatprep.subr.mxu0 0.0
        %3920 = vmatpush1.msra.mxu0 0.0
        %3921 = vmatprep.subr.mxu0 0.0
        %3922 = vmatpush1.msra.mxu0 0.0
        %3923 = vmatprep.subr.mxu0 0.0
        %3924 = vmatpush1.msra.mxu0 0.0
        %3925 = vmatprep.subr.mxu0 0.0
        %3926 = vmatpush1.msra.mxu0 0.0
        %3927 = vmatprep.subr.mxu0 0.0
        %3928 = vmatpush1.msra.mxu0 0.0
        %3929 = vmatprep.subr.mxu0 0.0
        %3930 = vmatpush1.msra.mxu0 0.0
        %3931 = vmatprep.subr.mxu0 0.0
        %3932 = vmatpush1.msra.mxu0 0.0
        %3933 = vmatprep.subr.mxu0 0.0
        %3934 = vmatpush1.msra.mxu0 0.0
        %3935 = vmatprep.mubr.f32.mxu0 0.0
        %3936 = vmatmul.mubr.f32.gmra.mrb[0].mxu0 %v3869
        %v3937 = vpop.f32.mrb[0].mxu0
        %v3938 = vadd.f32 %v3867, %v3937
        %v3939 = vpop.f32.mrb[0].mxu0
        %3940 = vdwg.mxu0
        %v3941 = vadd.f32 %v2066, %v3938
        %v3942 = vsel %vm651, %v3941, 0.0
        %3943 = vadd.xlane.f32.xlu0 %v3942
        %v3944 = vpop.xlane.xlu0 %3943
        %v3945 = vmul.f32 %v3944, %v2046
        %v3946 = vsub.f32 %v3941, %v3945
        %v3947 = vmul.f32 %v3946, %v3946
        %v3948 = vsel %vm651, %v3947, 0.0
        %3949 = vadd.xlane.f32.xlu0 %v3948
        %v3950 = vpop.xlane.xlu0 %3949
        %v3951 = vmul.f32 %v3950, %v2046
        %v3952 = vadd.f32 %v3951, 1e-05
        %v3953 = vrsqrt.pop %v3952
        %v3954 = vmul.f32 %v3946, %v3953
        %v3955 = vlaneseq
        %v3956 = vshrl.u32 %v3955, 7
        %v3957 = vsub.s32 2, %v3956
        %v3958 = vrot.slane %v641, %v3957
        %v3959 = vmul.f32 %v3954, %v3958
        %v3960 = vlaneseq
        %v3961 = vshrl.u32 %v3960, 7
        %v3962 = vsub.s32 3, %v3961
        %v3963 = vrot.slane %v641, %v3962
        %v3964 = vadd.f32 %v3959, %v3963
        %v3965 = vld [vmem:[#allocation14] sm:$0xff]
        %v3966 = vld [vmem:[#allocation14 + $0x8] sm:$0xff]
        %v3967 = vld [vmem:[#allocation14 + $0x10] sm:$0xff]
        %v3968 = vld [vmem:[#allocation14 + $0x18] sm:$0xff]
        %v3969 = vlaneseq
        %v3970 = vshrl.u32 %v3969, 7
        %v3971 = vsub.s32 6, %v3970
        %v3972 = vrot.slane %v640, %v3971
        %v3974 = vsel %vm651, %v3964, 0
        %3976 = vmatprep.subr.mxu0 0.0
        %3977 = vmatpush1.msra.mxu0 %v3965
        %3978 = vmatprep.subr.mxu0 0.0
        %3979 = vmatpush1.msra.mxu0 %v3966
        %3980 = vmatprep.subr.mxu0 0.0
        %3981 = vmatpush1.msra.mxu0 %v3967
        %3982 = vmatprep.subr.mxu0 0.0
        %3983 = vmatpush1.msra.mxu0 %v3968
        %3984 = vmatprep.subr.mxu0 0.0
        %3985 = vmatpush1.msra.mxu0 0.0
        %3986 = vmatprep.subr.mxu0 0.0
        %3987 = vmatpush1.msra.mxu0 0.0
        %3988 = vmatprep.subr.mxu0 0.0
        %3989 = vmatpush1.msra.mxu0 0.0
        %3990 = vmatprep.subr.mxu0 0.0
        %3991 = vmatpush1.msra.mxu0 0.0
        %3992 = vmatprep.subr.mxu0 0.0
        %3993 = vmatpush1.msra.mxu0 0.0
        %3994 = vmatprep.subr.mxu0 0.0
        %3995 = vmatpush1.msra.mxu0 0.0
        %3996 = vmatprep.subr.mxu0 0.0
        %3997 = vmatpush1.msra.mxu0 0.0
        %3998 = vmatprep.subr.mxu0 0.0
        %3999 = vmatpush1.msra.mxu0 0.0
        %4000 = vmatprep.subr.mxu0 0.0
        %4001 = vmatpush1.msra.mxu0 0.0
        %4002 = vmatprep.subr.mxu0 0.0
        %4003 = vmatpush1.msra.mxu0 0.0
        %4004 = vmatprep.subr.mxu0 0.0
        %4005 = vmatpush1.msra.mxu0 0.0
        %4006 = vmatprep.subr.mxu0 0.0
        %4007 = vmatpush1.msra.mxu0 0.0
        %4008 = vmatprep.subr.mxu0 0.0
        %4009 = vmatpush1.msra.mxu0 0.0
        %4010 = vmatprep.subr.mxu0 0.0
        %4011 = vmatpush1.msra.mxu0 0.0
        %4012 = vmatprep.subr.mxu0 0.0
        %4013 = vmatpush1.msra.mxu0 0.0
        %4014 = vmatprep.subr.mxu0 0.0
        %4015 = vmatpush1.msra.mxu0 0.0
        %4016 = vmatprep.subr.mxu0 0.0
        %4017 = vmatpush1.msra.mxu0 0.0
        %4018 = vmatprep.subr.mxu0 0.0
        %4019 = vmatpush1.msra.mxu0 0.0
        %4020 = vmatprep.subr.mxu0 0.0
        %4021 = vmatpush1.msra.mxu0 0.0
        %4022 = vmatprep.subr.mxu0 0.0
        %4023 = vmatpush1.msra.mxu0 0.0
        %4024 = vmatprep.subr.mxu0 0.0
        %4025 = vmatpush1.msra.mxu0 0.0
        %4026 = vmatprep.subr.mxu0 0.0
        %4027 = vmatpush1.msra.mxu0 0.0
        %4028 = vmatprep.subr.mxu0 0.0
        %4029 = vmatpush1.msra.mxu0 0.0
        %4030 = vmatprep.subr.mxu0 0.0
        %4031 = vmatpush1.msra.mxu0 0.0
        %4032 = vmatprep.subr.mxu0 0.0
        %4033 = vmatpush1.msra.mxu0 0.0
        %4034 = vmatprep.subr.mxu0 0.0
        %4035 = vmatpush1.msra.mxu0 0.0
        %4036 = vmatprep.subr.mxu0 0.0
        %4037 = vmatpush1.msra.mxu0 0.0
        %4038 = vmatprep.subr.mxu0 0.0
        %4039 = vmatpush1.msra.mxu0 0.0
        %4040 = vmatprep.mubr.f32.mxu0 0.0
        %4041 = vmatmul.mubr.f32.gmra.mrb[0].mxu0 %v3974
        %v4042 = vpop.f32.mrb[0].mxu0
        %v4043 = vadd.f32 %v3972, %v4042
        %v4044 = vpop.f32.mrb[0].mxu0
        %4045 = vdwg.mxu0
        %v4046 = vmax.f32 %v4043, 0.0
        %v4047 = vld [vmem:[%s11] sm:$0xff]
        %v4048 = vld [vmem:[%s11 + $0x8] sm:$0xff]
        %v4049 = vld [vmem:[%s11 + $0x10] sm:$0xff]
        %v4050 = vld [vmem:[%s11 + $0x18] sm:$0xff]
        %v4051 = vld [vmem:[%s11 + $0x20] sm:$0xff]
        %v4052 = vld [vmem:[%s11 + $0x28] sm:$0xff]
        %v4053 = vld [vmem:[%s11 + $0x30] sm:$0xff]
        %v4054 = vld [vmem:[%s11 + $0x38] sm:$0xff]
        %v4055 = vlaneseq
        %v4056 = vshrl.u32 %v4055, 7
        %v4057 = vsub.s32 7, %v4056
        %v4058 = vrot.slane %v640, %v4057
        %vm4059 = vcmask 523264
        %v4061 = vsel %vm4059, %v4046, 0
        %4063 = vmatprep.subr.mxu0 0.0
        %4064 = vmatpush1.msra.mxu0 %v4047
        %4065 = vmatprep.subr.mxu0 0.0
        %4066 = vmatpush1.msra.mxu0 %v4048
        %4067 = vmatprep.subr.mxu0 0.0
        %4068 = vmatpush1.msra.mxu0 %v4049
        %4069 = vmatprep.subr.mxu0 0.0
        %4070 = vmatpush1.msra.mxu0 %v4050
        %4071 = vmatprep.subr.mxu0 0.0
        %4072 = vmatpush1.msra.mxu0 %v4051
        %4073 = vmatprep.subr.mxu0 0.0
        %4074 = vmatpush1.msra.mxu0 %v4052
        %4075 = vmatprep.subr.mxu0 0.0
        %4076 = vmatpush1.msra.mxu0 %v4053
        %4077 = vmatprep.subr.mxu0 0.0
        %4078 = vmatpush1.msra.mxu0 %v4054
        %4079 = vmatprep.subr.mxu0 0.0
        %4080 = vmatpush1.msra.mxu0 0.0
        %4081 = vmatprep.subr.mxu0 0.0
        %4082 = vmatpush1.msra.mxu0 0.0
        %4083 = vmatprep.subr.mxu0 0.0
        %4084 = vmatpush1.msra.mxu0 0.0
        %4085 = vmatprep.subr.mxu0 0.0
        %4086 = vmatpush1.msra.mxu0 0.0
        %4087 = vmatprep.subr.mxu0 0.0
        %4088 = vmatpush1.msra.mxu0 0.0
        %4089 = vmatprep.subr.mxu0 0.0
        %4090 = vmatpush1.msra.mxu0 0.0
        %4091 = vmatprep.subr.mxu0 0.0
        %4092 = vmatpush1.msra.mxu0 0.0
        %4093 = vmatprep.subr.mxu0 0.0
        %4094 = vmatpush1.msra.mxu0 0.0
        %4095 = vmatprep.subr.mxu0 0.0
        %4096 = vmatpush1.msra.mxu0 0.0
        %4097 = vmatprep.subr.mxu0 0.0
        %4098 = vmatpush1.msra.mxu0 0.0
        %4099 = vmatprep.subr.mxu0 0.0
        %4100 = vmatpush1.msra.mxu0 0.0
        %4101 = vmatprep.subr.mxu0 0.0
        %4102 = vmatpush1.msra.mxu0 0.0
        %4103 = vmatprep.subr.mxu0 0.0
        %4104 = vmatpush1.msra.mxu0 0.0
        %4105 = vmatprep.subr.mxu0 0.0
        %4106 = vmatpush1.msra.mxu0 0.0
        %4107 = vmatprep.subr.mxu0 0.0
        %4108 = vmatpush1.msra.mxu0 0.0
        %4109 = vmatprep.subr.mxu0 0.0
        %4110 = vmatpush1.msra.mxu0 0.0
        %4111 = vmatprep.subr.mxu0 0.0
        %4112 = vmatpush1.msra.mxu0 0.0
        %4113 = vmatprep.subr.mxu0 0.0
        %4114 = vmatpush1.msra.mxu0 0.0
        %4115 = vmatprep.subr.mxu0 0.0
        %4116 = vmatpush1.msra.mxu0 0.0
        %4117 = vmatprep.subr.mxu0 0.0
        %4118 = vmatpush1.msra.mxu0 0.0
        %4119 = vmatprep.subr.mxu0 0.0
        %4120 = vmatpush1.msra.mxu0 0.0
        %4121 = vmatprep.subr.mxu0 0.0
        %4122 = vmatpush1.msra.mxu0 0.0
        %4123 = vmatprep.subr.mxu0 0.0
        %4124 = vmatpush1.msra.mxu0 0.0
        %4125 = vmatprep.subr.mxu0 0.0
        %4126 = vmatpush1.msra.mxu0 0.0
        %4127 = vmatprep.mubr.f32.mxu0 0.0
        %4128 = vmatmul.mubr.f32.gmra.mrb[0].mxu0 %v4061
        %v4129 = vpop.f32.mrb[0].mxu0
        %v4130 = vadd.f32 %v4058, %v4129
        %v4131 = vpop.f32.mrb[0].mxu0
        %4132 = vdwg.mxu0
        %v4133 = vadd.f32 %v3964, %v4130
        %v4134 = vsel %vm651, %v4133, 0.0
        %4135 = vadd.xlane.f32.xlu0 %v4134
        %v4136 = vpop.xlane.xlu0 %4135
        %v4137 = vmul.f32 %v4136, %v2046
        %v4138 = vsub.f32 %v4133, %v4137
        %v4139 = vmul.f32 %v4138, %v4138
        %v4140 = vsel %vm651, %v4139, 0.0
        %4141 = vadd.xlane.f32.xlu0 %v4140
        %v4142 = vpop.xlane.xlu0 %4141
        %v4143 = vmul.f32 %v4142, %v2046
        %v4144 = vadd.f32 %v4143, 1e-05
        %v4145 = vrsqrt.pop %v4144
        %v4146 = vmul.f32 %v4138, %v4145
        %v4147 = vlaneseq
        %v4148 = vshrl.u32 %v4147, 7
        %v4149 = vsub.s32 4, %v4148
        %v4150 = vrot.slane %v641, %v4149
        %v4151 = vmul.f32 %v4146, %v4150
        %v4152 = vlaneseq
        %v4153 = vshrl.u32 %v4152, 7
        %v4154 = vsub.s32 5, %v4153
        %v4155 = vrot.slane %v641, %v4154
        %v4156 = vadd.f32 %v4151, %v4155
        %4157 = vst.msk [vmem:[%s623] sm:$0xff] %vm651, %v4156
        %s4158 = sand.u32 %s337, 1
        %s4159 = scalar_lea.sflag [#allocation4], %s4158
        %s4160 = sand.u32 %s337, 1
        %s4161 = smul.addr %s4160, 8
        %s4162 = scalar_lea.vmem [#allocation17], %s4161
        // Predicated region
        $region109: #{tpu_custom_call.1} parent=71 // pred_check
          %p4163 = pneg %p347
        $region110: #{tpu_custom_call.1} parent=71 // pred_check_branch
          %4165 = sbr.rel (%p4163) target = $region112
        $region111: #{tpu_custom_call.1} parent=71 // pred_region
          %s4167 = ssub.s32 128, 128
          %4168 = vsyncadd %s4159, %s4167
          %s4169 = smul.addr %s36, 128
          %s4170 = scalar_lea.hbm %s13, %s4169
          %s4172 = sshll.u32 %s4162, 4
          %s4173 = int_to_ptr.vmem [resolvable:$true] %s4172
          %4175 = dma.vmem_to_hbm [thread:$0]  %s4173, 128, %s4170, %s4159
        $region112: #{tpu_custom_call.1} parent=71 // pred_fallthru
          _
      $region72: #{tpu_custom_call.1} parent=5 // pred_fallthru
        _
      %p4176 = scmp.le.s32.totalorder 2, %s31
      // Predicated region
      $region113: #{tpu_custom_call.1} parent=5 // pred_check
        %p4177 = pneg %p4176
      $region114: #{tpu_custom_call.1} parent=5 // pred_check_branch
        %4179 = sbr.rel (%p4177) target = $region116
      $region115: #{tpu_custom_call.1} parent=5 // pred_region
        %s4180 = ssub.s32 %s31, 2
        // Predicated region
        $region117: #{tpu_custom_call.1} parent=115 // pred_check
          %p4181 = pneg %p353
        $region118: #{tpu_custom_call.1} parent=115 // pred_check_branch
          %4183 = sbr.rel (%p4181) target = $region120
        $region119: #{tpu_custom_call.1} parent=115 // pred_region
          %s4184 = sand.u32 %s338, 1
          %s4185 = scalar_lea.sflag [#allocation4], %s4184
          %s4186 = sand.u32 %s338, 1
          %s4187 = smul.addr %s4186, 8
          %s4188 = scalar_lea.vmem [#allocation17], %s4187
          %4189 = dma.done %s4185, 128
        $region120: #{tpu_custom_call.1} parent=115 // pred_fallthru
          _
      $region116: #{tpu_custom_call.1} parent=5 // pred_fallthru
        _
    $region6: #{tpu_custom_call.1} parent=1 // loop_footer
      %s35 = sadd.s32 1, %s31
    $region7: #{tpu_custom_call.1} parent=1 // loop_footer_branch
      %30 = sbr.rel target = $region3
    $region8: #{tpu_custom_call.1} parent=1 // loop_exit
      _
    %4190 = vsyncpa [#allocation3], 1
    %s4191 = scalar_lea.sflag [#allocation3], 1
    %4192 = vsyncpa %s4191, 1
    %4193 = vsyncpa [#allocation6], 1
    %s4194 = scalar_lea.sflag [#allocation6], 1
    %4195 = vsyncpa %s4194, 1
    %4196 = vsyncpa [#allocation9], 1
    %4197 = vsyncpa [#allocation12], 1
    %4198 = vsyncpa [#allocation15], 1
    %4199 = vsyncpa [#allocation4], 1
    %s4200 = scalar_lea.sflag [#allocation4], 1
    %4201 = vsyncpa %s4200, 1

</llo_original>
